<compile_context>
chip_gen: v7x
topology: tpu7x:2x2x1
jax: 0.10.0
libtpu: 0.0.40
codegen_flags: <defaults>
</compile_context>

<pallas_src>
import jax
import jax.numpy as jnp
from jax.experimental import pallas as pl
from jax.experimental.pallas import tpu as pltpu


MATMUL_DTYPE = jnp.bfloat16            # MXU operand dtype (accumulation stays f32)
VMEM_LIMIT_BYTES = 48 * 1024 * 1024    # < 64 MiB physical on v7x; v5e/v6e have 128 MiB


# ----------------------------------------------------------------------- kernels
def _fused_kernel(x_ref, wd_ref, wu_ref, bd_ref, y_ref, stats_ref, xb_ref, hb_ref):
    """LeakyReLU -> Conv2d(4,2,1) -> ReLU -> ConvTranspose2d(4,2,1) + BN partial stats.

    One grid step = one image.  Both convs are phase-decomposed 3x3 shift-and-accumulate
    matmuls over halo-padded VMEM scratch (no HBM patch matrices, h_down stays in VMEM).

    x_ref:     (1, Ho, Wo, 4*c_in)  phase-packed input, f32
    wd_ref:    (9, 4*c_in, inner)   down-conv tap matrices, bf16
    wu_ref:    (9, inner, 4*outer)  up-conv tap matrices, bf16
    bd_ref:    (1, inner)           down-conv bias, f32
    y_ref:     (1, Ho, Wo, 4*outer) pre-norm up-conv output, bf16 (up bias dropped: BN cancels it)
    stats_ref: (1, 2, 4*outer)      per-image [sum, sum_of_squares] from the f32 accumulator
    xb_ref:    (Ho+2, Wo+2, 4*c_in) f32 scratch: LeakyReLU(x) with zero halo
    hb_ref:    (Ho+2, Wo+2, inner)  f32 scratch: ReLU(h_down) with zero halo
    """
    _, ho, wo, c4 = x_ref.shape
    inner = hb_ref.shape[-1]
    cu = y_ref.shape[-1]

    # LeakyReLU(0.2) exactly once per input element; the zero halo is the convs' padding.
    x = x_ref[0]
    xb_ref[...] = jnp.zeros_like(xb_ref)
    xb_ref[1:ho + 1, 1:wo + 1, :] = jnp.where(x >= 0, x, 0.2 * x)

    # Down conv: 9 taps x matmul (Ho*Wo, 4*c_in) @ (4*c_in, inner), f32 accumulate.
    acc_d = jnp.zeros((ho * wo, inner), jnp.float32)
    for t in range(9):
        di, dj = t // 3, t % 3
        a = xb_ref[di:di + ho, dj:dj + wo, :].reshape(ho * wo, c4).astype(MATMUL_DTYPE)
        acc_d = acc_d + jnp.dot(a, wd_ref[t], preferred_element_type=jnp.float32)
    h = jnp.maximum(acc_d + bd_ref[...], 0.0)                  # fused ReLU (up-path pre-act)

    hb_ref[...] = jnp.zeros_like(hb_ref)
    hb_ref[1:ho + 1, 1:wo + 1, :] = h.reshape(ho, wo, inner)

    # Up conv (ConvTranspose2d phase-decomposed): 9 taps x (Ho*Wo, inner) @ (inner, 4*outer).
    acc_u = jnp.zeros((ho * wo, cu), jnp.float32)
    for t in range(9):
        di, dj = t // 3, t % 3
        a = hb_ref[di:di + ho, dj:dj + wo, :].reshape(ho * wo, inner).astype(MATMUL_DTYPE)
        acc_u = acc_u + jnp.dot(a, wu_ref[t], preferred_element_type=jnp.float32)

    y_ref[0] = acc_u.reshape(ho, wo, cu).astype(y_ref.dtype)
    stats_ref[0, 0:1, :] = jnp.sum(acc_u, axis=0, keepdims=True)
    stats_ref[0, 1:2, :] = jnp.sum(acc_u * acc_u, axis=0, keepdims=True)


def _finalize_kernel(y_ref, x_ref, aff_ref, o_ref):
    """BatchNorm (pre-folded scale/shift) + fused skip concat, phase-packed layout.

    o_ref[..., :4*outer] = BN(y),  o_ref[..., 4*outer:] = x  (columns ordered (c, ph_h, ph_w)).
    """
    cu = y_ref.shape[-1]
    ybn = y_ref[0].astype(jnp.float32) * aff_ref[0:1, :, :] + aff_ref[1:2, :, :]
    o_ref[0, :, :, :cu] = ybn
    o_ref[0, :, :, cu:] = x_ref[0]


# ----------------------------------------------------------------------- weight packing
def _down_tap_weights(w_down):
    """Conv2d weight (out, in, 4, 4) -> (9, 4*in, out) phase-tap matrices.

    Row order per tap: c*4 + ph_h*2 + ph_w (matches x_ph packing); tap t = (di+1)*3 + (dj+1)
    reads x_ph[i+di, j+dj]; original kernel index kh = 2*di + ph_h + 1, kw = 2*dj + ph_w + 1
    (structurally zero when outside [0,4)).
    """
    cout, cin = w_down.shape[0], w_down.shape[1]
    wt = jnp.zeros((3, 3, cin, 2, 2, cout), w_down.dtype)
    for di in (-1, 0, 1):
        for ph_h in (0, 1):
            kh = 2 * di + ph_h + 1
            if not 0 <= kh < 4:
                continue
            for dj in (-1, 0, 1):
                for ph_w in (0, 1):
                    kw = 2 * dj + ph_w + 1
                    if not 0 <= kw < 4:
                        continue
                    wt = wt.at[di + 1, dj + 1, :, ph_h, ph_w, :].set(w_down[:, :, kh, kw].T)
    return wt.reshape(9, 4 * cin, cout)


def _up_tap_weights(w_up):
    """ConvTranspose2d weight (in, out, 4, 4) -> (9, in, 4*out) phase-tap matrices.

    Column order per tap: o*4 + ph_h*2 + ph_w (matches y packing); tap t = (dh+1)*3 + (dw+1)
    reads h[i+dh, j+dw]; original kernel index kh = ph_h + 1 - 2*dh, kw = ph_w + 1 - 2*dw
    (structurally zero when outside [0,4)).
    """
    cin, cout = w_up.shape[0], w_up.shape[1]
    wt = jnp.zeros((3, 3, cin, cout, 2, 2), w_up.dtype)
    for dh in (-1, 0, 1):
        for ph_h in (0, 1):
            kh = ph_h + 1 - 2 * dh
            if not 0 <= kh < 4:
                continue
            for dw in (-1, 0, 1):
                for ph_w in (0, 1):
                    kw = ph_w + 1 - 2 * dw
                    if not 0 <= kw < 4:
                        continue
                    wt = wt.at[dh + 1, dw + 1, :, :, ph_h, ph_w].set(w_up[:, :, kh, kw])
    return wt.reshape(9, cin, 4 * cout)


# ----------------------------------------------------------------------- forward
def unet_innermost_forward(x_nchw, params):
    """Forward pass of UnetSkipConnectionBlock(innermost=True).  x_nchw: (N, outer_nc, H, W)."""
    w_down, b_down, w_up, b_up, gamma, beta = params
    del b_up  # a per-channel constant added right before train-mode BatchNorm cancels exactly
    n, c_in, h, w = x_nchw.shape
    inner_nc = w_down.shape[0]
    outer_nc = w_up.shape[1]
    assert c_in == outer_nc, "innermost block: skip input channels == outer_nc"
    # TODO(synk): odd spatial sizes need the F.pad branch; k=4,s=2,p=1 round-trips even sizes.
    assert h % 2 == 0 and w % 2 == 0
    ho, wo = h // 2, w // 2
    c4 = 4 * c_in                      # phase-packed input channels
    cu = 4 * outer_nc                  # phase-packed pre-concat output channels

    # Phase-packed view: x_ph[b, i, j, c*4 + ph_h*2 + ph_w] = x[b, c, 2i+ph_h, 2j+ph_w].
    # One small XLA transpose of x; reused by both kernels (conv input + skip concat).
    x_ph = (x_nchw.astype(jnp.float32)
            .reshape(n, c_in, ho, 2, wo, 2)
            .transpose(0, 2, 4, 1, 3, 5)
            .reshape(n, ho, wo, c4))

    wd_tap = _down_tap_weights(w_down).astype(MATMUL_DTYPE)   # (9, 4*c_in, inner)
    wu_tap = _up_tap_weights(w_up).astype(MATMUL_DTYPE)       # (9, inner, 4*outer)
    bd = b_down.reshape(1, inner_nc).astype(jnp.float32)

    # TODO(synk): at production sizes, tile (n, ho) with a halo'd manual DMA (pl.ANY +
    # make_async_copy), K-tile / single-buffer the up-weight block for v7x's 64 MiB VMEM,
    # and pad channels to a multiple of 128 for lane-dense stores when outer_nc is small.
    cparams = pltpu.CompilerParams(dimension_semantics=("parallel",),
                                   vmem_limit_bytes=VMEM_LIMIT_BYTES)

    # ---- pass 1: fused down conv + up conv + BN partial statistics (one image / step) -----
    y_up, stats = pl.pallas_call(
        _fused_kernel,
        out_shape=(jax.ShapeDtypeStruct((n, ho, wo, cu), MATMUL_DTYPE),
                   jax.ShapeDtypeStruct((n, 2, cu), jnp.float32)),
        grid=(n,),
        in_specs=[pl.BlockSpec((1, ho, wo, c4), lambda b: (b, 0, 0, 0)),
                  pl.BlockSpec((9, c4, inner_nc), lambda b: (0, 0, 0)),
                  pl.BlockSpec((9, inner_nc, cu), lambda b: (0, 0, 0)),
                  pl.BlockSpec((1, inner_nc), lambda b: (0, 0))],
        out_specs=(pl.BlockSpec((1, ho, wo, cu), lambda b: (b, 0, 0, 0)),
                   pl.BlockSpec((1, 2, cu), lambda b: (b, 0, 0))),
        scratch_shapes=[pltpu.VMEM((ho + 2, wo + 2, c4), jnp.float32),
                        pltpu.VMEM((ho + 2, wo + 2, inner_nc), jnp.float32)],
        compiler_params=cparams,
    )(x_ph, wd_tap, wu_tap, bd)

    # ---- BatchNorm stats reduction + gamma/beta folding (tiny, stays in JAX) --------------
    count = float(n * h * w)                                   # samples per channel
    ch_sum = jnp.sum(stats[:, 0, :], axis=0).reshape(outer_nc, 4).sum(axis=1)
    ch_sq = jnp.sum(stats[:, 1, :], axis=0).reshape(outer_nc, 4).sum(axis=1)
    mean = ch_sum / count
    var = jnp.maximum(ch_sq / count - mean * mean, 0.0)        # biased (training) variance
    scale = gamma * jax.lax.rsqrt(var + 1e-5)
    shift = beta - mean * scale
    affine = jnp.stack([jnp.repeat(scale, 4), jnp.repeat(shift, 4)], axis=0)
    affine = affine.reshape(2, 1, cu).astype(jnp.float32)

    # ---- pass 2: normalize + fused skip concat (still phase-packed, 2x-wide stores) -------
    out_ph = pl.pallas_call(
        _finalize_kernel,
        out_shape=jax.ShapeDtypeStruct((n, ho, wo, 2 * cu), jnp.float32),
        grid=(n,),
        in_specs=[pl.BlockSpec((1, ho, wo, cu), lambda b: (b, 0, 0, 0)),
                  pl.BlockSpec((1, ho, wo, c4), lambda b: (b, 0, 0, 0)),
                  pl.BlockSpec((2, 1, cu), lambda b: (0, 0, 0))],
        out_specs=pl.BlockSpec((1, ho, wo, 2 * cu), lambda b: (b, 0, 0, 0)),
        compiler_params=cparams,
    )(y_up, x_ph, affine)

    # ---- single un-phase transpose to NCHW (F.pad is a no-op for even spatial sizes) ------
    out = out_ph.reshape(n, ho, wo, 2, outer_nc, 2, 2)         # (n, i, j, grp, c, ph_h, ph_w)
    out = out.transpose(0, 3, 4, 1, 5, 2, 6)                   # (n, grp, c, i, ph_h, j, ph_w)
    return out.reshape(n, 2 * outer_nc, h, w)


# ----------------------------------------------------------------------- reference
def _reference(x, w_down, b_down, w_up, b_up, gamma, beta):
    dn = ("NCHW", "OIHW", "NCHW")
    h = jnp.where(x >= 0, x, 0.2 * x)
    h = jax.lax.conv_general_dilated(
        h, w_down, (2, 2), ((1, 1), (1, 1)), dimension_numbers=dn
    ) + b_down[None, :, None, None]
    h = jnp.maximum(h, 0.0)
    w_conv = jnp.transpose(w_up[:, :, ::-1, ::-1], (1, 0, 2, 3))
    y = jax.lax.conv_general_dilated(
        h, w_conv, (1, 1), ((2, 2), (2, 2)), lhs_dilation=(2, 2), dimension_numbers=dn
    ) + b_up[None, :, None, None]
    mean = jnp.mean(y, axis=(0, 2, 3), keepdims=True)
    var = jnp.mean((y - mean) ** 2, axis=(0, 2, 3), keepdims=True)
    y = (y - mean) * jax.lax.rsqrt(var + 1e-5) * gamma[None, :, None, None] \
        + beta[None, :, None, None]
    return jnp.concatenate([y, x], axis=1)


# ----------------------------------------------------------------------- main
if __name__ == "__main__":
    # TODO(synk): non-innermost variants wrap an arbitrary `submodule` between down and up
    # (plus tanh / dropout / outermost differences); that recursion stays outside this kernel.
    outer_nc, inner_nc = 4, 8
    n, hh, ww = 2, 16, 16

    key = jax.random.PRNGKey(0)
    k_x, k_wd, k_bd, k_wu, k_bu, k_g, k_b = jax.random.split(key, 7)

    x = jax.random.normal(k_x, (n, outer_nc, hh, ww), jnp.float32)
    w_down = 0.1 * jax.random.normal(k_wd, (inner_nc, outer_nc, 4, 4), jnp.float32)
    b_down = 0.1 * jax.random.normal(k_bd, (inner_nc,), jnp.float32)
    w_up = 0.1 * jax.random.normal(k_wu, (inner_nc, outer_nc, 4, 4), jnp.float32)
    b_up = 0.1 * jax.random.normal(k_bu, (outer_nc,), jnp.float32)
    gamma = 1.0 + 0.1 * jax.random.normal(k_g, (outer_nc,), jnp.float32)
    beta = 0.1 * jax.random.normal(k_b, (outer_nc,), jnp.float32)

    params = (w_down, b_down, w_up, b_up, gamma, beta)

    fwd = jax.jit(unet_innermost_forward)
    out = jax.block_until_ready(fwd(x, params))
    assert out.shape == (n, 2 * outer_nc, hh, ww), out.shape

    ref = jax.block_until_ready(_reference(x, *params))
    max_err = float(jnp.max(jnp.abs(out - ref)))
    # bf16 matmul operands + bf16 y_up (f32 accumulation / statistics); BatchNorm divides by
    # the batch std (~0.3 here), which amplifies bf16 rounding noise on O(1)-scale outputs.
    assert max_err < 4e-2, f"mismatch vs reference: {max_err}"

    print("KERNEL_OK")
</pallas_src>

<mosaic_0001>
module attributes {stable_mosaic.version = 11 : i64} {
  func.func @_fused_kernel(%arg0: i32, %arg1: memref<1x8x8x16xf32, #tpu.memory_space<vmem>>, %arg2: memref<9x16x8xbf16, #tpu.memory_space<vmem>>, %arg3: memref<9x8x16xbf16, #tpu.memory_space<vmem>>, %arg4: memref<1x8xf32, #tpu.memory_space<vmem>>, %arg5: memref<1x8x8x16xbf16, #tpu.memory_space<vmem>>, %arg6: memref<1x2x16xf32, #tpu.memory_space<vmem>>, %arg7: memref<10x10x16xf32, #tpu.memory_space<vmem>>, %arg8: memref<10x10x8xf32, #tpu.memory_space<vmem>>) attributes {dimension_semantics = [#tpu.dimension_semantics<parallel>], iteration_bounds = array<i64: 2>, scalar_prefetch = 0 : i64, scratch_operands = 2 : i64, tpu.core_type = #tpu.core_type<tc>, window_params = [{transform_indices = @transform_0, window_bounds = array<i64: 1, 8, 8, 16>}, {pipeline_mode = #tpu.pipeline_mode<synchronous>, transform_indices = @transform_1, window_bounds = array<i64: 9, 16, 8>}, {pipeline_mode = #tpu.pipeline_mode<synchronous>, transform_indices = @transform_2, window_bounds = array<i64: 9, 8, 16>}, {pipeline_mode = #tpu.pipeline_mode<synchronous>, transform_indices = @transform_3, window_bounds = array<i64: 1, 8>}, {transform_indices = @transform_4, window_bounds = array<i64: 1, 8, 8, 16>}, {transform_indices = @transform_5, window_bounds = array<i64: 1, 2, 16>}]} {
    %c0 = arith.constant 0 : index
    %c0_0 = arith.constant 0 : index
    %c0_1 = arith.constant 0 : index
    %c0_2 = arith.constant 0 : index
    %0 = vector.load %arg1[%c0, %c0_0, %c0_1, %c0_2] : memref<1x8x8x16xf32, #tpu.memory_space<vmem>>, vector<1x8x8x16xf32>
    %1 = vector.shape_cast %0 : vector<1x8x8x16xf32> to vector<8x8x16xf32>
    %cst = arith.constant 0.000000e+00 : f32
    %2 = vector.broadcast %cst : f32 to vector<10x10x16xf32>
    %c0_3 = arith.constant 0 : index
    %c0_4 = arith.constant 0 : index
    %c0_5 = arith.constant 0 : index
    %3 = vector.load %arg7[%c0_3, %c0_4, %c0_5] : memref<10x10x16xf32, #tpu.memory_space<vmem>>, vector<10x10x16xf32>
    tpu.vector_store %arg7[%c0_3, %c0_4, %c0_5], %2 {strides = array<i32>} : memref<10x10x16xf32, #tpu.memory_space<vmem>>, vector<10x10x16xf32>,
    %cst_6 = arith.constant 0.000000e+00 : f32
    %4 = vector.broadcast %cst_6 : f32 to vector<8x8x16xf32>
    %5 = arith.cmpf oge, %1, %4 : vector<8x8x16xf32>
    %cst_7 = arith.constant 2.000000e-01 : f32
    %6 = vector.broadcast %cst_7 : f32 to vector<8x8x16xf32>
    %7 = arith.mulf %6, %1 : vector<8x8x16xf32>
    %8 = arith.select %5, %1, %7 : vector<8x8x16xi1>, vector<8x8x16xf32>
    %c1 = arith.constant 1 : index
    %c1_8 = arith.constant 1 : index
    %c0_9 = arith.constant 0 : index
    %9 = vector.load %arg7[%c1, %c1_8, %c0_9] : memref<10x10x16xf32, #tpu.memory_space<vmem>>, vector<8x8x16xf32>
    tpu.vector_store %arg7[%c1, %c1_8, %c0_9], %8 {strides = array<i32>} : memref<10x10x16xf32, #tpu.memory_space<vmem>>, vector<8x8x16xf32>,
    %cst_10 = arith.constant 0.000000e+00 : f32
    %10 = vector.broadcast %cst_10 : f32 to vector<64x8xf32>
    %c0_11 = arith.constant 0 : index
    %c0_12 = arith.constant 0 : index
    %c0_13 = arith.constant 0 : index
    %11 = vector.load %arg7[%c0_11, %c0_12, %c0_13] : memref<10x10x16xf32, #tpu.memory_space<vmem>>, vector<8x8x16xf32>
    %12 = vector.shape_cast %11 : vector<8x8x16xf32> to vector<64x16xf32>
    %13 = arith.truncf %12 : vector<64x16xf32> to vector<64x16xbf16>
    %c0_14 = arith.constant 0 : index
    %c0_15 = arith.constant 0 : index
    %c0_16 = arith.constant 0 : index
    %14 = vector.load %arg2[%c0_14, %c0_15, %c0_16] : memref<9x16x8xbf16, #tpu.memory_space<vmem>>, vector<1x16x8xbf16>
    %15 = vector.shape_cast %14 : vector<1x16x8xbf16> to vector<16x8xbf16>
    %cst_17 = arith.constant dense<0.000000e+00> : vector<64x8xf32>
    %16 = tpu.matmul %13, %15, %cst_17 {dimension_numbers = #tpu.dot_dimension_numbers<[1], [0], [0], [1], [0, 0, 1, 1], [], []>} : vector<64x16xbf16>, vector<16x8xbf16>, vector<64x8xf32> -> vector<64x8xf32>
    %17 = arith.addf %10, %16 : vector<64x8xf32>
    %c0_18 = arith.constant 0 : index
    %c1_19 = arith.constant 1 : index
    %c0_20 = arith.constant 0 : index
    %18 = vector.load %arg7[%c0_18, %c1_19, %c0_20] : memref<10x10x16xf32, #tpu.memory_space<vmem>>, vector<8x8x16xf32>
    %19 = vector.shape_cast %18 : vector<8x8x16xf32> to vector<64x16xf32>
    %20 = arith.truncf %19 : vector<64x16xf32> to vector<64x16xbf16>
    %c1_21 = arith.constant 1 : index
    %c0_22 = arith.constant 0 : index
    %c0_23 = arith.constant 0 : index
    %21 = vector.load %arg2[%c1_21, %c0_22, %c0_23] : memref<9x16x8xbf16, #tpu.memory_space<vmem>>, vector<1x16x8xbf16>
    %22 = vector.shape_cast %21 : vector<1x16x8xbf16> to vector<16x8xbf16>
    %cst_24 = arith.constant dense<0.000000e+00> : vector<64x8xf32>
    %23 = tpu.matmul %20, %22, %cst_24 {dimension_numbers = #tpu.dot_dimension_numbers<[1], [0], [0], [1], [0, 0, 1, 1], [], []>} : vector<64x16xbf16>, vector<16x8xbf16>, vector<64x8xf32> -> vector<64x8xf32>
    %24 = arith.addf %17, %23 : vector<64x8xf32>
    %c0_25 = arith.constant 0 : index
    %c2 = arith.constant 2 : index
    %c0_26 = arith.constant 0 : index
    %25 = vector.load %arg7[%c0_25, %c2, %c0_26] : memref<10x10x16xf32, #tpu.memory_space<vmem>>, vector<8x8x16xf32>
    %26 = vector.shape_cast %25 : vector<8x8x16xf32> to vector<64x16xf32>
    %27 = arith.truncf %26 : vector<64x16xf32> to vector<64x16xbf16>
    %c2_27 = arith.constant 2 : index
    %c0_28 = arith.constant 0 : index
    %c0_29 = arith.constant 0 : index
    %28 = vector.load %arg2[%c2_27, %c0_28, %c0_29] : memref<9x16x8xbf16, #tpu.memory_space<vmem>>, vector<1x16x8xbf16>
    %29 = vector.shape_cast %28 : vector<1x16x8xbf16> to vector<16x8xbf16>
    %cst_30 = arith.constant dense<0.000000e+00> : vector<64x8xf32>
    %30 = tpu.matmul %27, %29, %cst_30 {dimension_numbers = #tpu.dot_dimension_numbers<[1], [0], [0], [1], [0, 0, 1, 1], [], []>} : vector<64x16xbf16>, vector<16x8xbf16>, vector<64x8xf32> -> vector<64x8xf32>
    %31 = arith.addf %24, %30 : vector<64x8xf32>
    %c1_31 = arith.constant 1 : index
    %c0_32 = arith.constant 0 : index
    %c0_33 = arith.constant 0 : index
    %32 = vector.load %arg7[%c1_31, %c0_32, %c0_33] : memref<10x10x16xf32, #tpu.memory_space<vmem>>, vector<8x8x16xf32>
    %33 = vector.shape_cast %32 : vector<8x8x16xf32> to vector<64x16xf32>
    %34 = arith.truncf %33 : vector<64x16xf32> to vector<64x16xbf16>
    %c3 = arith.constant 3 : index
    %c0_34 = arith.constant 0 : index
    %c0_35 = arith.constant 0 : index
    %35 = vector.load %arg2[%c3, %c0_34, %c0_35] : memref<9x16x8xbf16, #tpu.memory_space<vmem>>, vector<1x16x8xbf16>
    %36 = vector.shape_cast %35 : vector<1x16x8xbf16> to vector<16x8xbf16>
    %cst_36 = arith.constant dense<0.000000e+00> : vector<64x8xf32>
    %37 = tpu.matmul %34, %36, %cst_36 {dimension_numbers = #tpu.dot_dimension_numbers<[1], [0], [0], [1], [0, 0, 1, 1], [], []>} : vector<64x16xbf16>, vector<16x8xbf16>, vector<64x8xf32> -> vector<64x8xf32>
    %38 = arith.addf %31, %37 : vector<64x8xf32>
    %c1_37 = arith.constant 1 : index
    %c1_38 = arith.constant 1 : index
    %c0_39 = arith.constant 0 : index
    %39 = vector.load %arg7[%c1_37, %c1_38, %c0_39] : memref<10x10x16xf32, #tpu.memory_space<vmem>>, vector<8x8x16xf32>
    %40 = vector.shape_cast %39 : vector<8x8x16xf32> to vector<64x16xf32>
    %41 = arith.truncf %40 : vector<64x16xf32> to vector<64x16xbf16>
    %c4 = arith.constant 4 : index
    %c0_40 = arith.constant 0 : index
    %c0_41 = arith.constant 0 : index
    %42 = vector.load %arg2[%c4, %c0_40, %c0_41] : memref<9x16x8xbf16, #tpu.memory_space<vmem>>, vector<1x16x8xbf16>
    %43 = vector.shape_cast %42 : vector<1x16x8xbf16> to vector<16x8xbf16>
    %cst_42 = arith.constant dense<0.000000e+00> : vector<64x8xf32>
    %44 = tpu.matmul %41, %43, %cst_42 {dimension_numbers = #tpu.dot_dimension_numbers<[1], [0], [0], [1], [0, 0, 1, 1], [], []>} : vector<64x16xbf16>, vector<16x8xbf16>, vector<64x8xf32> -> vector<64x8xf32>
    %45 = arith.addf %38, %44 : vector<64x8xf32>
    %c1_43 = arith.constant 1 : index
    %c2_44 = arith.constant 2 : index
    %c0_45 = arith.constant 0 : index
    %46 = vector.load %arg7[%c1_43, %c2_44, %c0_45] : memref<10x10x16xf32, #tpu.memory_space<vmem>>, vector<8x8x16xf32>
    %47 = vector.shape_cast %46 : vector<8x8x16xf32> to vector<64x16xf32>
    %48 = arith.truncf %47 : vector<64x16xf32> to vector<64x16xbf16>
    %c5 = arith.constant 5 : index
    %c0_46 = arith.constant 0 : index
    %c0_47 = arith.constant 0 : index
    %49 = vector.load %arg2[%c5, %c0_46, %c0_47] : memref<9x16x8xbf16, #tpu.memory_space<vmem>>, vector<1x16x8xbf16>
    %50 = vector.shape_cast %49 : vector<1x16x8xbf16> to vector<16x8xbf16>
    %cst_48 = arith.constant dense<0.000000e+00> : vector<64x8xf32>
    %51 = tpu.matmul %48, %50, %cst_48 {dimension_numbers = #tpu.dot_dimension_numbers<[1], [0], [0], [1], [0, 0, 1, 1], [], []>} : vector<64x16xbf16>, vector<16x8xbf16>, vector<64x8xf32> -> vector<64x8xf32>
    %52 = arith.addf %45, %51 : vector<64x8xf32>
    %c2_49 = arith.constant 2 : index
    %c0_50 = arith.constant 0 : index
    %c0_51 = arith.constant 0 : index
    %53 = vector.load %arg7[%c2_49, %c0_50, %c0_51] : memref<10x10x16xf32, #tpu.memory_space<vmem>>, vector<8x8x16xf32>
    %54 = vector.shape_cast %53 : vector<8x8x16xf32> to vector<64x16xf32>
    %55 = arith.truncf %54 : vector<64x16xf32> to vector<64x16xbf16>
    %c6 = arith.constant 6 : index
    %c0_52 = arith.constant 0 : index
    %c0_53 = arith.constant 0 : index
    %56 = vector.load %arg2[%c6, %c0_52, %c0_53] : memref<9x16x8xbf16, #tpu.memory_space<vmem>>, vector<1x16x8xbf16>
    %57 = vector.shape_cast %56 : vector<1x16x8xbf16> to vector<16x8xbf16>
    %cst_54 = arith.constant dense<0.000000e+00> : vector<64x8xf32>
    %58 = tpu.matmul %55, %57, %cst_54 {dimension_numbers = #tpu.dot_dimension_numbers<[1], [0], [0], [1], [0, 0, 1, 1], [], []>} : vector<64x16xbf16>, vector<16x8xbf16>, vector<64x8xf32> -> vector<64x8xf32>
    %59 = arith.addf %52, %58 : vector<64x8xf32>
    %c2_55 = arith.constant 2 : index
    %c1_56 = arith.constant 1 : index
    %c0_57 = arith.constant 0 : index
    %60 = vector.load %arg7[%c2_55, %c1_56, %c0_57] : memref<10x10x16xf32, #tpu.memory_space<vmem>>, vector<8x8x16xf32>
    %61 = vector.shape_cast %60 : vector<8x8x16xf32> to vector<64x16xf32>
    %62 = arith.truncf %61 : vector<64x16xf32> to vector<64x16xbf16>
    %c7 = arith.constant 7 : index
    %c0_58 = arith.constant 0 : index
    %c0_59 = arith.constant 0 : index
    %63 = vector.load %arg2[%c7, %c0_58, %c0_59] : memref<9x16x8xbf16, #tpu.memory_space<vmem>>, vector<1x16x8xbf16>
    %64 = vector.shape_cast %63 : vector<1x16x8xbf16> to vector<16x8xbf16>
    %cst_60 = arith.constant dense<0.000000e+00> : vector<64x8xf32>
    %65 = tpu.matmul %62, %64, %cst_60 {dimension_numbers = #tpu.dot_dimension_numbers<[1], [0], [0], [1], [0, 0, 1, 1], [], []>} : vector<64x16xbf16>, vector<16x8xbf16>, vector<64x8xf32> -> vector<64x8xf32>
    %66 = arith.addf %59, %65 : vector<64x8xf32>
    %c2_61 = arith.constant 2 : index
    %c2_62 = arith.constant 2 : index
    %c0_63 = arith.constant 0 : index
    %67 = vector.load %arg7[%c2_61, %c2_62, %c0_63] : memref<10x10x16xf32, #tpu.memory_space<vmem>>, vector<8x8x16xf32>
    %68 = vector.shape_cast %67 : vector<8x8x16xf32> to vector<64x16xf32>
    %69 = arith.truncf %68 : vector<64x16xf32> to vector<64x16xbf16>
    %c8 = arith.constant 8 : index
    %c0_64 = arith.constant 0 : index
    %c0_65 = arith.constant 0 : index
    %70 = vector.load %arg2[%c8, %c0_64, %c0_65] : memref<9x16x8xbf16, #tpu.memory_space<vmem>>, vector<1x16x8xbf16>
    %71 = vector.shape_cast %70 : vector<1x16x8xbf16> to vector<16x8xbf16>
    %cst_66 = arith.constant dense<0.000000e+00> : vector<64x8xf32>
    %72 = tpu.matmul %69, %71, %cst_66 {dimension_numbers = #tpu.dot_dimension_numbers<[1], [0], [0], [1], [0, 0, 1, 1], [], []>} : vector<64x16xbf16>, vector<16x8xbf16>, vector<64x8xf32> -> vector<64x8xf32>
    %73 = arith.addf %66, %72 : vector<64x8xf32>
    %c0_67 = arith.constant 0 : index
    %c0_68 = arith.constant 0 : index
    %74 = vector.load %arg4[%c0_67, %c0_68] : memref<1x8xf32, #tpu.memory_space<vmem>>, vector<1x8xf32>
    %75 = vector.broadcast %74 : vector<1x8xf32> to vector<64x8xf32>
    %76 = arith.addf %73, %75 : vector<64x8xf32>
    %cst_69 = arith.constant 0.000000e+00 : f32
    %77 = vector.broadcast %cst_69 : f32 to vector<64x8xf32>
    %78 = arith.maximumf %76, %77 : vector<64x8xf32>
    %cst_70 = arith.constant 0.000000e+00 : f32
    %79 = vector.broadcast %cst_70 : f32 to vector<10x10x8xf32>
    %c0_71 = arith.constant 0 : index
    %c0_72 = arith.constant 0 : index
    %c0_73 = arith.constant 0 : index
    %80 = vector.load %arg8[%c0_71, %c0_72, %c0_73] : memref<10x10x8xf32, #tpu.memory_space<vmem>>, vector<10x10x8xf32>
    tpu.vector_store %arg8[%c0_71, %c0_72, %c0_73], %79 {strides = array<i32>} : memref<10x10x8xf32, #tpu.memory_space<vmem>>, vector<10x10x8xf32>,
    %81 = vector.shape_cast %78 : vector<64x8xf32> to vector<8x8x8xf32>
    %c1_74 = arith.constant 1 : index
    %c1_75 = arith.constant 1 : index
    %c0_76 = arith.constant 0 : index
    %82 = vector.load %arg8[%c1_74, %c1_75, %c0_76] : memref<10x10x8xf32, #tpu.memory_space<vmem>>, vector<8x8x8xf32>
    tpu.vector_store %arg8[%c1_74, %c1_75, %c0_76], %81 {strides = array<i32>} : memref<10x10x8xf32, #tpu.memory_space<vmem>>, vector<8x8x8xf32>,
    %cst_77 = arith.constant 0.000000e+00 : f32
    %83 = vector.broadcast %cst_77 : f32 to vector<64x16xf32>
    %c0_78 = arith.constant 0 : index
    %c0_79 = arith.constant 0 : index
    %c0_80 = arith.constant 0 : index
    %84 = vector.load %arg8[%c0_78, %c0_79, %c0_80] : memref<10x10x8xf32, #tpu.memory_space<vmem>>, vector<8x8x8xf32>
    %85 = vector.shape_cast %84 : vector<8x8x8xf32> to vector<64x8xf32>
    %86 = arith.truncf %85 : vector<64x8xf32> to vector<64x8xbf16>
    %c0_81 = arith.constant 0 : index
    %c0_82 = arith.constant 0 : index
    %c0_83 = arith.constant 0 : index
    %87 = vector.load %arg3[%c0_81, %c0_82, %c0_83] : memref<9x8x16xbf16, #tpu.memory_space<vmem>>, vector<1x8x16xbf16>
    %88 = vector.shape_cast %87 : vector<1x8x16xbf16> to vector<8x16xbf16>
    %cst_84 = arith.constant dense<0.000000e+00> : vector<64x16xf32>
    %89 = tpu.matmul %86, %88, %cst_84 {dimension_numbers = #tpu.dot_dimension_numbers<[1], [0], [0], [1], [0, 0, 1, 1], [], []>} : vector<64x8xbf16>, vector<8x16xbf16>, vector<64x16xf32> -> vector<64x16xf32>
    %90 = arith.addf %83, %89 : vector<64x16xf32>
    %c0_85 = arith.constant 0 : index
    %c1_86 = arith.constant 1 : index
    %c0_87 = arith.constant 0 : index
    %91 = vector.load %arg8[%c0_85, %c1_86, %c0_87] : memref<10x10x8xf32, #tpu.memory_space<vmem>>, vector<8x8x8xf32>
    %92 = vector.shape_cast %91 : vector<8x8x8xf32> to vector<64x8xf32>
    %93 = arith.truncf %92 : vector<64x8xf32> to vector<64x8xbf16>
    %c1_88 = arith.constant 1 : index
    %c0_89 = arith.constant 0 : index
    %c0_90 = arith.constant 0 : index
    %94 = vector.load %arg3[%c1_88, %c0_89, %c0_90] : memref<9x8x16xbf16, #tpu.memory_space<vmem>>, vector<1x8x16xbf16>
    %95 = vector.shape_cast %94 : vector<1x8x16xbf16> to vector<8x16xbf16>
    %cst_91 = arith.constant dense<0.000000e+00> : vector<64x16xf32>
    %96 = tpu.matmul %93, %95, %cst_91 {dimension_numbers = #tpu.dot_dimension_numbers<[1], [0], [0], [1], [0, 0, 1, 1], [], []>} : vector<64x8xbf16>, vector<8x16xbf16>, vector<64x16xf32> -> vector<64x16xf32>
    %97 = arith.addf %90, %96 : vector<64x16xf32>
    %c0_92 = arith.constant 0 : index
    %c2_93 = arith.constant 2 : index
    %c0_94 = arith.constant 0 : index
    %98 = vector.load %arg8[%c0_92, %c2_93, %c0_94] : memref<10x10x8xf32, #tpu.memory_space<vmem>>, vector<8x8x8xf32>
    %99 = vector.shape_cast %98 : vector<8x8x8xf32> to vector<64x8xf32>
    %100 = arith.truncf %99 : vector<64x8xf32> to vector<64x8xbf16>
    %c2_95 = arith.constant 2 : index
    %c0_96 = arith.constant 0 : index
    %c0_97 = arith.constant 0 : index
    %101 = vector.load %arg3[%c2_95, %c0_96, %c0_97] : memref<9x8x16xbf16, #tpu.memory_space<vmem>>, vector<1x8x16xbf16>
    %102 = vector.shape_cast %101 : vector<1x8x16xbf16> to vector<8x16xbf16>
    %cst_98 = arith.constant dense<0.000000e+00> : vector<64x16xf32>
    %103 = tpu.matmul %100, %102, %cst_98 {dimension_numbers = #tpu.dot_dimension_numbers<[1], [0], [0], [1], [0, 0, 1, 1], [], []>} : vector<64x8xbf16>, vector<8x16xbf16>, vector<64x16xf32> -> vector<64x16xf32>
    %104 = arith.addf %97, %103 : vector<64x16xf32>
    %c1_99 = arith.constant 1 : index
    %c0_100 = arith.constant 0 : index
    %c0_101 = arith.constant 0 : index
    %105 = vector.load %arg8[%c1_99, %c0_100, %c0_101] : memref<10x10x8xf32, #tpu.memory_space<vmem>>, vector<8x8x8xf32>
    %106 = vector.shape_cast %105 : vector<8x8x8xf32> to vector<64x8xf32>
    %107 = arith.truncf %106 : vector<64x8xf32> to vector<64x8xbf16>
    %c3_102 = arith.constant 3 : index
    %c0_103 = arith.constant 0 : index
    %c0_104 = arith.constant 0 : index
    %108 = vector.load %arg3[%c3_102, %c0_103, %c0_104] : memref<9x8x16xbf16, #tpu.memory_space<vmem>>, vector<1x8x16xbf16>
    %109 = vector.shape_cast %108 : vector<1x8x16xbf16> to vector<8x16xbf16>
    %cst_105 = arith.constant dense<0.000000e+00> : vector<64x16xf32>
    %110 = tpu.matmul %107, %109, %cst_105 {dimension_numbers = #tpu.dot_dimension_numbers<[1], [0], [0], [1], [0, 0, 1, 1], [], []>} : vector<64x8xbf16>, vector<8x16xbf16>, vector<64x16xf32> -> vector<64x16xf32>
    %111 = arith.addf %104, %110 : vector<64x16xf32>
    %c1_106 = arith.constant 1 : index
    %c1_107 = arith.constant 1 : index
    %c0_108 = arith.constant 0 : index
    %112 = vector.load %arg8[%c1_106, %c1_107, %c0_108] : memref<10x10x8xf32, #tpu.memory_space<vmem>>, vector<8x8x8xf32>
    %113 = vector.shape_cast %112 : vector<8x8x8xf32> to vector<64x8xf32>
    %114 = arith.truncf %113 : vector<64x8xf32> to vector<64x8xbf16>
    %c4_109 = arith.constant 4 : index
    %c0_110 = arith.constant 0 : index
    %c0_111 = arith.constant 0 : index
    %115 = vector.load %arg3[%c4_109, %c0_110, %c0_111] : memref<9x8x16xbf16, #tpu.memory_space<vmem>>, vector<1x8x16xbf16>
    %116 = vector.shape_cast %115 : vector<1x8x16xbf16> to vector<8x16xbf16>
    %cst_112 = arith.constant dense<0.000000e+00> : vector<64x16xf32>
    %117 = tpu.matmul %114, %116, %cst_112 {dimension_numbers = #tpu.dot_dimension_numbers<[1], [0], [0], [1], [0, 0, 1, 1], [], []>} : vector<64x8xbf16>, vector<8x16xbf16>, vector<64x16xf32> -> vector<64x16xf32>
    %118 = arith.addf %111, %117 : vector<64x16xf32>
    %c1_113 = arith.constant 1 : index
    %c2_114 = arith.constant 2 : index
    %c0_115 = arith.constant 0 : index
    %119 = vector.load %arg8[%c1_113, %c2_114, %c0_115] : memref<10x10x8xf32, #tpu.memory_space<vmem>>, vector<8x8x8xf32>
    %120 = vector.shape_cast %119 : vector<8x8x8xf32> to vector<64x8xf32>
    %121 = arith.truncf %120 : vector<64x8xf32> to vector<64x8xbf16>
    %c5_116 = arith.constant 5 : index
    %c0_117 = arith.constant 0 : index
    %c0_118 = arith.constant 0 : index
    %122 = vector.load %arg3[%c5_116, %c0_117, %c0_118] : memref<9x8x16xbf16, #tpu.memory_space<vmem>>, vector<1x8x16xbf16>
    %123 = vector.shape_cast %122 : vector<1x8x16xbf16> to vector<8x16xbf16>
    %cst_119 = arith.constant dense<0.000000e+00> : vector<64x16xf32>
    %124 = tpu.matmul %121, %123, %cst_119 {dimension_numbers = #tpu.dot_dimension_numbers<[1], [0], [0], [1], [0, 0, 1, 1], [], []>} : vector<64x8xbf16>, vector<8x16xbf16>, vector<64x16xf32> -> vector<64x16xf32>
    %125 = arith.addf %118, %124 : vector<64x16xf32>
    %c2_120 = arith.constant 2 : index
    %c0_121 = arith.constant 0 : index
    %c0_122 = arith.constant 0 : index
    %126 = vector.load %arg8[%c2_120, %c0_121, %c0_122] : memref<10x10x8xf32, #tpu.memory_space<vmem>>, vector<8x8x8xf32>
    %127 = vector.shape_cast %126 : vector<8x8x8xf32> to vector<64x8xf32>
    %128 = arith.truncf %127 : vector<64x8xf32> to vector<64x8xbf16>
    %c6_123 = arith.constant 6 : index
    %c0_124 = arith.constant 0 : index
    %c0_125 = arith.constant 0 : index
    %129 = vector.load %arg3[%c6_123, %c0_124, %c0_125] : memref<9x8x16xbf16, #tpu.memory_space<vmem>>, vector<1x8x16xbf16>
    %130 = vector.shape_cast %129 : vector<1x8x16xbf16> to vector<8x16xbf16>
    %cst_126 = arith.constant dense<0.000000e+00> : vector<64x16xf32>
    %131 = tpu.matmul %128, %130, %cst_126 {dimension_numbers = #tpu.dot_dimension_numbers<[1], [0], [0], [1], [0, 0, 1, 1], [], []>} : vector<64x8xbf16>, vector<8x16xbf16>, vector<64x16xf32> -> vector<64x16xf32>
    %132 = arith.addf %125, %131 : vector<64x16xf32>
    %c2_127 = arith.constant 2 : index
    %c1_128 = arith.constant 1 : index
    %c0_129 = arith.constant 0 : index
    %133 = vector.load %arg8[%c2_127, %c1_128, %c0_129] : memref<10x10x8xf32, #tpu.memory_space<vmem>>, vector<8x8x8xf32>
    %134 = vector.shape_cast %133 : vector<8x8x8xf32> to vector<64x8xf32>
    %135 = arith.truncf %134 : vector<64x8xf32> to vector<64x8xbf16>
    %c7_130 = arith.constant 7 : index
    %c0_131 = arith.constant 0 : index
    %c0_132 = arith.constant 0 : index
    %136 = vector.load %arg3[%c7_130, %c0_131, %c0_132] : memref<9x8x16xbf16, #tpu.memory_space<vmem>>, vector<1x8x16xbf16>
    %137 = vector.shape_cast %136 : vector<1x8x16xbf16> to vector<8x16xbf16>
    %cst_133 = arith.constant dense<0.000000e+00> : vector<64x16xf32>
    %138 = tpu.matmul %135, %137, %cst_133 {dimension_numbers = #tpu.dot_dimension_numbers<[1], [0], [0], [1], [0, 0, 1, 1], [], []>} : vector<64x8xbf16>, vector<8x16xbf16>, vector<64x16xf32> -> vector<64x16xf32>
    %139 = arith.addf %132, %138 : vector<64x16xf32>
    %c2_134 = arith.constant 2 : index
    %c2_135 = arith.constant 2 : index
    %c0_136 = arith.constant 0 : index
    %140 = vector.load %arg8[%c2_134, %c2_135, %c0_136] : memref<10x10x8xf32, #tpu.memory_space<vmem>>, vector<8x8x8xf32>
    %141 = vector.shape_cast %140 : vector<8x8x8xf32> to vector<64x8xf32>
    %142 = arith.truncf %141 : vector<64x8xf32> to vector<64x8xbf16>
    %c8_137 = arith.constant 8 : index
    %c0_138 = arith.constant 0 : index
    %c0_139 = arith.constant 0 : index
    %143 = vector.load %arg3[%c8_137, %c0_138, %c0_139] : memref<9x8x16xbf16, #tpu.memory_space<vmem>>, vector<1x8x16xbf16>
    %144 = vector.shape_cast %143 : vector<1x8x16xbf16> to vector<8x16xbf16>
    %cst_140 = arith.constant dense<0.000000e+00> : vector<64x16xf32>
    %145 = tpu.matmul %142, %144, %cst_140 {dimension_numbers = #tpu.dot_dimension_numbers<[1], [0], [0], [1], [0, 0, 1, 1], [], []>} : vector<64x8xbf16>, vector<8x16xbf16>, vector<64x16xf32> -> vector<64x16xf32>
    %146 = arith.addf %139, %145 : vector<64x16xf32>
    %147 = vector.shape_cast %146 : vector<64x16xf32> to vector<8x8x16xf32>
    %148 = arith.truncf %147 : vector<8x8x16xf32> to vector<8x8x16xbf16>
    %c0_141 = arith.constant 0 : index
    %c0_142 = arith.constant 0 : index
    %c0_143 = arith.constant 0 : index
    %c0_144 = arith.constant 0 : index
    %149 = vector.load %arg5[%c0_141, %c0_142, %c0_143, %c0_144] : memref<1x8x8x16xbf16, #tpu.memory_space<vmem>>, vector<1x8x8x16xbf16>
    %150 = vector.shape_cast %149 : vector<1x8x8x16xbf16> to vector<8x8x16xbf16>
    %151 = vector.shape_cast %148 : vector<8x8x16xbf16> to vector<1x8x8x16xbf16>
    tpu.vector_store %arg5[%c0_141, %c0_142, %c0_143, %c0_144], %151 {strides = array<i32>} : memref<1x8x8x16xbf16, #tpu.memory_space<vmem>>, vector<1x8x8x16xbf16>,
    %cst_145 = arith.constant dense<0.000000e+00> : vector<16xf32>
    %152 = vector.multi_reduction <add>, %146, %cst_145 [0] : vector<64x16xf32> to vector<16xf32>
    %153 = vector.shape_cast %152 : vector<16xf32> to vector<1x16xf32>
    %c0_146 = arith.constant 0 : index
    %c0_147 = arith.constant 0 : index
    %c0_148 = arith.constant 0 : index
    %154 = vector.load %arg6[%c0_146, %c0_147, %c0_148] : memref<1x2x16xf32, #tpu.memory_space<vmem>>, vector<1x1x16xf32>
    %155 = vector.shape_cast %154 : vector<1x1x16xf32> to vector<1x16xf32>
    %156 = vector.shape_cast %153 : vector<1x16xf32> to vector<1x1x16xf32>
    tpu.vector_store %arg6[%c0_146, %c0_147, %c0_148], %156 {strides = array<i32>} : memref<1x2x16xf32, #tpu.memory_space<vmem>>, vector<1x1x16xf32>,
    %157 = arith.mulf %146, %146 : vector<64x16xf32>
    %cst_149 = arith.constant dense<0.000000e+00> : vector<16xf32>
    %158 = vector.multi_reduction <add>, %157, %cst_149 [0] : vector<64x16xf32> to vector<16xf32>
    %159 = vector.shape_cast %158 : vector<16xf32> to vector<1x16xf32>
    %c0_150 = arith.constant 0 : index
    %c1_151 = arith.constant 1 : index
    %c0_152 = arith.constant 0 : index
    %160 = vector.load %arg6[%c0_150, %c1_151, %c0_152] : memref<1x2x16xf32, #tpu.memory_space<vmem>>, vector<1x1x16xf32>
    %161 = vector.shape_cast %160 : vector<1x1x16xf32> to vector<1x16xf32>
    %162 = vector.shape_cast %159 : vector<1x16xf32> to vector<1x1x16xf32>
    tpu.vector_store %arg6[%c0_150, %c1_151, %c0_152], %162 {strides = array<i32>} : memref<1x2x16xf32, #tpu.memory_space<vmem>>, vector<1x1x16xf32>,
    return
  }
  func.func @transform_0(%arg0: i32) -> (i32, i32, i32, i32) {
    %c0_i32 = arith.constant 0 : i32
    %c0_i32_0 = arith.constant 0 : i32
    %c0_i32_1 = arith.constant 0 : i32
    %c0_i32_2 = arith.constant 0 : i32
    return %arg0, %c0_i32, %c0_i32_0, %c0_i32_1 : i32, i32, i32, i32
  }
  func.func @transform_1(%arg0: i32) -> (i32, i32, i32) {
    %c0_i32 = arith.constant 0 : i32
    %c0_i32_0 = arith.constant 0 : i32
    %c0_i32_1 = arith.constant 0 : i32
    %c0_i32_2 = arith.constant 0 : i32
    return %c0_i32, %c0_i32_0, %c0_i32_1 : i32, i32, i32
  }
  func.func @transform_2(%arg0: i32) -> (i32, i32, i32) {
    %c0_i32 = arith.constant 0 : i32
    %c0_i32_0 = arith.constant 0 : i32
    %c0_i32_1 = arith.constant 0 : i32
    %c0_i32_2 = arith.constant 0 : i32
    return %c0_i32, %c0_i32_0, %c0_i32_1 : i32, i32, i32
  }
  func.func @transform_3(%arg0: i32) -> (i32, i32) {
    %c0_i32 = arith.constant 0 : i32
    %c0_i32_0 = arith.constant 0 : i32
    %c0_i32_1 = arith.constant 0 : i32
    return %c0_i32, %c0_i32_0 : i32, i32
  }
  func.func @transform_4(%arg0: i32) -> (i32, i32, i32, i32) {
    %c0_i32 = arith.constant 0 : i32
    %c0_i32_0 = arith.constant 0 : i32
    %c0_i32_1 = arith.constant 0 : i32
    %c0_i32_2 = arith.constant 0 : i32
    return %arg0, %c0_i32, %c0_i32_0, %c0_i32_1 : i32, i32, i32, i32
  }
  func.func @transform_5(%arg0: i32) -> (i32, i32, i32) {
    %c0_i32 = arith.constant 0 : i32
    %c0_i32_0 = arith.constant 0 : i32
    %c0_i32_1 = arith.constant 0 : i32
    return %arg0, %c0_i32, %c0_i32_0 : i32, i32, i32
  }
}

module attributes {stable_mosaic.version = 11 : i64} {
  func.func @_finalize_kernel(%arg0: i32, %arg1: memref<1x8x8x16xbf16, #tpu.memory_space<vmem>>, %arg2: memref<1x8x8x16xf32, #tpu.memory_space<vmem>>, %arg3: memref<2x1x16xf32, #tpu.memory_space<vmem>>, %arg4: memref<1x8x8x32xf32, #tpu.memory_space<vmem>>) attributes {dimension_semantics = [#tpu.dimension_semantics<parallel>], iteration_bounds = array<i64: 2>, scalar_prefetch = 0 : i64, scratch_operands = 0 : i64, tpu.core_type = #tpu.core_type<tc>, window_params = [{transform_indices = @transform_0, window_bounds = array<i64: 1, 8, 8, 16>}, {transform_indices = @transform_1, window_bounds = array<i64: 1, 8, 8, 16>}, {pipeline_mode = #tpu.pipeline_mode<synchronous>, transform_indices = @transform_2, window_bounds = array<i64: 2, 1, 16>}, {transform_indices = @transform_3, window_bounds = array<i64: 1, 8, 8, 32>}]} {
    %c0 = arith.constant 0 : index
    %c0_0 = arith.constant 0 : index
    %c0_1 = arith.constant 0 : index
    %c0_2 = arith.constant 0 : index
    %0 = vector.load %arg1[%c0, %c0_0, %c0_1, %c0_2] : memref<1x8x8x16xbf16, #tpu.memory_space<vmem>>, vector<1x8x8x16xbf16>
    %1 = vector.shape_cast %0 : vector<1x8x8x16xbf16> to vector<8x8x16xbf16>
    %2 = arith.extf %1 : vector<8x8x16xbf16> to vector<8x8x16xf32>
    %c0_3 = arith.constant 0 : index
    %c0_4 = arith.constant 0 : index
    %c0_5 = arith.constant 0 : index
    %3 = vector.load %arg3[%c0_3, %c0_4, %c0_5] : memref<2x1x16xf32, #tpu.memory_space<vmem>>, vector<1x1x16xf32>
    %4 = vector.broadcast %3 : vector<1x1x16xf32> to vector<8x8x16xf32>
    %5 = arith.mulf %2, %4 : vector<8x8x16xf32>
    %c1 = arith.constant 1 : index
    %c0_6 = arith.constant 0 : index
    %c0_7 = arith.constant 0 : index
    %6 = vector.load %arg3[%c1, %c0_6, %c0_7] : memref<2x1x16xf32, #tpu.memory_space<vmem>>, vector<1x1x16xf32>
    %7 = vector.broadcast %6 : vector<1x1x16xf32> to vector<8x8x16xf32>
    %8 = arith.addf %5, %7 : vector<8x8x16xf32>
    %c0_8 = arith.constant 0 : index
    %c0_9 = arith.constant 0 : index
    %c0_10 = arith.constant 0 : index
    %c0_11 = arith.constant 0 : index
    %9 = vector.load %arg4[%c0_8, %c0_9, %c0_10, %c0_11] : memref<1x8x8x32xf32, #tpu.memory_space<vmem>>, vector<1x8x8x16xf32>
    %10 = vector.shape_cast %9 : vector<1x8x8x16xf32> to vector<8x8x16xf32>
    %11 = vector.shape_cast %8 : vector<8x8x16xf32> to vector<1x8x8x16xf32>
    tpu.vector_store %arg4[%c0_8, %c0_9, %c0_10, %c0_11], %11 {strides = array<i32>} : memref<1x8x8x32xf32, #tpu.memory_space<vmem>>, vector<1x8x8x16xf32>,
    %c0_12 = arith.constant 0 : index
    %c0_13 = arith.constant 0 : index
    %c0_14 = arith.constant 0 : index
    %c0_15 = arith.constant 0 : index
    %12 = vector.load %arg2[%c0_12, %c0_13, %c0_14, %c0_15] : memref<1x8x8x16xf32, #tpu.memory_space<vmem>>, vector<1x8x8x16xf32>
    %13 = vector.shape_cast %12 : vector<1x8x8x16xf32> to vector<8x8x16xf32>
    %c0_16 = arith.constant 0 : index
    %c0_17 = arith.constant 0 : index
    %c0_18 = arith.constant 0 : index
    %c16 = arith.constant 16 : index
    %14 = vector.load %arg4[%c0_16, %c0_17, %c0_18, %c16] : memref<1x8x8x32xf32, #tpu.memory_space<vmem>>, vector<1x8x8x16xf32>
    %15 = vector.shape_cast %14 : vector<1x8x8x16xf32> to vector<8x8x16xf32>
    %16 = vector.shape_cast %13 : vector<8x8x16xf32> to vector<1x8x8x16xf32>
    tpu.vector_store %arg4[%c0_16, %c0_17, %c0_18, %c16], %16 {strides = array<i32>} : memref<1x8x8x32xf32, #tpu.memory_space<vmem>>, vector<1x8x8x16xf32>,
    return
  }
  func.func @transform_0(%arg0: i32) -> (i32, i32, i32, i32) {
    %c0_i32 = arith.constant 0 : i32
    %c0_i32_0 = arith.constant 0 : i32
    %c0_i32_1 = arith.constant 0 : i32
    %c0_i32_2 = arith.constant 0 : i32
    return %arg0, %c0_i32, %c0_i32_0, %c0_i32_1 : i32, i32, i32, i32
  }
  func.func @transform_1(%arg0: i32) -> (i32, i32, i32, i32) {
    %c0_i32 = arith.constant 0 : i32
    %c0_i32_0 = arith.constant 0 : i32
    %c0_i32_1 = arith.constant 0 : i32
    %c0_i32_2 = arith.constant 0 : i32
    return %arg0, %c0_i32, %c0_i32_0, %c0_i32_1 : i32, i32, i32, i32
  }
  func.func @transform_2(%arg0: i32) -> (i32, i32, i32) {
    %c0_i32 = arith.constant 0 : i32
    %c0_i32_0 = arith.constant 0 : i32
    %c0_i32_1 = arith.constant 0 : i32
    %c0_i32_2 = arith.constant 0 : i32
    return %c0_i32, %c0_i32_0, %c0_i32_1 : i32, i32, i32
  }
  func.func @transform_3(%arg0: i32) -> (i32, i32, i32, i32) {
    %c0_i32 = arith.constant 0 : i32
    %c0_i32_0 = arith.constant 0 : i32
    %c0_i32_1 = arith.constant 0 : i32
    %c0_i32_2 = arith.constant 0 : i32
    return %arg0, %c0_i32, %c0_i32_0, %c0_i32_1 : i32, i32, i32, i32
  }
}

</mosaic_0001>

<llo_original>
// kernel: unet_innermost_forward.3
$region0: #{unet_innermost_forward.3}
  #allocation0 [shape = 'u32[]', space=smem, size = 0x4, offset = 0x4, fixed_abs, tag = 'smem constant byte address 0x4 - core index']
  #allocation1 [shape = 'u32[144,128]{1,0:T(1,128)}', space=vmem, size = 0x12000, scoped, tag = 'internal scratch']
  %s0 = inlined_call_operand.vmem [shape: bf16[2,8,8,16], index: 0, kind: input, shape index: {}]
  %s1 = inlined_call_operand.vmem [shape: f32[2,8,8,16], index: 1, kind: input, shape index: {}]
  %s2 = inlined_call_operand.vmem [shape: f32[2,1,16], index: 2, kind: input, shape index: {}]
  %s3 = inlined_call_operand.vmem [shape: f32[2,8,8,32], index: 3, kind: output, shape index: {}]
  %s4 = sld [smem:[#allocation0]]
  $region45: #{unet_innermost_forward.3} parent=0
    _
  %s6 = ssub.s32 1, %s4
  %s7 = scalar_select 0, %s6, %s4
  loop: start=0, step=1, limit=4
  $region2: #{unet_innermost_forward.3} parent=0 // loop_pre_header
    _
  $region3: #{unet_innermost_forward.3} parent=0 // loop_header
    %s9 = sphi 0, %s13
    %p10 = scmp.ge.s32.totalorder %s9, 4
    %s19 = sphi 0, %s21
    %s22 = sphi 0, %s19
    %s23 = sphi 0, %s22
    %s39 = sphi 0, %s23
    %s45 = sphi 0, %s47
    %s48 = sphi 0, %s45
    %s49 = sphi 0, %s48
    %s65 = sphi 0, %s49
    %s69 = sphi 0, %s69
    %s71 = sphi 0, %s69
    %s72 = sphi 0, %s71
    %s86 = sphi 0, %s72
    %s92 = sphi 0, %s94
    %s95 = sphi 0, %s92
    %s96 = sphi 0, %s95
    %s112 = sphi 0, %s96
  $region4: #{unet_innermost_forward.3} parent=0 // loop_header_branch
    %12 = sbr.rel (%p10) target = $region8
  $region5: #{unet_innermost_forward.3} parent=0 // loop_body
    %s14 = ssub.s32 %s9, 1
    %s15 = ssub.s32 %s9, 2
    %s16 = sadd.s32 %s9, 1
    %s17 = ssub.s32 %s9, %s16
    %p18 = scmp.eq.s32.totalorder %s17, 0
    %s20 = sadd.s32 %s19, 1
    %s21 = scalar_select %p18, %s19, %s20
    %p24 = pneg %p18
    %p25 = scmp.eq.s32.totalorder %s9, 1
    %p26 = por %p24, %p25
    %p27 = scmp.ne.s32.totalorder %s19, %s22
    %p28 = scmp.eq.s32.totalorder %s9, 0
    %p29 = por %p27, %p28
    %p30 = scmp.ne.s32.totalorder %s19, %s22
    %p31 = scmp.eq.s32.totalorder %s14, 1
    %p32 = por %p30, %p31
    %p33 = scmp.ne.s32.totalorder %s22, %s23
    %p34 = scmp.eq.s32.totalorder %s14, 0
    %p35 = por %p33, %p34
    %p36 = scmp.ne.s32.totalorder %s22, %s23
    %p37 = scmp.eq.s32.totalorder %s15, 1
    %p38 = por %p36, %p37
    %p40 = scmp.ne.s32.totalorder %s23, %s39
    %p41 = scmp.eq.s32.totalorder %s15, 0
    %p42 = por %p40, %p41
    %s43 = ssub.s32 %s9, %s16
    %p44 = scmp.eq.s32.totalorder %s43, 0
    %s46 = sadd.s32 %s45, 1
    %s47 = scalar_select %p44, %s45, %s46
    %p50 = pneg %p44
    %p51 = scmp.eq.s32.totalorder %s9, 1
    %p52 = por %p50, %p51
    %p53 = scmp.ne.s32.totalorder %s45, %s48
    %p54 = scmp.eq.s32.totalorder %s9, 0
    %p55 = por %p53, %p54
    %p56 = scmp.ne.s32.totalorder %s45, %s48
    %p57 = scmp.eq.s32.totalorder %s14, 1
    %p58 = por %p56, %p57
    %p59 = scmp.ne.s32.totalorder %s48, %s49
    %p60 = scmp.eq.s32.totalorder %s14, 0
    %p61 = por %p59, %p60
    %p62 = scmp.ne.s32.totalorder %s48, %s49
    %p63 = scmp.eq.s32.totalorder %s15, 1
    %p64 = por %p62, %p63
    %p66 = scmp.ne.s32.totalorder %s49, %s65
    %p67 = scmp.eq.s32.totalorder %s15, 0
    %p68 = por %p66, %p67
    %s70 = sadd.s32 %s69, 1
    %p73 = scmp.eq.s32.totalorder %s9, 1
    %p74 = scmp.ne.s32.totalorder %s69, %s71
    %p75 = scmp.eq.s32.totalorder %s9, 0
    %p76 = por %p74, %p75
    %p77 = scmp.ne.s32.totalorder %s69, %s71
    %p78 = scmp.eq.s32.totalorder %s14, 1
    %p79 = por %p77, %p78
    %p80 = scmp.ne.s32.totalorder %s71, %s72
    %p81 = scmp.eq.s32.totalorder %s14, 0
    %p82 = por %p80, %p81
    %p83 = scmp.ne.s32.totalorder %s71, %s72
    %p84 = scmp.eq.s32.totalorder %s15, 1
    %p85 = por %p83, %p84
    %p87 = scmp.ne.s32.totalorder %s72, %s86
    %p88 = scmp.eq.s32.totalorder %s15, 0
    %p89 = por %p87, %p88
    %s90 = ssub.s32 %s9, %s16
    %p91 = scmp.eq.s32.totalorder %s90, 0
    %s93 = sadd.s32 %s92, 1
    %s94 = scalar_select %p91, %s92, %s93
    %p97 = pneg %p91
    %p98 = scmp.eq.s32.totalorder %s9, 1
    %p99 = por %p97, %p98
    %p100 = scmp.ne.s32.totalorder %s92, %s95
    %p101 = scmp.eq.s32.totalorder %s9, 0
    %p102 = por %p100, %p101
    %p103 = scmp.ne.s32.totalorder %s92, %s95
    %p104 = scmp.eq.s32.totalorder %s14, 1
    %p105 = por %p103, %p104
    %p106 = scmp.ne.s32.totalorder %s95, %s96
    %p107 = scmp.eq.s32.totalorder %s14, 0
    %p108 = por %p106, %p107
    %p109 = scmp.ne.s32.totalorder %s95, %s96
    %p110 = scmp.eq.s32.totalorder %s15, 1
    %p111 = por %p109, %p110
    %p113 = scmp.ne.s32.totalorder %s96, %s112
    %p114 = scmp.eq.s32.totalorder %s15, 0
    %p115 = por %p113, %p114
    %p116 = scmp.le.s32.totalorder 1, %s9
    %p117 = scmp.lt.s32.totalorder %s9, 3
    %p118 = pnand %p116, %p117
    %p119 = pneg %p118
    // Predicated region
    $region9: #{unet_innermost_forward.3} parent=5 // pred_check
      _
    $region10: #{unet_innermost_forward.3} parent=5 // pred_check_branch
      %121 = sbr.rel (%p118) target = $region12
    $region11: #{unet_innermost_forward.3} parent=5 // pred_region
      %s122 = ssub.s32 %s9, 1
      // Predicated region
      $region13: #{unet_innermost_forward.3} parent=11 // pred_check
        %p123 = pneg %p82
      $region14: #{unet_innermost_forward.3} parent=11 // pred_check_branch
        %125 = sbr.rel (%p123) target = $region16
      $region15: #{unet_innermost_forward.3} parent=11 // pred_region
        _
      $region16: #{unet_innermost_forward.3} parent=11 // pred_fallthru
        _
    $region12: #{unet_innermost_forward.3} parent=5 // pred_fallthru
      _
    %p126 = scmp.lt.s32.totalorder %s9, 2
    // Predicated region
    $region17: #{unet_innermost_forward.3} parent=5 // pred_check
      %p127 = pneg %p126
    $region18: #{unet_innermost_forward.3} parent=5 // pred_check_branch
      %129 = sbr.rel (%p127) target = $region20
    $region19: #{unet_innermost_forward.3} parent=5 // pred_region
      // Predicated region
      $region21: #{unet_innermost_forward.3} parent=19 // pred_check
        %p130 = pneg %p29
      $region22: #{unet_innermost_forward.3} parent=19 // pred_check_branch
        %132 = sbr.rel (%p130) target = $region24
      $region23: #{unet_innermost_forward.3} parent=19 // pred_region
        %p133 = scmp.lt.s32.totalorder %s9, 1
        %s134 = scalar_select %p133, %s9, 1
        %s135 = smul.addr %s134, 8
        %s136 = smul.addr %s135, 4
        %s137 = scalar_lea.vmem %s0, %s136
      $region24: #{unet_innermost_forward.3} parent=19 // pred_fallthru
        _
      // Predicated region
      $region25: #{unet_innermost_forward.3} parent=19 // pred_check
        %p138 = pneg %p55
      $region26: #{unet_innermost_forward.3} parent=19 // pred_check_branch
        %140 = sbr.rel (%p138) target = $region28
      $region27: #{unet_innermost_forward.3} parent=19 // pred_region
        %p141 = scmp.lt.s32.totalorder %s9, 1
        %s142 = scalar_select %p141, %s9, 1
        %s143 = smul.addr %s142, 8
        %s144 = smul.addr %s143, 8
        %s145 = scalar_lea.vmem %s1, %s144
      $region28: #{unet_innermost_forward.3} parent=19 // pred_fallthru
        _
    $region20: #{unet_innermost_forward.3} parent=5 // pred_fallthru
      _
    %p146 = scmp.le.s32.totalorder 1, %s9
    %p147 = scmp.lt.s32.totalorder %s9, 3
    %p148 = pnand %p146, %p147
    %p149 = pneg %p148
    // Predicated region
    $region29: #{unet_innermost_forward.3} parent=5 // pred_check
      _
    $region30: #{unet_innermost_forward.3} parent=5 // pred_check_branch
      %151 = sbr.rel (%p148) target = $region32
    $region31: #{unet_innermost_forward.3} parent=5 // pred_region
      %s152 = ssub.s32 %s9, 1
      %p153 = scmp.lt.s32.totalorder %s14, 1
      %s154 = scalar_select %p153, %s14, 1
      %s155 = smul.addr %s154, 8
      %s156 = smul.addr %s155, 4
      %s157 = scalar_lea.vmem %s0, %s156
      %p158 = pneg %p35
      %p159 = pneg %p32
      %p160 = scmp.lt.s32.totalorder %s14, 1
      %s161 = scalar_select %p160, %s14, 1
      %s162 = smul.addr %s161, 8
      %s163 = smul.addr %s162, 8
      %s164 = scalar_lea.vmem %s1, %s163
      %p165 = pneg %p61
      %p166 = pneg %p58
      %p167 = pneg %p82
      %p168 = pneg %p79
      %p169 = pneg %p108
      %p170 = pneg %p105
      %p171 = scmp.lt.s32.totalorder %s14, 1
      %s172 = scalar_select %p171, %s14, 1
      %s173 = smul.addr %s172, 8
      %s174 = smul.addr %s173, 8
      %s175 = scalar_lea.vmem %s3, %s174
      %p176 = scmp.lt.s32.totalorder %s14, 1
      %s177 = scalar_select %p176, %s14, 1
      %s178 = smul.addr %s177, 8
      %s179 = smul.addr %s178, 4
      %s180 = scalar_lea.vmem %s0, %s179
      %p181 = scmp.lt.s32.totalorder %s14, 1
      %s182 = scalar_select %p181, %s14, 1
      %s183 = smul.addr %s182, 8
      %s184 = smul.addr %s183, 8
      %s185 = scalar_lea.vmem %s1, %s184
      %p186 = scmp.lt.s32.totalorder %s14, 1
      %s187 = scalar_select %p186, %s14, 1
      %s188 = smul.addr %s187, 8
      %s189 = smul.addr %s188, 8
      %s190 = scalar_lea.vmem %s3, %s189
      %v191 = vld [vmem:[%s180] sm:$0xf]
      %v192 = vld [vmem:[%s180 + $0x4] sm:$0xf]
      %v193 = vld [vmem:[%s180 + $0x8] sm:$0xf]
      %v194 = vld [vmem:[%s180 + $0xc] sm:$0xf]
      %v195 = vld [vmem:[%s180 + $0x10] sm:$0xf]
      %v196 = vld [vmem:[%s180 + $0x14] sm:$0xf]
      %v197 = vld [vmem:[%s180 + $0x18] sm:$0xf]
      %v198 = vld [vmem:[%s180 + $0x1c] sm:$0xf]
      %v199 = vunpack.c.l.bf16 %v191
      %v200 = vunpack.c.l.bf16 %v192
      %v201 = vunpack.c.l.bf16 %v193
      %v202 = vunpack.c.l.bf16 %v194
      %v203 = vunpack.c.l.bf16 %v195
      %v204 = vunpack.c.l.bf16 %v196
      %v205 = vunpack.c.l.bf16 %v197
      %v206 = vunpack.c.l.bf16 %v198
      %v207 = vld [vmem:[%s2] sm:$0x1]
      %v209 = vlaneseq
      %v210 = vshrl.u32 %v209, 7
      %v211 = vsub.s32 0, %v210
      %v212 = vrot.slane %v207, %v211
      %v214 = vmul.f32 %v199, %v212
      %v215 = vmul.f32 %v200, %v212
      %v216 = vmul.f32 %v201, %v212
      %v217 = vmul.f32 %v202, %v212
      %v218 = vmul.f32 %v203, %v212
      %v219 = vmul.f32 %v204, %v212
      %v220 = vmul.f32 %v205, %v212
      %v221 = vmul.f32 %v206, %v212
      %s222 = scalar_lea.vmem %s2, 1
      %v223 = vld [vmem:[%s222] sm:$0x1]
      %v225 = vlaneseq
      %v226 = vshrl.u32 %v225, 7
      %v227 = vsub.s32 0, %v226
      %v228 = vrot.slane %v223, %v227
      %v230 = vadd.f32 %v214, %v228
      %v231 = vadd.f32 %v215, %v228
      %v232 = vadd.f32 %v216, %v228
      %v233 = vadd.f32 %v217, %v228
      %v234 = vadd.f32 %v218, %v228
      %v235 = vadd.f32 %v219, %v228
      %v236 = vadd.f32 %v220, %v228
      %v237 = vadd.f32 %v221, %v228
      %vm238 = vcmask 130048
      %239 = vst.msk [vmem:[%s190] sm:$0xff] %vm238, %v230
      %240 = vst.msk [vmem:[%s190 + $0x8] sm:$0xff] %vm238, %v231
      %241 = vst.msk [vmem:[%s190 + $0x10] sm:$0xff] %vm238, %v232
      %242 = vst.msk [vmem:[%s190 + $0x18] sm:$0xff] %vm238, %v233
      %243 = vst.msk [vmem:[%s190 + $0x20] sm:$0xff] %vm238, %v234
      %244 = vst.msk [vmem:[%s190 + $0x28] sm:$0xff] %vm238, %v235
      %245 = vst.msk [vmem:[%s190 + $0x30] sm:$0xff] %vm238, %v236
      %246 = vst.msk [vmem:[%s190 + $0x38] sm:$0xff] %vm238, %v237
      %v247 = vld [vmem:[%s185] sm:$0xff]
      %v248 = vld [vmem:[%s185 + $0x8] sm:$0xff]
      %v249 = vld [vmem:[%s185 + $0x10] sm:$0xff]
      %v250 = vld [vmem:[%s185 + $0x18] sm:$0xff]
      %v251 = vld [vmem:[%s185 + $0x20] sm:$0xff]
      %v252 = vld [vmem:[%s185 + $0x28] sm:$0xff]
      %v253 = vld [vmem:[%s185 + $0x30] sm:$0xff]
      %v254 = vld [vmem:[%s185 + $0x38] sm:$0xff]
      %263 = vrot.lane.b32.xlu0 %v247, 16
      %v264 = vpop.permute.xlu0 %263
      %265 = vrot.lane.b32.xlu0 %v248, 16
      %v266 = vpop.permute.xlu0 %265
      %267 = vrot.lane.b32.xlu0 %v249, 16
      %v268 = vpop.permute.xlu0 %267
      %269 = vrot.lane.b32.xlu0 %v250, 16
      %v270 = vpop.permute.xlu0 %269
      %271 = vrot.lane.b32.xlu0 %v251, 16
      %v272 = vpop.permute.xlu0 %271
      %273 = vrot.lane.b32.xlu0 %v252, 16
      %v274 = vpop.permute.xlu0 %273
      %275 = vrot.lane.b32.xlu0 %v253, 16
      %v276 = vpop.permute.xlu0 %275
      %277 = vrot.lane.b32.xlu0 %v254, 16
      %v278 = vpop.permute.xlu0 %277
      %vm287 = vcmask 261248
      %288 = vst.msk [vmem:[%s190] sm:$0xff] %vm287, %v264
      %289 = vst.msk [vmem:[%s190 + $0x8] sm:$0xff] %vm287, %v266
      %290 = vst.msk [vmem:[%s190 + $0x10] sm:$0xff] %vm287, %v268
      %291 = vst.msk [vmem:[%s190 + $0x18] sm:$0xff] %vm287, %v270
      %292 = vst.msk [vmem:[%s190 + $0x20] sm:$0xff] %vm287, %v272
      %293 = vst.msk [vmem:[%s190 + $0x28] sm:$0xff] %vm287, %v274
      %294 = vst.msk [vmem:[%s190 + $0x30] sm:$0xff] %vm287, %v276
      %295 = vst.msk [vmem:[%s190 + $0x38] sm:$0xff] %vm287, %v278
      %p296 = scmp.lt.s32.totalorder %s14, 1
      %s297 = scalar_select %p296, %s14, 1
      %s298 = smul.addr %s297, 8
      %s299 = smul.addr %s298, 8
      %s300 = scalar_lea.vmem %s3, %s299
      // Predicated region
      $region33: #{unet_innermost_forward.3} parent=31 // pred_check
        %p301 = pneg %p105
      $region34: #{unet_innermost_forward.3} parent=31 // pred_check_branch
        %303 = sbr.rel (%p301) target = $region36
      $region35: #{unet_innermost_forward.3} parent=31 // pred_region
        _
      $region36: #{unet_innermost_forward.3} parent=31 // pred_fallthru
        _
    $region32: #{unet_innermost_forward.3} parent=5 // pred_fallthru
      _
    %p304 = scmp.le.s32.totalorder 2, %s9
    // Predicated region
    $region37: #{unet_innermost_forward.3} parent=5 // pred_check
      %p305 = pneg %p304
    $region38: #{unet_innermost_forward.3} parent=5 // pred_check_branch
      %307 = sbr.rel (%p305) target = $region40
    $region39: #{unet_innermost_forward.3} parent=5 // pred_region
      %s308 = ssub.s32 %s9, 2
      // Predicated region
      $region41: #{unet_innermost_forward.3} parent=39 // pred_check
        %p309 = pneg %p111
      $region42: #{unet_innermost_forward.3} parent=39 // pred_check_branch
        %311 = sbr.rel (%p309) target = $region44
      $region43: #{unet_innermost_forward.3} parent=39 // pred_region
        %p312 = scmp.lt.s32.totalorder %s15, 1
        %s313 = scalar_select %p312, %s15, 1
        %s314 = smul.addr %s313, 8
        %s315 = smul.addr %s314, 8
        %s316 = scalar_lea.vmem %s3, %s315
      $region44: #{unet_innermost_forward.3} parent=39 // pred_fallthru
        _
    $region40: #{unet_innermost_forward.3} parent=5 // pred_fallthru
      _
  $region6: #{unet_innermost_forward.3} parent=0 // loop_footer
    %s13 = sadd.s32 1, %s9
  $region7: #{unet_innermost_forward.3} parent=0 // loop_footer_branch
    %8 = sbr.rel target = $region3
  $region8: #{unet_innermost_forward.3} parent=0 // loop_exit
    _

// kernel: unet_innermost_forward.2
$region0: #{unet_innermost_forward.2}
  #allocation0 [shape = 'u32[]', space=smem, size = 0x4, offset = 0x4, fixed_abs, tag = 'smem constant byte address 0x4 - core index']
  #allocation1 [shape = 'u32[144,128]{1,0:T(1,128)}', space=vmem, size = 0x12000, scoped, tag = 'internal scratch']
  #allocation2 [shape = 'f32[10,10,16]{2,1,0:T(8,128)}', space=vmem, size = 0x14000, scoped, tag = 'scratch operand']
  #allocation3 [shape = 'f32[10,10,8]{2,1,0:T(8,128)}', space=vmem, size = 0x14000, scoped, tag = 'scratch operand']
  %s0 = inlined_call_operand.vmem [shape: f32[2,8,8,16], index: 0, kind: input, shape index: {}]
  %s1 = inlined_call_operand.vmem [shape: bf16[9,16,8], index: 1, kind: input, shape index: {}]
  %s2 = inlined_call_operand.vmem [shape: bf16[9,8,16], index: 2, kind: input, shape index: {}]
  %s3 = inlined_call_operand.vmem [shape: f32[1,8], index: 3, kind: input, shape index: {}]
  %s4 = inlined_call_operand.vmem [shape: bf16[2,8,8,16], index: 4, kind: output, shape index: {0}]
  %s5 = inlined_call_operand.vmem [shape: f32[2,2,16], index: 5, kind: output, shape index: {1}]
  %6 = xla_tuple %s4, %s5
  %s7 = sld [smem:[#allocation0]]
  $region57: #{unet_innermost_forward.2} parent=0
    _
  %s9 = ssub.s32 1, %s7
  %s10 = scalar_select 0, %s9, %s7
  loop: start=0, step=1, limit=4
  $region2: #{unet_innermost_forward.2} parent=0 // loop_pre_header
    _
  $region3: #{unet_innermost_forward.2} parent=0 // loop_header
    %s12 = sphi 0, %s16
    %p13 = scmp.ge.s32.totalorder %s12, 4
    %s22 = sphi 0, %s24
    %s25 = sphi 0, %s22
    %s26 = sphi 0, %s25
    %s42 = sphi 0, %s26
    %s46 = sphi 0, %s46
    %s48 = sphi 0, %s46
    %s49 = sphi 0, %s48
    %s63 = sphi 0, %s49
    %s67 = sphi 0, %s67
    %s69 = sphi 0, %s67
    %s70 = sphi 0, %s69
    %s84 = sphi 0, %s70
    %s88 = sphi 0, %s88
    %s90 = sphi 0, %s88
    %s91 = sphi 0, %s90
    %s105 = sphi 0, %s91
    %s111 = sphi 0, %s113
    %s114 = sphi 0, %s111
    %s115 = sphi 0, %s114
    %s131 = sphi 0, %s115
    %s137 = sphi 0, %s139
    %s140 = sphi 0, %s137
    %s141 = sphi 0, %s140
    %s157 = sphi 0, %s141
  $region4: #{unet_innermost_forward.2} parent=0 // loop_header_branch
    %15 = sbr.rel (%p13) target = $region8
  $region5: #{unet_innermost_forward.2} parent=0 // loop_body
    %s17 = ssub.s32 %s12, 1
    %s18 = ssub.s32 %s12, 2
    %s19 = sadd.s32 %s12, 1
    %s20 = ssub.s32 %s12, %s19
    %p21 = scmp.eq.s32.totalorder %s20, 0
    %s23 = sadd.s32 %s22, 1
    %s24 = scalar_select %p21, %s22, %s23
    %p27 = pneg %p21
    %p28 = scmp.eq.s32.totalorder %s12, 1
    %p29 = por %p27, %p28
    %p30 = scmp.ne.s32.totalorder %s22, %s25
    %p31 = scmp.eq.s32.totalorder %s12, 0
    %p32 = por %p30, %p31
    %p33 = scmp.ne.s32.totalorder %s22, %s25
    %p34 = scmp.eq.s32.totalorder %s17, 1
    %p35 = por %p33, %p34
    %p36 = scmp.ne.s32.totalorder %s25, %s26
    %p37 = scmp.eq.s32.totalorder %s17, 0
    %p38 = por %p36, %p37
    %p39 = scmp.ne.s32.totalorder %s25, %s26
    %p40 = scmp.eq.s32.totalorder %s18, 1
    %p41 = por %p39, %p40
    %p43 = scmp.ne.s32.totalorder %s26, %s42
    %p44 = scmp.eq.s32.totalorder %s18, 0
    %p45 = por %p43, %p44
    %s47 = sadd.s32 %s46, 1
    %p50 = scmp.eq.s32.totalorder %s12, 1
    %p51 = scmp.ne.s32.totalorder %s46, %s48
    %p52 = scmp.eq.s32.totalorder %s12, 0
    %p53 = por %p51, %p52
    %p54 = scmp.ne.s32.totalorder %s46, %s48
    %p55 = scmp.eq.s32.totalorder %s17, 1
    %p56 = por %p54, %p55
    %p57 = scmp.ne.s32.totalorder %s48, %s49
    %p58 = scmp.eq.s32.totalorder %s17, 0
    %p59 = por %p57, %p58
    %p60 = scmp.ne.s32.totalorder %s48, %s49
    %p61 = scmp.eq.s32.totalorder %s18, 1
    %p62 = por %p60, %p61
    %p64 = scmp.ne.s32.totalorder %s49, %s63
    %p65 = scmp.eq.s32.totalorder %s18, 0
    %p66 = por %p64, %p65
    %s68 = sadd.s32 %s67, 1
    %p71 = scmp.eq.s32.totalorder %s12, 1
    %p72 = scmp.ne.s32.totalorder %s67, %s69
    %p73 = scmp.eq.s32.totalorder %s12, 0
    %p74 = por %p72, %p73
    %p75 = scmp.ne.s32.totalorder %s67, %s69
    %p76 = scmp.eq.s32.totalorder %s17, 1
    %p77 = por %p75, %p76
    %p78 = scmp.ne.s32.totalorder %s69, %s70
    %p79 = scmp.eq.s32.totalorder %s17, 0
    %p80 = por %p78, %p79
    %p81 = scmp.ne.s32.totalorder %s69, %s70
    %p82 = scmp.eq.s32.totalorder %s18, 1
    %p83 = por %p81, %p82
    %p85 = scmp.ne.s32.totalorder %s70, %s84
    %p86 = scmp.eq.s32.totalorder %s18, 0
    %p87 = por %p85, %p86
    %s89 = sadd.s32 %s88, 1
    %p92 = scmp.eq.s32.totalorder %s12, 1
    %p93 = scmp.ne.s32.totalorder %s88, %s90
    %p94 = scmp.eq.s32.totalorder %s12, 0
    %p95 = por %p93, %p94
    %p96 = scmp.ne.s32.totalorder %s88, %s90
    %p97 = scmp.eq.s32.totalorder %s17, 1
    %p98 = por %p96, %p97
    %p99 = scmp.ne.s32.totalorder %s90, %s91
    %p100 = scmp.eq.s32.totalorder %s17, 0
    %p101 = por %p99, %p100
    %p102 = scmp.ne.s32.totalorder %s90, %s91
    %p103 = scmp.eq.s32.totalorder %s18, 1
    %p104 = por %p102, %p103
    %p106 = scmp.ne.s32.totalorder %s91, %s105
    %p107 = scmp.eq.s32.totalorder %s18, 0
    %p108 = por %p106, %p107
    %s109 = ssub.s32 %s12, %s19
    %p110 = scmp.eq.s32.totalorder %s109, 0
    %s112 = sadd.s32 %s111, 1
    %s113 = scalar_select %p110, %s111, %s112
    %p116 = pneg %p110
    %p117 = scmp.eq.s32.totalorder %s12, 1
    %p118 = por %p116, %p117
    %p119 = scmp.ne.s32.totalorder %s111, %s114
    %p120 = scmp.eq.s32.totalorder %s12, 0
    %p121 = por %p119, %p120
    %p122 = scmp.ne.s32.totalorder %s111, %s114
    %p123 = scmp.eq.s32.totalorder %s17, 1
    %p124 = por %p122, %p123
    %p125 = scmp.ne.s32.totalorder %s114, %s115
    %p126 = scmp.eq.s32.totalorder %s17, 0
    %p127 = por %p125, %p126
    %p128 = scmp.ne.s32.totalorder %s114, %s115
    %p129 = scmp.eq.s32.totalorder %s18, 1
    %p130 = por %p128, %p129
    %p132 = scmp.ne.s32.totalorder %s115, %s131
    %p133 = scmp.eq.s32.totalorder %s18, 0
    %p134 = por %p132, %p133
    %s135 = ssub.s32 %s12, %s19
    %p136 = scmp.eq.s32.totalorder %s135, 0
    %s138 = sadd.s32 %s137, 1
    %s139 = scalar_select %p136, %s137, %s138
    %p142 = pneg %p136
    %p143 = scmp.eq.s32.totalorder %s12, 1
    %p144 = por %p142, %p143
    %p145 = scmp.ne.s32.totalorder %s137, %s140
    %p146 = scmp.eq.s32.totalorder %s12, 0
    %p147 = por %p145, %p146
    %p148 = scmp.ne.s32.totalorder %s137, %s140
    %p149 = scmp.eq.s32.totalorder %s17, 1
    %p150 = por %p148, %p149
    %p151 = scmp.ne.s32.totalorder %s140, %s141
    %p152 = scmp.eq.s32.totalorder %s17, 0
    %p153 = por %p151, %p152
    %p154 = scmp.ne.s32.totalorder %s140, %s141
    %p155 = scmp.eq.s32.totalorder %s18, 1
    %p156 = por %p154, %p155
    %p158 = scmp.ne.s32.totalorder %s141, %s157
    %p159 = scmp.eq.s32.totalorder %s18, 0
    %p160 = por %p158, %p159
    %p161 = scmp.le.s32.totalorder 1, %s12
    %p162 = scmp.lt.s32.totalorder %s12, 3
    %p163 = pnand %p161, %p162
    %p164 = pneg %p163
    // Predicated region
    $region9: #{unet_innermost_forward.2} parent=5 // pred_check
      _
    $region10: #{unet_innermost_forward.2} parent=5 // pred_check_branch
      %166 = sbr.rel (%p163) target = $region12
    $region11: #{unet_innermost_forward.2} parent=5 // pred_region
      %s167 = ssub.s32 %s12, 1
      // Predicated region
      $region13: #{unet_innermost_forward.2} parent=11 // pred_check
        %p168 = pneg %p59
      $region14: #{unet_innermost_forward.2} parent=11 // pred_check_branch
        %170 = sbr.rel (%p168) target = $region16
      $region15: #{unet_innermost_forward.2} parent=11 // pred_region
        _
      $region16: #{unet_innermost_forward.2} parent=11 // pred_fallthru
        _
      // Predicated region
      $region17: #{unet_innermost_forward.2} parent=11 // pred_check
        %p171 = pneg %p80
      $region18: #{unet_innermost_forward.2} parent=11 // pred_check_branch
        %173 = sbr.rel (%p171) target = $region20
      $region19: #{unet_innermost_forward.2} parent=11 // pred_region
        _
      $region20: #{unet_innermost_forward.2} parent=11 // pred_fallthru
        _
      // Predicated region
      $region21: #{unet_innermost_forward.2} parent=11 // pred_check
        %p174 = pneg %p101
      $region22: #{unet_innermost_forward.2} parent=11 // pred_check_branch
        %176 = sbr.rel (%p174) target = $region24
      $region23: #{unet_innermost_forward.2} parent=11 // pred_region
        _
      $region24: #{unet_innermost_forward.2} parent=11 // pred_fallthru
        _
    $region12: #{unet_innermost_forward.2} parent=5 // pred_fallthru
      _
    %p177 = scmp.lt.s32.totalorder %s12, 2
    // Predicated region
    $region25: #{unet_innermost_forward.2} parent=5 // pred_check
      %p178 = pneg %p177
    $region26: #{unet_innermost_forward.2} parent=5 // pred_check_branch
      %180 = sbr.rel (%p178) target = $region28
    $region27: #{unet_innermost_forward.2} parent=5 // pred_region
      // Predicated region
      $region29: #{unet_innermost_forward.2} parent=27 // pred_check
        %p181 = pneg %p32
      $region30: #{unet_innermost_forward.2} parent=27 // pred_check_branch
        %183 = sbr.rel (%p181) target = $region32
      $region31: #{unet_innermost_forward.2} parent=27 // pred_region
        %p184 = scmp.lt.s32.totalorder %s12, 1
        %s185 = scalar_select %p184, %s12, 1
        %s186 = smul.addr %s185, 8
        %s187 = smul.addr %s186, 8
        %s188 = scalar_lea.vmem %s0, %s187
      $region32: #{unet_innermost_forward.2} parent=27 // pred_fallthru
        _
    $region28: #{unet_innermost_forward.2} parent=5 // pred_fallthru
      _
    %p189 = scmp.le.s32.totalorder 1, %s12
    %p190 = scmp.lt.s32.totalorder %s12, 3
    %p191 = pnand %p189, %p190
    %p192 = pneg %p191
    // Predicated region
    $region33: #{unet_innermost_forward.2} parent=5 // pred_check
      _
    $region34: #{unet_innermost_forward.2} parent=5 // pred_check_branch
      %194 = sbr.rel (%p191) target = $region36
    $region35: #{unet_innermost_forward.2} parent=5 // pred_region
      %s195 = ssub.s32 %s12, 1
      %p196 = scmp.lt.s32.totalorder %s17, 1
      %s197 = scalar_select %p196, %s17, 1
      %s198 = smul.addr %s197, 8
      %s199 = smul.addr %s198, 8
      %s200 = scalar_lea.vmem %s0, %s199
      %p201 = pneg %p38
      %p202 = pneg %p35
      %p203 = pneg %p59
      %p204 = pneg %p56
      %p205 = pneg %p80
      %p206 = pneg %p77
      %p207 = pneg %p101
      %p208 = pneg %p98
      %p209 = pneg %p127
      %p210 = pneg %p124
      %p211 = scmp.lt.s32.totalorder %s17, 1
      %s212 = scalar_select %p211, %s17, 1
      %s213 = smul.addr %s212, 8
      %s214 = smul.addr %s213, 4
      %s215 = scalar_lea.vmem %s4, %s214
      %p216 = pneg %p153
      %p217 = pneg %p150
      %p218 = scmp.lt.s32.totalorder %s17, 1
      %s219 = scalar_select %p218, %s17, 1
      %s220 = smul.addr %s219, 2
      %s221 = scalar_lea.vmem %s5, %s220
      %p222 = scmp.lt.s32.totalorder %s17, 1
      %s223 = scalar_select %p222, %s17, 1
      %s224 = smul.addr %s223, 8
      %s225 = smul.addr %s224, 8
      %s226 = scalar_lea.vmem %s0, %s225
      %p227 = scmp.lt.s32.totalorder %s17, 1
      %s228 = scalar_select %p227, %s17, 1
      %s229 = smul.addr %s228, 8
      %s230 = smul.addr %s229, 4
      %s231 = scalar_lea.vmem %s4, %s230
      %p232 = scmp.lt.s32.totalorder %s17, 1
      %s233 = scalar_select %p232, %s17, 1
      %s234 = smul.addr %s233, 2
      %s235 = scalar_lea.vmem %s5, %s234
      %v237 = vld [vmem:[%s226] sm:$0xff]
      %v238 = vld [vmem:[%s226 + $0x8] sm:$0xff]
      %v239 = vld [vmem:[%s226 + $0x10] sm:$0xff]
      %v240 = vld [vmem:[%s226 + $0x18] sm:$0xff]
      %v241 = vld [vmem:[%s226 + $0x20] sm:$0xff]
      %v242 = vld [vmem:[%s226 + $0x28] sm:$0xff]
      %v243 = vld [vmem:[%s226 + $0x30] sm:$0xff]
      %v244 = vld [vmem:[%s226 + $0x38] sm:$0xff]
      %vm245 = vcmask 130048
      %246 = vst.msk [vmem:[#allocation2] sm:$0xff] %vm245, 0.0
      %vm247 = vcmask 123904
      %248 = vst.msk [vmem:[#allocation2 + $0x8] sm:$0x3] %vm247, 0.0
      %249 = vst.msk [vmem:[#allocation2 + $0x10] sm:$0xff] %vm245, 0.0
      %250 = vst.msk [vmem:[#allocation2 + $0x18] sm:$0x3] %vm247, 0.0
      %251 = vst.msk [vmem:[#allocation2 + $0x20] sm:$0xff] %vm245, 0.0
      %252 = vst.msk [vmem:[#allocation2 + $0x28] sm:$0x3] %vm247, 0.0
      %253 = vst.msk [vmem:[#allocation2 + $0x30] sm:$0xff] %vm245, 0.0
      %254 = vst.msk [vmem:[#allocation2 + $0x38] sm:$0x3] %vm247, 0.0
      %255 = vst.msk [vmem:[#allocation2 + $0x40] sm:$0xff] %vm245, 0.0
      %256 = vst.msk [vmem:[#allocation2 + $0x48] sm:$0x3] %vm247, 0.0
      %257 = vst.msk [vmem:[#allocation2 + $0x50] sm:$0xff] %vm245, 0.0
      %258 = vst.msk [vmem:[#allocation2 + $0x58] sm:$0x3] %vm247, 0.0
      %259 = vst.msk [vmem:[#allocation2 + $0x60] sm:$0xff] %vm245, 0.0
      %260 = vst.msk [vmem:[#allocation2 + $0x68] sm:$0x3] %vm247, 0.0
      %261 = vst.msk [vmem:[#allocation2 + $0x70] sm:$0xff] %vm245, 0.0
      %262 = vst.msk [vmem:[#allocation2 + $0x78] sm:$0x3] %vm247, 0.0
      %263 = vst.msk [vmem:[#allocation2 + $0x80] sm:$0xff] %vm245, 0.0
      %264 = vst.msk [vmem:[#allocation2 + $0x88] sm:$0x3] %vm247, 0.0
      %265 = vst.msk [vmem:[#allocation2 + $0x90] sm:$0xff] %vm245, 0.0
      %266 = vst.msk [vmem:[#allocation2 + $0x98] sm:$0x3] %vm247, 0.0
      %vm267 = vcmp.ge.f32.partialorder %v237, 0.0
      %vm268 = vcmp.ge.f32.partialorder %v238, 0.0
      %vm269 = vcmp.ge.f32.partialorder %v239, 0.0
      %vm270 = vcmp.ge.f32.partialorder %v240, 0.0
      %vm271 = vcmp.ge.f32.partialorder %v241, 0.0
      %vm272 = vcmp.ge.f32.partialorder %v242, 0.0
      %vm273 = vcmp.ge.f32.partialorder %v243, 0.0
      %vm274 = vcmp.ge.f32.partialorder %v244, 0.0
      %v275 = vmul.f32 %v237, 0.2
      %v276 = vmul.f32 %v238, 0.2
      %v277 = vmul.f32 %v239, 0.2
      %v278 = vmul.f32 %v240, 0.2
      %v279 = vmul.f32 %v241, 0.2
      %v280 = vmul.f32 %v242, 0.2
      %v281 = vmul.f32 %v243, 0.2
      %v282 = vmul.f32 %v244, 0.2
      %v283 = vsel %vm267, %v237, %v275
      %v284 = vsel %vm268, %v238, %v276
      %v285 = vsel %vm269, %v239, %v277
      %v286 = vsel %vm270, %v240, %v278
      %v287 = vsel %vm271, %v241, %v279
      %v288 = vsel %vm272, %v242, %v280
      %v289 = vsel %vm273, %v243, %v281
      %v290 = vsel %vm274, %v244, %v282
      %s291 = scalar_lea.vmem [#allocation2], 16
      %292 = vst.msk [vmem:[%s291 + $0x1] sm:$0xff] %vm245, %v283
      %293 = vst.msk [vmem:[%s291 + $0x11] sm:$0xff] %vm245, %v284
      %294 = vst.msk [vmem:[%s291 + $0x21] sm:$0xff] %vm245, %v285
      %295 = vst.msk [vmem:[%s291 + $0x31] sm:$0xff] %vm245, %v286
      %296 = vst.msk [vmem:[%s291 + $0x41] sm:$0xff] %vm245, %v287
      %297 = vst.msk [vmem:[%s291 + $0x51] sm:$0xff] %vm245, %v288
      %298 = vst.msk [vmem:[%s291 + $0x61] sm:$0xff] %vm245, %v289
      %299 = vst.msk [vmem:[%s291 + $0x71] sm:$0xff] %vm245, %v290
      %v300 = vld [vmem:[#allocation2] sm:$0xff]
      %v301 = vld [vmem:[#allocation2 + $0x10] sm:$0xff]
      %v302 = vld [vmem:[#allocation2 + $0x20] sm:$0xff]
      %v303 = vld [vmem:[#allocation2 + $0x30] sm:$0xff]
      %v304 = vld [vmem:[#allocation2 + $0x40] sm:$0xff]
      %v305 = vld [vmem:[#allocation2 + $0x50] sm:$0xff]
      %v306 = vld [vmem:[#allocation2 + $0x60] sm:$0xff]
      %v307 = vld [vmem:[#allocation2 + $0x70] sm:$0xff]
      %v308 = vpack.c.bf16 %v301, %v300
      %v309 = vpack.c.bf16 %v303, %v302
      %v310 = vpack.c.bf16 %v305, %v304
      %v311 = vpack.c.bf16 %v307, %v306
      %v312 = vld [vmem:[%s1] sm:$0xf]
      %v313 = vld [vmem:[%s1 + $0x4] sm:$0xf]
      %v314 = vld [vmem:[#allocation2 + $0x1] sm:$0xff]
      %v315 = vld [vmem:[#allocation2 + $0x11] sm:$0xff]
      %v316 = vld [vmem:[#allocation2 + $0x21] sm:$0xff]
      %v317 = vld [vmem:[#allocation2 + $0x31] sm:$0xff]
      %v318 = vld [vmem:[#allocation2 + $0x41] sm:$0xff]
      %v319 = vld [vmem:[#allocation2 + $0x51] sm:$0xff]
      %v320 = vld [vmem:[#allocation2 + $0x61] sm:$0xff]
      %v321 = vld [vmem:[#allocation2 + $0x71] sm:$0xff]
      %v322 = vpack.c.bf16 %v315, %v314
      %v323 = vpack.c.bf16 %v317, %v316
      %v324 = vpack.c.bf16 %v319, %v318
      %v325 = vpack.c.bf16 %v321, %v320
      %s326 = scalar_lea.vmem %s1, 8
      %v327 = vld [vmem:[%s326] sm:$0xf]
      %v328 = vld [vmem:[%s326 + $0x4] sm:$0xf]
      %v331 = vunpack.c.l.b16 %v327
      %v332 = vunpack.c.l.b16 %v328
      %v333 = vpack.c.b16 %v332, %v331
      %v336 = vsel %vm245, %v322, 0
      %v339 = vsel %vm245, %v323, 0
      %v342 = vsel %vm245, %v324, 0
      %v345 = vsel %vm245, %v325, 0
      %347 = vmatprep.subr.bf16.mxu0 0
      %348 = vmatpush1.bf16.msra.mxu0 %v333
      %349 = vmatprep.subr.bf16.mxu0 0
      %350 = vmatpush1.bf16.msra.mxu0 0
      %351 = vmatprep.subr.bf16.mxu0 0
      %352 = vmatpush1.bf16.msra.mxu0 0
      %353 = vmatprep.subr.bf16.mxu0 0
      %354 = vmatpush1.bf16.msra.mxu0 0
      %355 = vmatprep.subr.bf16.mxu0 0
      %356 = vmatpush1.bf16.msra.mxu0 0
      %357 = vmatprep.subr.bf16.mxu0 0
      %358 = vmatpush1.bf16.msra.mxu0 0
      %359 = vmatprep.subr.bf16.mxu0 0
      %360 = vmatpush1.bf16.msra.mxu0 0
      %361 = vmatprep.subr.bf16.mxu0 0
      %362 = vmatpush1.bf16.msra.mxu0 0
      %363 = vmatprep.subr.bf16.mxu0 0
      %364 = vmatpush1.bf16.msra.mxu0 0
      %365 = vmatprep.subr.bf16.mxu0 0
      %366 = vmatpush1.bf16.msra.mxu0 0
      %367 = vmatprep.subr.bf16.mxu0 0
      %368 = vmatpush1.bf16.msra.mxu0 0
      %369 = vmatprep.subr.bf16.mxu0 0
      %370 = vmatpush1.bf16.msra.mxu0 0
      %371 = vmatprep.subr.bf16.mxu0 0
      %372 = vmatpush1.bf16.msra.mxu0 0
      %373 = vmatprep.subr.bf16.mxu0 0
      %374 = vmatpush1.bf16.msra.mxu0 0
      %375 = vmatprep.subr.bf16.mxu0 0
      %376 = vmatpush1.bf16.msra.mxu0 0
      %377 = vmatprep.subr.bf16.mxu0 0
      %378 = vmatpush1.bf16.msra.mxu0 0
      %379 = vmatprep.mubr.bf16.mxu0 0
      %380 = vmatmul.mubr.bf16.gmra.mrb[0].mxu0 %v336
      %v381 = vpop.f32.mrb[0].mxu0
      %v382 = vadd.f32 0.0, %v381
      %v383 = vpop.f32.mrb[0].mxu0
      %v384 = vpop.f32.mrb[0].mxu0
      %v385 = vadd.f32 0.0, %v384
      %v386 = vpop.f32.mrb[0].mxu0
      %387 = vmatprep.mubr.bf16.mxu0 0
      %388 = vmatmul.mubr.bf16.gmra.mrb[0].mxu0 %v339
      %v389 = vpop.f32.mrb[0].mxu0
      %v390 = vadd.f32 0.0, %v389
      %v391 = vpop.f32.mrb[0].mxu0
      %v392 = vpop.f32.mrb[0].mxu0
      %v393 = vadd.f32 0.0, %v392
      %v394 = vpop.f32.mrb[0].mxu0
      %395 = vmatprep.mubr.bf16.mxu0 0
      %396 = vmatmul.mubr.bf16.gmra.mrb[0].mxu0 %v342
      %v397 = vpop.f32.mrb[0].mxu0
      %v398 = vadd.f32 0.0, %v397
      %v399 = vpop.f32.mrb[0].mxu0
      %v400 = vpop.f32.mrb[0].mxu0
      %v401 = vadd.f32 0.0, %v400
      %v402 = vpop.f32.mrb[0].mxu0
      %403 = vmatprep.mubr.bf16.mxu0 0
      %404 = vmatmul.mubr.bf16.gmra.mrb[0].mxu0 %v345
      %v405 = vpop.f32.mrb[0].mxu0
      %v406 = vadd.f32 0.0, %v405
      %v407 = vpop.f32.mrb[0].mxu0
      %v408 = vpop.f32.mrb[0].mxu0
      %v409 = vadd.f32 0.0, %v408
      %v410 = vpop.f32.mrb[0].mxu0
      %411 = vdwg.mxu0
      %v414 = vunpack.c.l.b16 %v312
      %v415 = vunpack.c.l.b16 %v313
      %v416 = vpack.c.b16 %v415, %v414
      %v419 = vsel %vm245, %v308, 0
      %v422 = vsel %vm245, %v309, 0
      %v425 = vsel %vm245, %v310, 0
      %v428 = vsel %vm245, %v311, 0
      %430 = vmatprep.subr.bf16.mxu0 0
      %431 = vmatpush1.bf16.msra.mxu0 %v416
      %432 = vmatprep.subr.bf16.mxu0 0
      %433 = vmatpush1.bf16.msra.mxu0 0
      %434 = vmatprep.subr.bf16.mxu0 0
      %435 = vmatpush1.bf16.msra.mxu0 0
      %436 = vmatprep.subr.bf16.mxu0 0
      %437 = vmatpush1.bf16.msra.mxu0 0
      %438 = vmatprep.subr.bf16.mxu0 0
      %439 = vmatpush1.bf16.msra.mxu0 0
      %440 = vmatprep.subr.bf16.mxu0 0
      %441 = vmatpush1.bf16.msra.mxu0 0
      %442 = vmatprep.subr.bf16.mxu0 0
      %443 = vmatpush1.bf16.msra.mxu0 0
      %444 = vmatprep.subr.bf16.mxu0 0
      %445 = vmatpush1.bf16.msra.mxu0 0
      %446 = vmatprep.subr.bf16.mxu0 0
      %447 = vmatpush1.bf16.msra.mxu0 0
      %448 = vmatprep.subr.bf16.mxu0 0
      %449 = vmatpush1.bf16.msra.mxu0 0
      %450 = vmatprep.subr.bf16.mxu0 0
      %451 = vmatpush1.bf16.msra.mxu0 0
      %452 = vmatprep.subr.bf16.mxu0 0
      %453 = vmatpush1.bf16.msra.mxu0 0
      %454 = vmatprep.subr.bf16.mxu0 0
      %455 = vmatpush1.bf16.msra.mxu0 0
      %456 = vmatprep.subr.bf16.mxu0 0
      %457 = vmatpush1.bf16.msra.mxu0 0
      %458 = vmatprep.subr.bf16.mxu0 0
      %459 = vmatpush1.bf16.msra.mxu0 0
      %460 = vmatprep.subr.bf16.mxu0 0
      %461 = vmatpush1.bf16.msra.mxu0 0
      %462 = vmatprep.mubr.bf16.mxu0 0
      %463 = vmatmul.mubr.bf16.gmra.mrb[0].mxu0 %v419
      %v464 = vpop.f32.mrb[0].mxu0
      %v465 = vadd.f32 %v382, %v464
      %v466 = vpop.f32.mrb[0].mxu0
      %v467 = vpop.f32.mrb[0].mxu0
      %v468 = vadd.f32 %v385, %v467
      %v469 = vpop.f32.mrb[0].mxu0
      %470 = vmatprep.mubr.bf16.mxu0 0
      %471 = vmatmul.mubr.bf16.gmra.mrb[0].mxu0 %v422
      %v472 = vpop.f32.mrb[0].mxu0
      %v473 = vadd.f32 %v390, %v472
      %v474 = vpop.f32.mrb[0].mxu0
      %v475 = vpop.f32.mrb[0].mxu0
      %v476 = vadd.f32 %v393, %v475
      %v477 = vpop.f32.mrb[0].mxu0
      %478 = vmatprep.mubr.bf16.mxu0 0
      %479 = vmatmul.mubr.bf16.gmra.mrb[0].mxu0 %v425
      %v480 = vpop.f32.mrb[0].mxu0
      %v481 = vadd.f32 %v398, %v480
      %v482 = vpop.f32.mrb[0].mxu0
      %v483 = vpop.f32.mrb[0].mxu0
      %v484 = vadd.f32 %v401, %v483
      %v485 = vpop.f32.mrb[0].mxu0
      %486 = vmatprep.mubr.bf16.mxu0 0
      %487 = vmatmul.mubr.bf16.gmra.mrb[0].mxu0 %v428
      %v488 = vpop.f32.mrb[0].mxu0
      %v489 = vadd.f32 %v406, %v488
      %v490 = vpop.f32.mrb[0].mxu0
      %v491 = vpop.f32.mrb[0].mxu0
      %v492 = vadd.f32 %v409, %v491
      %v493 = vpop.f32.mrb[0].mxu0
      %494 = vdwg.mxu0
      %v495 = vld [vmem:[#allocation2 + $0x2] sm:$0xff]
      %v496 = vld [vmem:[#allocation2 + $0x12] sm:$0xff]
      %v497 = vld [vmem:[#allocation2 + $0x22] sm:$0xff]
      %v498 = vld [vmem:[#allocation2 + $0x32] sm:$0xff]
      %v499 = vld [vmem:[#allocation2 + $0x42] sm:$0xff]
      %v500 = vld [vmem:[#allocation2 + $0x52] sm:$0xff]
      %v501 = vld [vmem:[#allocation2 + $0x62] sm:$0xff]
      %v502 = vld [vmem:[#allocation2 + $0x72] sm:$0xff]
      %v503 = vpack.c.bf16 %v496, %v495
      %v504 = vpack.c.bf16 %v498, %v497
      %v505 = vpack.c.bf16 %v500, %v499
      %v506 = vpack.c.bf16 %v502, %v501
      %s507 = scalar_lea.vmem %s1, 16
      %v508 = vld [vmem:[%s507] sm:$0xf]
      %v509 = vld [vmem:[%s507 + $0x4] sm:$0xf]
      %v512 = vunpack.c.l.b16 %v508
      %v513 = vunpack.c.l.b16 %v509
      %v514 = vpack.c.b16 %v513, %v512
      %v517 = vsel %vm245, %v503, 0
      %v520 = vsel %vm245, %v504, 0
      %v523 = vsel %vm245, %v505, 0
      %v526 = vsel %vm245, %v506, 0
      %528 = vmatprep.subr.bf16.mxu0 0
      %529 = vmatpush1.bf16.msra.mxu0 %v514
      %530 = vmatprep.subr.bf16.mxu0 0
      %531 = vmatpush1.bf16.msra.mxu0 0
      %532 = vmatprep.subr.bf16.mxu0 0
      %533 = vmatpush1.bf16.msra.mxu0 0
      %534 = vmatprep.subr.bf16.mxu0 0
      %535 = vmatpush1.bf16.msra.mxu0 0
      %536 = vmatprep.subr.bf16.mxu0 0
      %537 = vmatpush1.bf16.msra.mxu0 0
      %538 = vmatprep.subr.bf16.mxu0 0
      %539 = vmatpush1.bf16.msra.mxu0 0
      %540 = vmatprep.subr.bf16.mxu0 0
      %541 = vmatpush1.bf16.msra.mxu0 0
      %542 = vmatprep.subr.bf16.mxu0 0
      %543 = vmatpush1.bf16.msra.mxu0 0
      %544 = vmatprep.subr.bf16.mxu0 0
      %545 = vmatpush1.bf16.msra.mxu0 0
      %546 = vmatprep.subr.bf16.mxu0 0
      %547 = vmatpush1.bf16.msra.mxu0 0
      %548 = vmatprep.subr.bf16.mxu0 0
      %549 = vmatpush1.bf16.msra.mxu0 0
      %550 = vmatprep.subr.bf16.mxu0 0
      %551 = vmatpush1.bf16.msra.mxu0 0
      %552 = vmatprep.subr.bf16.mxu0 0
      %553 = vmatpush1.bf16.msra.mxu0 0
      %554 = vmatprep.subr.bf16.mxu0 0
      %555 = vmatpush1.bf16.msra.mxu0 0
      %556 = vmatprep.subr.bf16.mxu0 0
      %557 = vmatpush1.bf16.msra.mxu0 0
      %558 = vmatprep.subr.bf16.mxu0 0
      %559 = vmatpush1.bf16.msra.mxu0 0
      %560 = vmatprep.mubr.bf16.mxu0 0
      %561 = vmatmul.mubr.bf16.gmra.mrb[0].mxu0 %v517
      %v562 = vpop.f32.mrb[0].mxu0
      %v563 = vadd.f32 0.0, %v562
      %v564 = vpop.f32.mrb[0].mxu0
      %v565 = vpop.f32.mrb[0].mxu0
      %v566 = vadd.f32 0.0, %v565
      %v567 = vpop.f32.mrb[0].mxu0
      %568 = vmatprep.mubr.bf16.mxu0 0
      %569 = vmatmul.mubr.bf16.gmra.mrb[0].mxu0 %v520
      %v570 = vpop.f32.mrb[0].mxu0
      %v571 = vadd.f32 0.0, %v570
      %v572 = vpop.f32.mrb[0].mxu0
      %v573 = vpop.f32.mrb[0].mxu0
      %v574 = vadd.f32 0.0, %v573
      %v575 = vpop.f32.mrb[0].mxu0
      %576 = vmatprep.mubr.bf16.mxu0 0
      %577 = vmatmul.mubr.bf16.gmra.mrb[0].mxu0 %v523
      %v578 = vpop.f32.mrb[0].mxu0
      %v579 = vadd.f32 0.0, %v578
      %v580 = vpop.f32.mrb[0].mxu0
      %v581 = vpop.f32.mrb[0].mxu0
      %v582 = vadd.f32 0.0, %v581
      %v583 = vpop.f32.mrb[0].mxu0
      %584 = vmatprep.mubr.bf16.mxu0 0
      %585 = vmatmul.mubr.bf16.gmra.mrb[0].mxu0 %v526
      %v586 = vpop.f32.mrb[0].mxu0
      %v587 = vadd.f32 0.0, %v586
      %v588 = vpop.f32.mrb[0].mxu0
      %v589 = vpop.f32.mrb[0].mxu0
      %v590 = vadd.f32 0.0, %v589
      %v591 = vpop.f32.mrb[0].mxu0
      %592 = vdwg.mxu0
      %v593 = vadd.f32 %v465, %v563
      %v594 = vadd.f32 %v468, %v566
      %v595 = vadd.f32 %v473, %v571
      %v596 = vadd.f32 %v476, %v574
      %v597 = vadd.f32 %v481, %v579
      %v598 = vadd.f32 %v484, %v582
      %v599 = vadd.f32 %v489, %v587
      %v600 = vadd.f32 %v492, %v590
      %v601 = vld [vmem:[%s291] sm:$0xff]
      %v602 = vld [vmem:[%s291 + $0x10] sm:$0xff]
      %v603 = vld [vmem:[%s291 + $0x20] sm:$0xff]
      %v604 = vld [vmem:[%s291 + $0x30] sm:$0xff]
      %v605 = vld [vmem:[%s291 + $0x40] sm:$0xff]
      %v606 = vld [vmem:[%s291 + $0x50] sm:$0xff]
      %v607 = vld [vmem:[%s291 + $0x60] sm:$0xff]
      %v608 = vld [vmem:[%s291 + $0x70] sm:$0xff]
      %v609 = vpack.c.bf16 %v602, %v601
      %v610 = vpack.c.bf16 %v604, %v603
      %v611 = vpack.c.bf16 %v606, %v605
      %v612 = vpack.c.bf16 %v608, %v607
      %s613 = scalar_lea.vmem %s1, 24
      %v614 = vld [vmem:[%s613] sm:$0xf]
      %v615 = vld [vmem:[%s613 + $0x4] sm:$0xf]
      %v618 = vunpack.c.l.b16 %v614
      %v619 = vunpack.c.l.b16 %v615
      %v620 = vpack.c.b16 %v619, %v618
      %v623 = vsel %vm245, %v609, 0
      %v626 = vsel %vm245, %v610, 0
      %v629 = vsel %vm245, %v611, 0
      %v632 = vsel %vm245, %v612, 0
      %634 = vmatprep.subr.bf16.mxu0 0
      %635 = vmatpush1.bf16.msra.mxu0 %v620
      %636 = vmatprep.subr.bf16.mxu0 0
      %637 = vmatpush1.bf16.msra.mxu0 0
      %638 = vmatprep.subr.bf16.mxu0 0
      %639 = vmatpush1.bf16.msra.mxu0 0
      %640 = vmatprep.subr.bf16.mxu0 0
      %641 = vmatpush1.bf16.msra.mxu0 0
      %642 = vmatprep.subr.bf16.mxu0 0
      %643 = vmatpush1.bf16.msra.mxu0 0
      %644 = vmatprep.subr.bf16.mxu0 0
      %645 = vmatpush1.bf16.msra.mxu0 0
      %646 = vmatprep.subr.bf16.mxu0 0
      %647 = vmatpush1.bf16.msra.mxu0 0
      %648 = vmatprep.subr.bf16.mxu0 0
      %649 = vmatpush1.bf16.msra.mxu0 0
      %650 = vmatprep.subr.bf16.mxu0 0
      %651 = vmatpush1.bf16.msra.mxu0 0
      %652 = vmatprep.subr.bf16.mxu0 0
      %653 = vmatpush1.bf16.msra.mxu0 0
      %654 = vmatprep.subr.bf16.mxu0 0
      %655 = vmatpush1.bf16.msra.mxu0 0
      %656 = vmatprep.subr.bf16.mxu0 0
      %657 = vmatpush1.bf16.msra.mxu0 0
      %658 = vmatprep.subr.bf16.mxu0 0
      %659 = vmatpush1.bf16.msra.mxu0 0
      %660 = vmatprep.subr.bf16.mxu0 0
      %661 = vmatpush1.bf16.msra.mxu0 0
      %662 = vmatprep.subr.bf16.mxu0 0
      %663 = vmatpush1.bf16.msra.mxu0 0
      %664 = vmatprep.subr.bf16.mxu0 0
      %665 = vmatpush1.bf16.msra.mxu0 0
      %666 = vmatprep.mubr.bf16.mxu0 0
      %667 = vmatmul.mubr.bf16.gmra.mrb[0].mxu0 %v623
      %v668 = vpop.f32.mrb[0].mxu0
      %v669 = vadd.f32 0.0, %v668
      %v670 = vpop.f32.mrb[0].mxu0
      %v671 = vpop.f32.mrb[0].mxu0
      %v672 = vadd.f32 0.0, %v671
      %v673 = vpop.f32.mrb[0].mxu0
      %674 = vmatprep.mubr.bf16.mxu0 0
      %675 = vmatmul.mubr.bf16.gmra.mrb[0].mxu0 %v626
      %v676 = vpop.f32.mrb[0].mxu0
      %v677 = vadd.f32 0.0, %v676
      %v678 = vpop.f32.mrb[0].mxu0
      %v679 = vpop.f32.mrb[0].mxu0
      %v680 = vadd.f32 0.0, %v679
      %v681 = vpop.f32.mrb[0].mxu0
      %682 = vmatprep.mubr.bf16.mxu0 0
      %683 = vmatmul.mubr.bf16.gmra.mrb[0].mxu0 %v629
      %v684 = vpop.f32.mrb[0].mxu0
      %v685 = vadd.f32 0.0, %v684
      %v686 = vpop.f32.mrb[0].mxu0
      %v687 = vpop.f32.mrb[0].mxu0
      %v688 = vadd.f32 0.0, %v687
      %v689 = vpop.f32.mrb[0].mxu0
      %690 = vmatprep.mubr.bf16.mxu0 0
      %691 = vmatmul.mubr.bf16.gmra.mrb[0].mxu0 %v632
      %v692 = vpop.f32.mrb[0].mxu0
      %v693 = vadd.f32 0.0, %v692
      %v694 = vpop.f32.mrb[0].mxu0
      %v695 = vpop.f32.mrb[0].mxu0
      %v696 = vadd.f32 0.0, %v695
      %v697 = vpop.f32.mrb[0].mxu0
      %698 = vdwg.mxu0
      %v699 = vadd.f32 %v593, %v669
      %v700 = vadd.f32 %v594, %v672
      %v701 = vadd.f32 %v595, %v677
      %v702 = vadd.f32 %v596, %v680
      %v703 = vadd.f32 %v597, %v685
      %v704 = vadd.f32 %v598, %v688
      %v705 = vadd.f32 %v599, %v693
      %v706 = vadd.f32 %v600, %v696
      %v707 = vld [vmem:[%s291 + $0x1] sm:$0xff]
      %v708 = vld [vmem:[%s291 + $0x11] sm:$0xff]
      %v709 = vld [vmem:[%s291 + $0x21] sm:$0xff]
      %v710 = vld [vmem:[%s291 + $0x31] sm:$0xff]
      %v711 = vld [vmem:[%s291 + $0x41] sm:$0xff]
      %v712 = vld [vmem:[%s291 + $0x51] sm:$0xff]
      %v713 = vld [vmem:[%s291 + $0x61] sm:$0xff]
      %v714 = vld [vmem:[%s291 + $0x71] sm:$0xff]
      %v715 = vpack.c.bf16 %v708, %v707
      %v716 = vpack.c.bf16 %v710, %v709
      %v717 = vpack.c.bf16 %v712, %v711
      %v718 = vpack.c.bf16 %v714, %v713
      %s719 = scalar_lea.vmem %s1, 32
      %v720 = vld [vmem:[%s719] sm:$0xf]
      %v721 = vld [vmem:[%s719 + $0x4] sm:$0xf]
      %v724 = vunpack.c.l.b16 %v720
      %v725 = vunpack.c.l.b16 %v721
      %v726 = vpack.c.b16 %v725, %v724
      %v729 = vsel %vm245, %v715, 0
      %v732 = vsel %vm245, %v716, 0
      %v735 = vsel %vm245, %v717, 0
      %v738 = vsel %vm245, %v718, 0
      %740 = vmatprep.subr.bf16.mxu0 0
      %741 = vmatpush1.bf16.msra.mxu0 %v726
      %742 = vmatprep.subr.bf16.mxu0 0
      %743 = vmatpush1.bf16.msra.mxu0 0
      %744 = vmatprep.subr.bf16.mxu0 0
      %745 = vmatpush1.bf16.msra.mxu0 0
      %746 = vmatprep.subr.bf16.mxu0 0
      %747 = vmatpush1.bf16.msra.mxu0 0
      %748 = vmatprep.subr.bf16.mxu0 0
      %749 = vmatpush1.bf16.msra.mxu0 0
      %750 = vmatprep.subr.bf16.mxu0 0
      %751 = vmatpush1.bf16.msra.mxu0 0
      %752 = vmatprep.subr.bf16.mxu0 0
      %753 = vmatpush1.bf16.msra.mxu0 0
      %754 = vmatprep.subr.bf16.mxu0 0
      %755 = vmatpush1.bf16.msra.mxu0 0
      %756 = vmatprep.subr.bf16.mxu0 0
      %757 = vmatpush1.bf16.msra.mxu0 0
      %758 = vmatprep.subr.bf16.mxu0 0
      %759 = vmatpush1.bf16.msra.mxu0 0
      %760 = vmatprep.subr.bf16.mxu0 0
      %761 = vmatpush1.bf16.msra.mxu0 0
      %762 = vmatprep.subr.bf16.mxu0 0
      %763 = vmatpush1.bf16.msra.mxu0 0
      %764 = vmatprep.subr.bf16.mxu0 0
      %765 = vmatpush1.bf16.msra.mxu0 0
      %766 = vmatprep.subr.bf16.mxu0 0
      %767 = vmatpush1.bf16.msra.mxu0 0
      %768 = vmatprep.subr.bf16.mxu0 0
      %769 = vmatpush1.bf16.msra.mxu0 0
      %770 = vmatprep.subr.bf16.mxu0 0
      %771 = vmatpush1.bf16.msra.mxu0 0
      %772 = vmatprep.mubr.bf16.mxu0 0
      %773 = vmatmul.mubr.bf16.gmra.mrb[0].mxu0 %v729
      %v774 = vpop.f32.mrb[0].mxu0
      %v775 = vadd.f32 0.0, %v774
      %v776 = vpop.f32.mrb[0].mxu0
      %v777 = vpop.f32.mrb[0].mxu0
      %v778 = vadd.f32 0.0, %v777
      %v779 = vpop.f32.mrb[0].mxu0
      %780 = vmatprep.mubr.bf16.mxu0 0
      %781 = vmatmul.mubr.bf16.gmra.mrb[0].mxu0 %v732
      %v782 = vpop.f32.mrb[0].mxu0
      %v783 = vadd.f32 0.0, %v782
      %v784 = vpop.f32.mrb[0].mxu0
      %v785 = vpop.f32.mrb[0].mxu0
      %v786 = vadd.f32 0.0, %v785
      %v787 = vpop.f32.mrb[0].mxu0
      %788 = vmatprep.mubr.bf16.mxu0 0
      %789 = vmatmul.mubr.bf16.gmra.mrb[0].mxu0 %v735
      %v790 = vpop.f32.mrb[0].mxu0
      %v791 = vadd.f32 0.0, %v790
      %v792 = vpop.f32.mrb[0].mxu0
      %v793 = vpop.f32.mrb[0].mxu0
      %v794 = vadd.f32 0.0, %v793
      %v795 = vpop.f32.mrb[0].mxu0
      %796 = vmatprep.mubr.bf16.mxu0 0
      %797 = vmatmul.mubr.bf16.gmra.mrb[0].mxu0 %v738
      %v798 = vpop.f32.mrb[0].mxu0
      %v799 = vadd.f32 0.0, %v798
      %v800 = vpop.f32.mrb[0].mxu0
      %v801 = vpop.f32.mrb[0].mxu0
      %v802 = vadd.f32 0.0, %v801
      %v803 = vpop.f32.mrb[0].mxu0
      %804 = vdwg.mxu0
      %v805 = vadd.f32 %v699, %v775
      %v806 = vadd.f32 %v700, %v778
      %v807 = vadd.f32 %v701, %v783
      %v808 = vadd.f32 %v702, %v786
      %v809 = vadd.f32 %v703, %v791
      %v810 = vadd.f32 %v704, %v794
      %v811 = vadd.f32 %v705, %v799
      %v812 = vadd.f32 %v706, %v802
      %v813 = vld [vmem:[%s291 + $0x2] sm:$0xff]
      %v814 = vld [vmem:[%s291 + $0x12] sm:$0xff]
      %v815 = vld [vmem:[%s291 + $0x22] sm:$0xff]
      %v816 = vld [vmem:[%s291 + $0x32] sm:$0xff]
      %v817 = vld [vmem:[%s291 + $0x42] sm:$0xff]
      %v818 = vld [vmem:[%s291 + $0x52] sm:$0xff]
      %v819 = vld [vmem:[%s291 + $0x62] sm:$0xff]
      %v820 = vld [vmem:[%s291 + $0x72] sm:$0xff]
      %v821 = vpack.c.bf16 %v814, %v813
      %v822 = vpack.c.bf16 %v816, %v815
      %v823 = vpack.c.bf16 %v818, %v817
      %v824 = vpack.c.bf16 %v820, %v819
      %s825 = scalar_lea.vmem %s1, 40
      %v826 = vld [vmem:[%s825] sm:$0xf]
      %v827 = vld [vmem:[%s825 + $0x4] sm:$0xf]
      %v830 = vunpack.c.l.b16 %v826
      %v831 = vunpack.c.l.b16 %v827
      %v832 = vpack.c.b16 %v831, %v830
      %v835 = vsel %vm245, %v821, 0
      %v838 = vsel %vm245, %v822, 0
      %v841 = vsel %vm245, %v823, 0
      %v844 = vsel %vm245, %v824, 0
      %846 = vmatprep.subr.bf16.mxu0 0
      %847 = vmatpush1.bf16.msra.mxu0 %v832
      %848 = vmatprep.subr.bf16.mxu0 0
      %849 = vmatpush1.bf16.msra.mxu0 0
      %850 = vmatprep.subr.bf16.mxu0 0
      %851 = vmatpush1.bf16.msra.mxu0 0
      %852 = vmatprep.subr.bf16.mxu0 0
      %853 = vmatpush1.bf16.msra.mxu0 0
      %854 = vmatprep.subr.bf16.mxu0 0
      %855 = vmatpush1.bf16.msra.mxu0 0
      %856 = vmatprep.subr.bf16.mxu0 0
      %857 = vmatpush1.bf16.msra.mxu0 0
      %858 = vmatprep.subr.bf16.mxu0 0
      %859 = vmatpush1.bf16.msra.mxu0 0
      %860 = vmatprep.subr.bf16.mxu0 0
      %861 = vmatpush1.bf16.msra.mxu0 0
      %862 = vmatprep.subr.bf16.mxu0 0
      %863 = vmatpush1.bf16.msra.mxu0 0
      %864 = vmatprep.subr.bf16.mxu0 0
      %865 = vmatpush1.bf16.msra.mxu0 0
      %866 = vmatprep.subr.bf16.mxu0 0
      %867 = vmatpush1.bf16.msra.mxu0 0
      %868 = vmatprep.subr.bf16.mxu0 0
      %869 = vmatpush1.bf16.msra.mxu0 0
      %870 = vmatprep.subr.bf16.mxu0 0
      %871 = vmatpush1.bf16.msra.mxu0 0
      %872 = vmatprep.subr.bf16.mxu0 0
      %873 = vmatpush1.bf16.msra.mxu0 0
      %874 = vmatprep.subr.bf16.mxu0 0
      %875 = vmatpush1.bf16.msra.mxu0 0
      %876 = vmatprep.subr.bf16.mxu0 0
      %877 = vmatpush1.bf16.msra.mxu0 0
      %878 = vmatprep.mubr.bf16.mxu0 0
      %879 = vmatmul.mubr.bf16.gmra.mrb[0].mxu0 %v835
      %v880 = vpop.f32.mrb[0].mxu0
      %v881 = vadd.f32 0.0, %v880
      %v882 = vpop.f32.mrb[0].mxu0
      %v883 = vpop.f32.mrb[0].mxu0
      %v884 = vadd.f32 0.0, %v883
      %v885 = vpop.f32.mrb[0].mxu0
      %886 = vmatprep.mubr.bf16.mxu0 0
      %887 = vmatmul.mubr.bf16.gmra.mrb[0].mxu0 %v838
      %v888 = vpop.f32.mrb[0].mxu0
      %v889 = vadd.f32 0.0, %v888
      %v890 = vpop.f32.mrb[0].mxu0
      %v891 = vpop.f32.mrb[0].mxu0
      %v892 = vadd.f32 0.0, %v891
      %v893 = vpop.f32.mrb[0].mxu0
      %894 = vmatprep.mubr.bf16.mxu0 0
      %895 = vmatmul.mubr.bf16.gmra.mrb[0].mxu0 %v841
      %v896 = vpop.f32.mrb[0].mxu0
      %v897 = vadd.f32 0.0, %v896
      %v898 = vpop.f32.mrb[0].mxu0
      %v899 = vpop.f32.mrb[0].mxu0
      %v900 = vadd.f32 0.0, %v899
      %v901 = vpop.f32.mrb[0].mxu0
      %902 = vmatprep.mubr.bf16.mxu0 0
      %903 = vmatmul.mubr.bf16.gmra.mrb[0].mxu0 %v844
      %v904 = vpop.f32.mrb[0].mxu0
      %v905 = vadd.f32 0.0, %v904
      %v906 = vpop.f32.mrb[0].mxu0
      %v907 = vpop.f32.mrb[0].mxu0
      %v908 = vadd.f32 0.0, %v907
      %v909 = vpop.f32.mrb[0].mxu0
      %910 = vdwg.mxu0
      %v911 = vadd.f32 %v805, %v881
      %v912 = vadd.f32 %v806, %v884
      %v913 = vadd.f32 %v807, %v889
      %v914 = vadd.f32 %v808, %v892
      %v915 = vadd.f32 %v809, %v897
      %v916 = vadd.f32 %v810, %v900
      %v917 = vadd.f32 %v811, %v905
      %v918 = vadd.f32 %v812, %v908
      %s919 = scalar_lea.vmem [#allocation2], 32
      %v920 = vld [vmem:[%s919] sm:$0xff]
      %v921 = vld [vmem:[%s919 + $0x10] sm:$0xff]
      %v922 = vld [vmem:[%s919 + $0x20] sm:$0xff]
      %v923 = vld [vmem:[%s919 + $0x30] sm:$0xff]
      %v924 = vld [vmem:[%s919 + $0x40] sm:$0xff]
      %v925 = vld [vmem:[%s919 + $0x50] sm:$0xff]
      %v926 = vld [vmem:[%s919 + $0x60] sm:$0xff]
      %v927 = vld [vmem:[%s919 + $0x70] sm:$0xff]
      %v928 = vpack.c.bf16 %v921, %v920
      %v929 = vpack.c.bf16 %v923, %v922
      %v930 = vpack.c.bf16 %v925, %v924
      %v931 = vpack.c.bf16 %v927, %v926
      %s932 = scalar_lea.vmem %s1, 48
      %v933 = vld [vmem:[%s932] sm:$0xf]
      %v934 = vld [vmem:[%s932 + $0x4] sm:$0xf]
      %v937 = vunpack.c.l.b16 %v933
      %v938 = vunpack.c.l.b16 %v934
      %v939 = vpack.c.b16 %v938, %v937
      %v942 = vsel %vm245, %v928, 0
      %v945 = vsel %vm245, %v929, 0
      %v948 = vsel %vm245, %v930, 0
      %v951 = vsel %vm245, %v931, 0
      %953 = vmatprep.subr.bf16.mxu0 0
      %954 = vmatpush1.bf16.msra.mxu0 %v939
      %955 = vmatprep.subr.bf16.mxu0 0
      %956 = vmatpush1.bf16.msra.mxu0 0
      %957 = vmatprep.subr.bf16.mxu0 0
      %958 = vmatpush1.bf16.msra.mxu0 0
      %959 = vmatprep.subr.bf16.mxu0 0
      %960 = vmatpush1.bf16.msra.mxu0 0
      %961 = vmatprep.subr.bf16.mxu0 0
      %962 = vmatpush1.bf16.msra.mxu0 0
      %963 = vmatprep.subr.bf16.mxu0 0
      %964 = vmatpush1.bf16.msra.mxu0 0
      %965 = vmatprep.subr.bf16.mxu0 0
      %966 = vmatpush1.bf16.msra.mxu0 0
      %967 = vmatprep.subr.bf16.mxu0 0
      %968 = vmatpush1.bf16.msra.mxu0 0
      %969 = vmatprep.subr.bf16.mxu0 0
      %970 = vmatpush1.bf16.msra.mxu0 0
      %971 = vmatprep.subr.bf16.mxu0 0
      %972 = vmatpush1.bf16.msra.mxu0 0
      %973 = vmatprep.subr.bf16.mxu0 0
      %974 = vmatpush1.bf16.msra.mxu0 0
      %975 = vmatprep.subr.bf16.mxu0 0
      %976 = vmatpush1.bf16.msra.mxu0 0
      %977 = vmatprep.subr.bf16.mxu0 0
      %978 = vmatpush1.bf16.msra.mxu0 0
      %979 = vmatprep.subr.bf16.mxu0 0
      %980 = vmatpush1.bf16.msra.mxu0 0
      %981 = vmatprep.subr.bf16.mxu0 0
      %982 = vmatpush1.bf16.msra.mxu0 0
      %983 = vmatprep.subr.bf16.mxu0 0
      %984 = vmatpush1.bf16.msra.mxu0 0
      %985 = vmatprep.mubr.bf16.mxu0 0
      %986 = vmatmul.mubr.bf16.gmra.mrb[0].mxu0 %v942
      %v987 = vpop.f32.mrb[0].mxu0
      %v988 = vadd.f32 0.0, %v987
      %v989 = vpop.f32.mrb[0].mxu0
      %v990 = vpop.f32.mrb[0].mxu0
      %v991 = vadd.f32 0.0, %v990
      %v992 = vpop.f32.mrb[0].mxu0
      %993 = vmatprep.mubr.bf16.mxu0 0
      %994 = vmatmul.mubr.bf16.gmra.mrb[0].mxu0 %v945
      %v995 = vpop.f32.mrb[0].mxu0
      %v996 = vadd.f32 0.0, %v995
      %v997 = vpop.f32.mrb[0].mxu0
      %v998 = vpop.f32.mrb[0].mxu0
      %v999 = vadd.f32 0.0, %v998
      %v1000 = vpop.f32.mrb[0].mxu0
      %1001 = vmatprep.mubr.bf16.mxu0 0
      %1002 = vmatmul.mubr.bf16.gmra.mrb[0].mxu0 %v948
      %v1003 = vpop.f32.mrb[0].mxu0
      %v1004 = vadd.f32 0.0, %v1003
      %v1005 = vpop.f32.mrb[0].mxu0
      %v1006 = vpop.f32.mrb[0].mxu0
      %v1007 = vadd.f32 0.0, %v1006
      %v1008 = vpop.f32.mrb[0].mxu0
      %1009 = vmatprep.mubr.bf16.mxu0 0
      %1010 = vmatmul.mubr.bf16.gmra.mrb[0].mxu0 %v951
      %v1011 = vpop.f32.mrb[0].mxu0
      %v1012 = vadd.f32 0.0, %v1011
      %v1013 = vpop.f32.mrb[0].mxu0
      %v1014 = vpop.f32.mrb[0].mxu0
      %v1015 = vadd.f32 0.0, %v1014
      %v1016 = vpop.f32.mrb[0].mxu0
      %1017 = vdwg.mxu0
      %v1018 = vadd.f32 %v911, %v988
      %v1019 = vadd.f32 %v912, %v991
      %v1020 = vadd.f32 %v913, %v996
      %v1021 = vadd.f32 %v914, %v999
      %v1022 = vadd.f32 %v915, %v1004
      %v1023 = vadd.f32 %v916, %v1007
      %v1024 = vadd.f32 %v917, %v1012
      %v1025 = vadd.f32 %v918, %v1015
      %v1026 = vld [vmem:[%s919 + $0x1] sm:$0xff]
      %v1027 = vld [vmem:[%s919 + $0x11] sm:$0xff]
      %v1028 = vld [vmem:[%s919 + $0x21] sm:$0xff]
      %v1029 = vld [vmem:[%s919 + $0x31] sm:$0xff]
      %v1030 = vld [vmem:[%s919 + $0x41] sm:$0xff]
      %v1031 = vld [vmem:[%s919 + $0x51] sm:$0xff]
      %v1032 = vld [vmem:[%s919 + $0x61] sm:$0xff]
      %v1033 = vld [vmem:[%s919 + $0x71] sm:$0xff]
      %v1034 = vpack.c.bf16 %v1027, %v1026
      %v1035 = vpack.c.bf16 %v1029, %v1028
      %v1036 = vpack.c.bf16 %v1031, %v1030
      %v1037 = vpack.c.bf16 %v1033, %v1032
      %s1038 = scalar_lea.vmem %s1, 56
      %v1039 = vld [vmem:[%s1038] sm:$0xf]
      %v1040 = vld [vmem:[%s1038 + $0x4] sm:$0xf]
      %v1043 = vunpack.c.l.b16 %v1039
      %v1044 = vunpack.c.l.b16 %v1040
      %v1045 = vpack.c.b16 %v1044, %v1043
      %v1048 = vsel %vm245, %v1034, 0
      %v1051 = vsel %vm245, %v1035, 0
      %v1054 = vsel %vm245, %v1036, 0
      %v1057 = vsel %vm245, %v1037, 0
      %1059 = vmatprep.subr.bf16.mxu0 0
      %1060 = vmatpush1.bf16.msra.mxu0 %v1045
      %1061 = vmatprep.subr.bf16.mxu0 0
      %1062 = vmatpush1.bf16.msra.mxu0 0
      %1063 = vmatprep.subr.bf16.mxu0 0
      %1064 = vmatpush1.bf16.msra.mxu0 0
      %1065 = vmatprep.subr.bf16.mxu0 0
      %1066 = vmatpush1.bf16.msra.mxu0 0
      %1067 = vmatprep.subr.bf16.mxu0 0
      %1068 = vmatpush1.bf16.msra.mxu0 0
      %1069 = vmatprep.subr.bf16.mxu0 0
      %1070 = vmatpush1.bf16.msra.mxu0 0
      %1071 = vmatprep.subr.bf16.mxu0 0
      %1072 = vmatpush1.bf16.msra.mxu0 0
      %1073 = vmatprep.subr.bf16.mxu0 0
      %1074 = vmatpush1.bf16.msra.mxu0 0
      %1075 = vmatprep.subr.bf16.mxu0 0
      %1076 = vmatpush1.bf16.msra.mxu0 0
      %1077 = vmatprep.subr.bf16.mxu0 0
      %1078 = vmatpush1.bf16.msra.mxu0 0
      %1079 = vmatprep.subr.bf16.mxu0 0
      %1080 = vmatpush1.bf16.msra.mxu0 0
      %1081 = vmatprep.subr.bf16.mxu0 0
      %1082 = vmatpush1.bf16.msra.mxu0 0
      %1083 = vmatprep.subr.bf16.mxu0 0
      %1084 = vmatpush1.bf16.msra.mxu0 0
      %1085 = vmatprep.subr.bf16.mxu0 0
      %1086 = vmatpush1.bf16.msra.mxu0 0
      %1087 = vmatprep.subr.bf16.mxu0 0
      %1088 = vmatpush1.bf16.msra.mxu0 0
      %1089 = vmatprep.subr.bf16.mxu0 0
      %1090 = vmatpush1.bf16.msra.mxu0 0
      %1091 = vmatprep.mubr.bf16.mxu0 0
      %1092 = vmatmul.mubr.bf16.gmra.mrb[0].mxu0 %v1048
      %v1093 = vpop.f32.mrb[0].mxu0
      %v1094 = vadd.f32 0.0, %v1093
      %v1095 = vpop.f32.mrb[0].mxu0
      %v1096 = vpop.f32.mrb[0].mxu0
      %v1097 = vadd.f32 0.0, %v1096
      %v1098 = vpop.f32.mrb[0].mxu0
      %1099 = vmatprep.mubr.bf16.mxu0 0
      %1100 = vmatmul.mubr.bf16.gmra.mrb[0].mxu0 %v1051
      %v1101 = vpop.f32.mrb[0].mxu0
      %v1102 = vadd.f32 0.0, %v1101
      %v1103 = vpop.f32.mrb[0].mxu0
      %v1104 = vpop.f32.mrb[0].mxu0
      %v1105 = vadd.f32 0.0, %v1104
      %v1106 = vpop.f32.mrb[0].mxu0
      %1107 = vmatprep.mubr.bf16.mxu0 0
      %1108 = vmatmul.mubr.bf16.gmra.mrb[0].mxu0 %v1054
      %v1109 = vpop.f32.mrb[0].mxu0
      %v1110 = vadd.f32 0.0, %v1109
      %v1111 = vpop.f32.mrb[0].mxu0
      %v1112 = vpop.f32.mrb[0].mxu0
      %v1113 = vadd.f32 0.0, %v1112
      %v1114 = vpop.f32.mrb[0].mxu0
      %1115 = vmatprep.mubr.bf16.mxu0 0
      %1116 = vmatmul.mubr.bf16.gmra.mrb[0].mxu0 %v1057
      %v1117 = vpop.f32.mrb[0].mxu0
      %v1118 = vadd.f32 0.0, %v1117
      %v1119 = vpop.f32.mrb[0].mxu0
      %v1120 = vpop.f32.mrb[0].mxu0
      %v1121 = vadd.f32 0.0, %v1120
      %v1122 = vpop.f32.mrb[0].mxu0
      %1123 = vdwg.mxu0
      %v1124 = vadd.f32 %v1018, %v1094
      %v1125 = vadd.f32 %v1019, %v1097
      %v1126 = vadd.f32 %v1020, %v1102
      %v1127 = vadd.f32 %v1021, %v1105
      %v1128 = vadd.f32 %v1022, %v1110
      %v1129 = vadd.f32 %v1023, %v1113
      %v1130 = vadd.f32 %v1024, %v1118
      %v1131 = vadd.f32 %v1025, %v1121
      %v1132 = vld [vmem:[%s919 + $0x2] sm:$0xff]
      %v1133 = vld [vmem:[%s919 + $0x12] sm:$0xff]
      %v1134 = vld [vmem:[%s919 + $0x22] sm:$0xff]
      %v1135 = vld [vmem:[%s919 + $0x32] sm:$0xff]
      %v1136 = vld [vmem:[%s919 + $0x42] sm:$0xff]
      %v1137 = vld [vmem:[%s919 + $0x52] sm:$0xff]
      %v1138 = vld [vmem:[%s919 + $0x62] sm:$0xff]
      %v1139 = vld [vmem:[%s919 + $0x72] sm:$0xff]
      %v1140 = vpack.c.bf16 %v1133, %v1132
      %v1141 = vpack.c.bf16 %v1135, %v1134
      %v1142 = vpack.c.bf16 %v1137, %v1136
      %v1143 = vpack.c.bf16 %v1139, %v1138
      %s1144 = scalar_lea.vmem %s1, 64
      %v1145 = vld [vmem:[%s1144] sm:$0xf]
      %v1146 = vld [vmem:[%s1144 + $0x4] sm:$0xf]
      %v1149 = vunpack.c.l.b16 %v1145
      %v1150 = vunpack.c.l.b16 %v1146
      %v1151 = vpack.c.b16 %v1150, %v1149
      %v1154 = vsel %vm245, %v1140, 0
      %v1157 = vsel %vm245, %v1141, 0
      %v1160 = vsel %vm245, %v1142, 0
      %v1163 = vsel %vm245, %v1143, 0
      %1165 = vmatprep.subr.bf16.mxu0 0
      %1166 = vmatpush1.bf16.msra.mxu0 %v1151
      %1167 = vmatprep.subr.bf16.mxu0 0
      %1168 = vmatpush1.bf16.msra.mxu0 0
      %1169 = vmatprep.subr.bf16.mxu0 0
      %1170 = vmatpush1.bf16.msra.mxu0 0
      %1171 = vmatprep.subr.bf16.mxu0 0
      %1172 = vmatpush1.bf16.msra.mxu0 0
      %1173 = vmatprep.subr.bf16.mxu0 0
      %1174 = vmatpush1.bf16.msra.mxu0 0
      %1175 = vmatprep.subr.bf16.mxu0 0
      %1176 = vmatpush1.bf16.msra.mxu0 0
      %1177 = vmatprep.subr.bf16.mxu0 0
      %1178 = vmatpush1.bf16.msra.mxu0 0
      %1179 = vmatprep.subr.bf16.mxu0 0
      %1180 = vmatpush1.bf16.msra.mxu0 0
      %1181 = vmatprep.subr.bf16.mxu0 0
      %1182 = vmatpush1.bf16.msra.mxu0 0
      %1183 = vmatprep.subr.bf16.mxu0 0
      %1184 = vmatpush1.bf16.msra.mxu0 0
      %1185 = vmatprep.subr.bf16.mxu0 0
      %1186 = vmatpush1.bf16.msra.mxu0 0
      %1187 = vmatprep.subr.bf16.mxu0 0
      %1188 = vmatpush1.bf16.msra.mxu0 0
      %1189 = vmatprep.subr.bf16.mxu0 0
      %1190 = vmatpush1.bf16.msra.mxu0 0
      %1191 = vmatprep.subr.bf16.mxu0 0
      %1192 = vmatpush1.bf16.msra.mxu0 0
      %1193 = vmatprep.subr.bf16.mxu0 0
      %1194 = vmatpush1.bf16.msra.mxu0 0
      %1195 = vmatprep.subr.bf16.mxu0 0
      %1196 = vmatpush1.bf16.msra.mxu0 0
      %1197 = vmatprep.mubr.bf16.mxu0 0
      %1198 = vmatmul.mubr.bf16.gmra.mrb[0].mxu0 %v1154
      %v1199 = vpop.f32.mrb[0].mxu0
      %v1200 = vadd.f32 0.0, %v1199
      %v1201 = vpop.f32.mrb[0].mxu0
      %v1202 = vpop.f32.mrb[0].mxu0
      %v1203 = vadd.f32 0.0, %v1202
      %v1204 = vpop.f32.mrb[0].mxu0
      %1205 = vmatprep.mubr.bf16.mxu0 0
      %1206 = vmatmul.mubr.bf16.gmra.mrb[0].mxu0 %v1157
      %v1207 = vpop.f32.mrb[0].mxu0
      %v1208 = vadd.f32 0.0, %v1207
      %v1209 = vpop.f32.mrb[0].mxu0
      %v1210 = vpop.f32.mrb[0].mxu0
      %v1211 = vadd.f32 0.0, %v1210
      %v1212 = vpop.f32.mrb[0].mxu0
      %1213 = vmatprep.mubr.bf16.mxu0 0
      %1214 = vmatmul.mubr.bf16.gmra.mrb[0].mxu0 %v1160
      %v1215 = vpop.f32.mrb[0].mxu0
      %v1216 = vadd.f32 0.0, %v1215
      %v1217 = vpop.f32.mrb[0].mxu0
      %v1218 = vpop.f32.mrb[0].mxu0
      %v1219 = vadd.f32 0.0, %v1218
      %v1220 = vpop.f32.mrb[0].mxu0
      %1221 = vmatprep.mubr.bf16.mxu0 0
      %1222 = vmatmul.mubr.bf16.gmra.mrb[0].mxu0 %v1163
      %v1223 = vpop.f32.mrb[0].mxu0
      %v1224 = vadd.f32 0.0, %v1223
      %v1225 = vpop.f32.mrb[0].mxu0
      %v1226 = vpop.f32.mrb[0].mxu0
      %v1227 = vadd.f32 0.0, %v1226
      %v1228 = vpop.f32.mrb[0].mxu0
      %1229 = vdwg.mxu0
      %v1230 = vadd.f32 %v1124, %v1200
      %v1231 = vadd.f32 %v1125, %v1203
      %v1232 = vadd.f32 %v1126, %v1208
      %v1233 = vadd.f32 %v1127, %v1211
      %v1234 = vadd.f32 %v1128, %v1216
      %v1235 = vadd.f32 %v1129, %v1219
      %v1236 = vadd.f32 %v1130, %v1224
      %v1237 = vadd.f32 %v1131, %v1227
      %v1238 = vld [vmem:[%s3] sm:$0x1]
      %v1240 = vlaneseq
      %v1241 = vshrl.u32 %v1240, 7
      %v1242 = vsub.s32 0, %v1241
      %v1243 = vrot.slane %v1238, %v1242
      %v1245 = vadd.f32 %v1230, %v1243
      %v1246 = vadd.f32 %v1231, %v1243
      %v1247 = vadd.f32 %v1232, %v1243
      %v1248 = vadd.f32 %v1233, %v1243
      %v1249 = vadd.f32 %v1234, %v1243
      %v1250 = vadd.f32 %v1235, %v1243
      %v1251 = vadd.f32 %v1236, %v1243
      %v1252 = vadd.f32 %v1237, %v1243
      %v1253 = vmax.f32 %v1245, 0.0
      %v1254 = vmax.f32 %v1246, 0.0
      %v1255 = vmax.f32 %v1247, 0.0
      %v1256 = vmax.f32 %v1248, 0.0
      %v1257 = vmax.f32 %v1249, 0.0
      %v1258 = vmax.f32 %v1250, 0.0
      %v1259 = vmax.f32 %v1251, 0.0
      %v1260 = vmax.f32 %v1252, 0.0
      %vm1261 = vcmask 64512
      %1262 = vst.msk [vmem:[#allocation3] sm:$0xff] %vm1261, 0.0
      %vm1263 = vcmask 58368
      %1264 = vst.msk [vmem:[#allocation3 + $0x8] sm:$0x3] %vm1263, 0.0
      %1265 = vst.msk [vmem:[#allocation3 + $0x10] sm:$0xff] %vm1261, 0.0
      %1266 = vst.msk [vmem:[#allocation3 + $0x18] sm:$0x3] %vm1263, 0.0
      %1267 = vst.msk [vmem:[#allocation3 + $0x20] sm:$0xff] %vm1261, 0.0
      %1268 = vst.msk [vmem:[#allocation3 + $0x28] sm:$0x3] %vm1263, 0.0
      %1269 = vst.msk [vmem:[#allocation3 + $0x30] sm:$0xff] %vm1261, 0.0
      %1270 = vst.msk [vmem:[#allocation3 + $0x38] sm:$0x3] %vm1263, 0.0
      %1271 = vst.msk [vmem:[#allocation3 + $0x40] sm:$0xff] %vm1261, 0.0
      %1272 = vst.msk [vmem:[#allocation3 + $0x48] sm:$0x3] %vm1263, 0.0
      %1273 = vst.msk [vmem:[#allocation3 + $0x50] sm:$0xff] %vm1261, 0.0
      %1274 = vst.msk [vmem:[#allocation3 + $0x58] sm:$0x3] %vm1263, 0.0
      %1275 = vst.msk [vmem:[#allocation3 + $0x60] sm:$0xff] %vm1261, 0.0
      %1276 = vst.msk [vmem:[#allocation3 + $0x68] sm:$0x3] %vm1263, 0.0
      %1277 = vst.msk [vmem:[#allocation3 + $0x70] sm:$0xff] %vm1261, 0.0
      %1278 = vst.msk [vmem:[#allocation3 + $0x78] sm:$0x3] %vm1263, 0.0
      %1279 = vst.msk [vmem:[#allocation3 + $0x80] sm:$0xff] %vm1261, 0.0
      %1280 = vst.msk [vmem:[#allocation3 + $0x88] sm:$0x3] %vm1263, 0.0
      %1281 = vst.msk [vmem:[#allocation3 + $0x90] sm:$0xff] %vm1261, 0.0
      %1282 = vst.msk [vmem:[#allocation3 + $0x98] sm:$0x3] %vm1263, 0.0
      %s1283 = scalar_lea.vmem [#allocation3], 16
      %1284 = vst.msk [vmem:[%s1283 + $0x1] sm:$0xff] %vm1261, %v1253
      %1285 = vst.msk [vmem:[%s1283 + $0x11] sm:$0xff] %vm1261, %v1254
      %1286 = vst.msk [vmem:[%s1283 + $0x21] sm:$0xff] %vm1261, %v1255
      %1287 = vst.msk [vmem:[%s1283 + $0x31] sm:$0xff] %vm1261, %v1256
      %1288 = vst.msk [vmem:[%s1283 + $0x41] sm:$0xff] %vm1261, %v1257
      %1289 = vst.msk [vmem:[%s1283 + $0x51] sm:$0xff] %vm1261, %v1258
      %1290 = vst.msk [vmem:[%s1283 + $0x61] sm:$0xff] %vm1261, %v1259
      %1291 = vst.msk [vmem:[%s1283 + $0x71] sm:$0xff] %vm1261, %v1260
      %v1292 = vld [vmem:[#allocation3] sm:$0xff]
      %v1293 = vld [vmem:[#allocation3 + $0x10] sm:$0xff]
      %v1294 = vld [vmem:[#allocation3 + $0x20] sm:$0xff]
      %v1295 = vld [vmem:[#allocation3 + $0x30] sm:$0xff]
      %v1296 = vld [vmem:[#allocation3 + $0x40] sm:$0xff]
      %v1297 = vld [vmem:[#allocation3 + $0x50] sm:$0xff]
      %v1298 = vld [vmem:[#allocation3 + $0x60] sm:$0xff]
      %v1299 = vld [vmem:[#allocation3 + $0x70] sm:$0xff]
      %v1300 = vpack.c.bf16 %v1293, %v1292
      %v1301 = vpack.c.bf16 %v1295, %v1294
      %v1302 = vpack.c.bf16 %v1297, %v1296
      %v1303 = vpack.c.bf16 %v1299, %v1298
      %v1304 = vld [vmem:[%s2] sm:$0xf]
      %v1305 = vld [vmem:[#allocation3 + $0x1] sm:$0xff]
      %v1306 = vld [vmem:[#allocation3 + $0x11] sm:$0xff]
      %v1307 = vld [vmem:[#allocation3 + $0x21] sm:$0xff]
      %v1308 = vld [vmem:[#allocation3 + $0x31] sm:$0xff]
      %v1309 = vld [vmem:[#allocation3 + $0x41] sm:$0xff]
      %v1310 = vld [vmem:[#allocation3 + $0x51] sm:$0xff]
      %v1311 = vld [vmem:[#allocation3 + $0x61] sm:$0xff]
      %v1312 = vld [vmem:[#allocation3 + $0x71] sm:$0xff]
      %v1313 = vpack.c.bf16 %v1306, %v1305
      %v1314 = vpack.c.bf16 %v1308, %v1307
      %v1315 = vpack.c.bf16 %v1310, %v1309
      %v1316 = vpack.c.bf16 %v1312, %v1311
      %s1317 = scalar_lea.vmem %s2, 4
      %v1318 = vld [vmem:[%s1317] sm:$0xf]
      %v1320 = vsel %vm1261, %v1313, 0
      %v1323 = vsel %vm1261, %v1314, 0
      %v1326 = vsel %vm1261, %v1315, 0
      %v1329 = vsel %vm1261, %v1316, 0
      %vm1331 = vcmask 1043456
      %v1333 = vsel %vm1331, %v1318, 0
      %1335 = vmatprep.subr.bf16.mxu0 0
      %1336 = vmatpush1.bf16.msra.mxu0 %v1333
      %1337 = vmatprep.subr.bf16.mxu0 0
      %1338 = vmatpush1.bf16.msra.mxu0 0
      %1339 = vmatprep.subr.bf16.mxu0 0
      %1340 = vmatpush1.bf16.msra.mxu0 0
      %1341 = vmatprep.subr.bf16.mxu0 0
      %1342 = vmatpush1.bf16.msra.mxu0 0
      %1343 = vmatprep.subr.bf16.mxu0 0
      %1344 = vmatpush1.bf16.msra.mxu0 0
      %1345 = vmatprep.subr.bf16.mxu0 0
      %1346 = vmatpush1.bf16.msra.mxu0 0
      %1347 = vmatprep.subr.bf16.mxu0 0
      %1348 = vmatpush1.bf16.msra.mxu0 0
      %1349 = vmatprep.subr.bf16.mxu0 0
      %1350 = vmatpush1.bf16.msra.mxu0 0
      %1351 = vmatprep.subr.bf16.mxu0 0
      %1352 = vmatpush1.bf16.msra.mxu0 0
      %1353 = vmatprep.subr.bf16.mxu0 0
      %1354 = vmatpush1.bf16.msra.mxu0 0
      %1355 = vmatprep.subr.bf16.mxu0 0
      %1356 = vmatpush1.bf16.msra.mxu0 0
      %1357 = vmatprep.subr.bf16.mxu0 0
      %1358 = vmatpush1.bf16.msra.mxu0 0
      %1359 = vmatprep.subr.bf16.mxu0 0
      %1360 = vmatpush1.bf16.msra.mxu0 0
      %1361 = vmatprep.subr.bf16.mxu0 0
      %1362 = vmatpush1.bf16.msra.mxu0 0
      %1363 = vmatprep.subr.bf16.mxu0 0
      %1364 = vmatpush1.bf16.msra.mxu0 0
      %1365 = vmatprep.subr.bf16.mxu0 0
      %1366 = vmatpush1.bf16.msra.mxu0 0
      %1367 = vmatprep.mubr.bf16.mxu0 0
      %1368 = vmatmul.mubr.bf16.gmra.mrb[0].mxu0 %v1320
      %v1369 = vpop.f32.mrb[0].mxu0
      %v1370 = vadd.f32 0.0, %v1369
      %v1371 = vpop.f32.mrb[0].mxu0
      %v1372 = vpop.f32.mrb[0].mxu0
      %v1373 = vadd.f32 0.0, %v1372
      %v1374 = vpop.f32.mrb[0].mxu0
      %1375 = vmatprep.mubr.bf16.mxu0 0
      %1376 = vmatmul.mubr.bf16.gmra.mrb[0].mxu0 %v1323
      %v1377 = vpop.f32.mrb[0].mxu0
      %v1378 = vadd.f32 0.0, %v1377
      %v1379 = vpop.f32.mrb[0].mxu0
      %v1380 = vpop.f32.mrb[0].mxu0
      %v1381 = vadd.f32 0.0, %v1380
      %v1382 = vpop.f32.mrb[0].mxu0
      %1383 = vmatprep.mubr.bf16.mxu0 0
      %1384 = vmatmul.mubr.bf16.gmra.mrb[0].mxu0 %v1326
      %v1385 = vpop.f32.mrb[0].mxu0
      %v1386 = vadd.f32 0.0, %v1385
      %v1387 = vpop.f32.mrb[0].mxu0
      %v1388 = vpop.f32.mrb[0].mxu0
      %v1389 = vadd.f32 0.0, %v1388
      %v1390 = vpop.f32.mrb[0].mxu0
      %1391 = vmatprep.mubr.bf16.mxu0 0
      %1392 = vmatmul.mubr.bf16.gmra.mrb[0].mxu0 %v1329
      %v1393 = vpop.f32.mrb[0].mxu0
      %v1394 = vadd.f32 0.0, %v1393
      %v1395 = vpop.f32.mrb[0].mxu0
      %v1396 = vpop.f32.mrb[0].mxu0
      %v1397 = vadd.f32 0.0, %v1396
      %v1398 = vpop.f32.mrb[0].mxu0
      %1399 = vdwg.mxu0
      %v1401 = vsel %vm1261, %v1300, 0
      %v1404 = vsel %vm1261, %v1301, 0
      %v1407 = vsel %vm1261, %v1302, 0
      %v1410 = vsel %vm1261, %v1303, 0
      %v1413 = vsel %vm1331, %v1304, 0
      %1415 = vmatprep.subr.bf16.mxu0 0
      %1416 = vmatpush1.bf16.msra.mxu0 %v1413
      %1417 = vmatprep.subr.bf16.mxu0 0
      %1418 = vmatpush1.bf16.msra.mxu0 0
      %1419 = vmatprep.subr.bf16.mxu0 0
      %1420 = vmatpush1.bf16.msra.mxu0 0
      %1421 = vmatprep.subr.bf16.mxu0 0
      %1422 = vmatpush1.bf16.msra.mxu0 0
      %1423 = vmatprep.subr.bf16.mxu0 0
      %1424 = vmatpush1.bf16.msra.mxu0 0
      %1425 = vmatprep.subr.bf16.mxu0 0
      %1426 = vmatpush1.bf16.msra.mxu0 0
      %1427 = vmatprep.subr.bf16.mxu0 0
      %1428 = vmatpush1.bf16.msra.mxu0 0
      %1429 = vmatprep.subr.bf16.mxu0 0
      %1430 = vmatpush1.bf16.msra.mxu0 0
      %1431 = vmatprep.subr.bf16.mxu0 0
      %1432 = vmatpush1.bf16.msra.mxu0 0
      %1433 = vmatprep.subr.bf16.mxu0 0
      %1434 = vmatpush1.bf16.msra.mxu0 0
      %1435 = vmatprep.subr.bf16.mxu0 0
      %1436 = vmatpush1.bf16.msra.mxu0 0
      %1437 = vmatprep.subr.bf16.mxu0 0
      %1438 = vmatpush1.bf16.msra.mxu0 0
      %1439 = vmatprep.subr.bf16.mxu0 0
      %1440 = vmatpush1.bf16.msra.mxu0 0
      %1441 = vmatprep.subr.bf16.mxu0 0
      %1442 = vmatpush1.bf16.msra.mxu0 0
      %1443 = vmatprep.subr.bf16.mxu0 0
      %1444 = vmatpush1.bf16.msra.mxu0 0
      %1445 = vmatprep.subr.bf16.mxu0 0
      %1446 = vmatpush1.bf16.msra.mxu0 0
      %1447 = vmatprep.mubr.bf16.mxu0 0
      %1448 = vmatmul.mubr.bf16.gmra.mrb[0].mxu0 %v1401
      %v1449 = vpop.f32.mrb[0].mxu0
      %v1450 = vadd.f32 %v1370, %v1449
      %v1451 = vpop.f32.mrb[0].mxu0
      %v1452 = vpop.f32.mrb[0].mxu0
      %v1453 = vadd.f32 %v1373, %v1452
      %v1454 = vpop.f32.mrb[0].mxu0
      %1455 = vmatprep.mubr.bf16.mxu0 0
      %1456 = vmatmul.mubr.bf16.gmra.mrb[0].mxu0 %v1404
      %v1457 = vpop.f32.mrb[0].mxu0
      %v1458 = vadd.f32 %v1378, %v1457
      %v1459 = vpop.f32.mrb[0].mxu0
      %v1460 = vpop.f32.mrb[0].mxu0
      %v1461 = vadd.f32 %v1381, %v1460
      %v1462 = vpop.f32.mrb[0].mxu0
      %1463 = vmatprep.mubr.bf16.mxu0 0
      %1464 = vmatmul.mubr.bf16.gmra.mrb[0].mxu0 %v1407
      %v1465 = vpop.f32.mrb[0].mxu0
      %v1466 = vadd.f32 %v1386, %v1465
      %v1467 = vpop.f32.mrb[0].mxu0
      %v1468 = vpop.f32.mrb[0].mxu0
      %v1469 = vadd.f32 %v1389, %v1468
      %v1470 = vpop.f32.mrb[0].mxu0
      %1471 = vmatprep.mubr.bf16.mxu0 0
      %1472 = vmatmul.mubr.bf16.gmra.mrb[0].mxu0 %v1410
      %v1473 = vpop.f32.mrb[0].mxu0
      %v1474 = vadd.f32 %v1394, %v1473
      %v1475 = vpop.f32.mrb[0].mxu0
      %v1476 = vpop.f32.mrb[0].mxu0
      %v1477 = vadd.f32 %v1397, %v1476
      %v1478 = vpop.f32.mrb[0].mxu0
      %1479 = vdwg.mxu0
      %v1480 = vld [vmem:[#allocation3 + $0x2] sm:$0xff]
      %v1481 = vld [vmem:[#allocation3 + $0x12] sm:$0xff]
      %v1482 = vld [vmem:[#allocation3 + $0x22] sm:$0xff]
      %v1483 = vld [vmem:[#allocation3 + $0x32] sm:$0xff]
      %v1484 = vld [vmem:[#allocation3 + $0x42] sm:$0xff]
      %v1485 = vld [vmem:[#allocation3 + $0x52] sm:$0xff]
      %v1486 = vld [vmem:[#allocation3 + $0x62] sm:$0xff]
      %v1487 = vld [vmem:[#allocation3 + $0x72] sm:$0xff]
      %v1488 = vpack.c.bf16 %v1481, %v1480
      %v1489 = vpack.c.bf16 %v1483, %v1482
      %v1490 = vpack.c.bf16 %v1485, %v1484
      %v1491 = vpack.c.bf16 %v1487, %v1486
      %s1492 = scalar_lea.vmem %s2, 8
      %v1493 = vld [vmem:[%s1492] sm:$0xf]
      %v1495 = vsel %vm1261, %v1488, 0
      %v1498 = vsel %vm1261, %v1489, 0
      %v1501 = vsel %vm1261, %v1490, 0
      %v1504 = vsel %vm1261, %v1491, 0
      %v1507 = vsel %vm1331, %v1493, 0
      %1509 = vmatprep.subr.bf16.mxu0 0
      %1510 = vmatpush1.bf16.msra.mxu0 %v1507
      %1511 = vmatprep.subr.bf16.mxu0 0
      %1512 = vmatpush1.bf16.msra.mxu0 0
      %1513 = vmatprep.subr.bf16.mxu0 0
      %1514 = vmatpush1.bf16.msra.mxu0 0
      %1515 = vmatprep.subr.bf16.mxu0 0
      %1516 = vmatpush1.bf16.msra.mxu0 0
      %1517 = vmatprep.subr.bf16.mxu0 0
      %1518 = vmatpush1.bf16.msra.mxu0 0
      %1519 = vmatprep.subr.bf16.mxu0 0
      %1520 = vmatpush1.bf16.msra.mxu0 0
      %1521 = vmatprep.subr.bf16.mxu0 0
      %1522 = vmatpush1.bf16.msra.mxu0 0
      %1523 = vmatprep.subr.bf16.mxu0 0
      %1524 = vmatpush1.bf16.msra.mxu0 0
      %1525 = vmatprep.subr.bf16.mxu0 0
      %1526 = vmatpush1.bf16.msra.mxu0 0
      %1527 = vmatprep.subr.bf16.mxu0 0
      %1528 = vmatpush1.bf16.msra.mxu0 0
      %1529 = vmatprep.subr.bf16.mxu0 0
      %1530 = vmatpush1.bf16.msra.mxu0 0
      %1531 = vmatprep.subr.bf16.mxu0 0
      %1532 = vmatpush1.bf16.msra.mxu0 0
      %1533 = vmatprep.subr.bf16.mxu0 0
      %1534 = vmatpush1.bf16.msra.mxu0 0
      %1535 = vmatprep.subr.bf16.mxu0 0
      %1536 = vmatpush1.bf16.msra.mxu0 0
      %1537 = vmatprep.subr.bf16.mxu0 0
      %1538 = vmatpush1.bf16.msra.mxu0 0
      %1539 = vmatprep.subr.bf16.mxu0 0
      %1540 = vmatpush1.bf16.msra.mxu0 0
      %1541 = vmatprep.mubr.bf16.mxu0 0
      %1542 = vmatmul.mubr.bf16.gmra.mrb[0].mxu0 %v1495
      %v1543 = vpop.f32.mrb[0].mxu0
      %v1544 = vadd.f32 0.0, %v1543
      %v1545 = vpop.f32.mrb[0].mxu0
      %v1546 = vpop.f32.mrb[0].mxu0
      %v1547 = vadd.f32 0.0, %v1546
      %v1548 = vpop.f32.mrb[0].mxu0
      %1549 = vmatprep.mubr.bf16.mxu0 0
      %1550 = vmatmul.mubr.bf16.gmra.mrb[0].mxu0 %v1498
      %v1551 = vpop.f32.mrb[0].mxu0
      %v1552 = vadd.f32 0.0, %v1551
      %v1553 = vpop.f32.mrb[0].mxu0
      %v1554 = vpop.f32.mrb[0].mxu0
      %v1555 = vadd.f32 0.0, %v1554
      %v1556 = vpop.f32.mrb[0].mxu0
      %1557 = vmatprep.mubr.bf16.mxu0 0
      %1558 = vmatmul.mubr.bf16.gmra.mrb[0].mxu0 %v1501
      %v1559 = vpop.f32.mrb[0].mxu0
      %v1560 = vadd.f32 0.0, %v1559
      %v1561 = vpop.f32.mrb[0].mxu0
      %v1562 = vpop.f32.mrb[0].mxu0
      %v1563 = vadd.f32 0.0, %v1562
      %v1564 = vpop.f32.mrb[0].mxu0
      %1565 = vmatprep.mubr.bf16.mxu0 0
      %1566 = vmatmul.mubr.bf16.gmra.mrb[0].mxu0 %v1504
      %v1567 = vpop.f32.mrb[0].mxu0
      %v1568 = vadd.f32 0.0, %v1567
      %v1569 = vpop.f32.mrb[0].mxu0
      %v1570 = vpop.f32.mrb[0].mxu0
      %v1571 = vadd.f32 0.0, %v1570
      %v1572 = vpop.f32.mrb[0].mxu0
      %1573 = vdwg.mxu0
      %v1574 = vadd.f32 %v1450, %v1544
      %v1575 = vadd.f32 %v1453, %v1547
      %v1576 = vadd.f32 %v1458, %v1552
      %v1577 = vadd.f32 %v1461, %v1555
      %v1578 = vadd.f32 %v1466, %v1560
      %v1579 = vadd.f32 %v1469, %v1563
      %v1580 = vadd.f32 %v1474, %v1568
      %v1581 = vadd.f32 %v1477, %v1571
      %v1582 = vld [vmem:[%s1283] sm:$0xff]
      %v1583 = vld [vmem:[%s1283 + $0x10] sm:$0xff]
      %v1584 = vld [vmem:[%s1283 + $0x20] sm:$0xff]
      %v1585 = vld [vmem:[%s1283 + $0x30] sm:$0xff]
      %v1586 = vld [vmem:[%s1283 + $0x40] sm:$0xff]
      %v1587 = vld [vmem:[%s1283 + $0x50] sm:$0xff]
      %v1588 = vld [vmem:[%s1283 + $0x60] sm:$0xff]
      %v1589 = vld [vmem:[%s1283 + $0x70] sm:$0xff]
      %v1590 = vpack.c.bf16 %v1583, %v1582
      %v1591 = vpack.c.bf16 %v1585, %v1584
      %v1592 = vpack.c.bf16 %v1587, %v1586
      %v1593 = vpack.c.bf16 %v1589, %v1588
      %s1594 = scalar_lea.vmem %s2, 12
      %v1595 = vld [vmem:[%s1594] sm:$0xf]
      %v1597 = vsel %vm1261, %v1590, 0
      %v1600 = vsel %vm1261, %v1591, 0
      %v1603 = vsel %vm1261, %v1592, 0
      %v1606 = vsel %vm1261, %v1593, 0
      %v1609 = vsel %vm1331, %v1595, 0
      %1611 = vmatprep.subr.bf16.mxu0 0
      %1612 = vmatpush1.bf16.msra.mxu0 %v1609
      %1613 = vmatprep.subr.bf16.mxu0 0
      %1614 = vmatpush1.bf16.msra.mxu0 0
      %1615 = vmatprep.subr.bf16.mxu0 0
      %1616 = vmatpush1.bf16.msra.mxu0 0
      %1617 = vmatprep.subr.bf16.mxu0 0
      %1618 = vmatpush1.bf16.msra.mxu0 0
      %1619 = vmatprep.subr.bf16.mxu0 0
      %1620 = vmatpush1.bf16.msra.mxu0 0
      %1621 = vmatprep.subr.bf16.mxu0 0
      %1622 = vmatpush1.bf16.msra.mxu0 0
      %1623 = vmatprep.subr.bf16.mxu0 0
      %1624 = vmatpush1.bf16.msra.mxu0 0
      %1625 = vmatprep.subr.bf16.mxu0 0
      %1626 = vmatpush1.bf16.msra.mxu0 0
      %1627 = vmatprep.subr.bf16.mxu0 0
      %1628 = vmatpush1.bf16.msra.mxu0 0
      %1629 = vmatprep.subr.bf16.mxu0 0
      %1630 = vmatpush1.bf16.msra.mxu0 0
      %1631 = vmatprep.subr.bf16.mxu0 0
      %1632 = vmatpush1.bf16.msra.mxu0 0
      %1633 = vmatprep.subr.bf16.mxu0 0
      %1634 = vmatpush1.bf16.msra.mxu0 0
      %1635 = vmatprep.subr.bf16.mxu0 0
      %1636 = vmatpush1.bf16.msra.mxu0 0
      %1637 = vmatprep.subr.bf16.mxu0 0
      %1638 = vmatpush1.bf16.msra.mxu0 0
      %1639 = vmatprep.subr.bf16.mxu0 0
      %1640 = vmatpush1.bf16.msra.mxu0 0
      %1641 = vmatprep.subr.bf16.mxu0 0
      %1642 = vmatpush1.bf16.msra.mxu0 0
      %1643 = vmatprep.mubr.bf16.mxu0 0
      %1644 = vmatmul.mubr.bf16.gmra.mrb[0].mxu0 %v1597
      %v1645 = vpop.f32.mrb[0].mxu0
      %v1646 = vadd.f32 0.0, %v1645
      %v1647 = vpop.f32.mrb[0].mxu0
      %v1648 = vpop.f32.mrb[0].mxu0
      %v1649 = vadd.f32 0.0, %v1648
      %v1650 = vpop.f32.mrb[0].mxu0
      %1651 = vmatprep.mubr.bf16.mxu0 0
      %1652 = vmatmul.mubr.bf16.gmra.mrb[0].mxu0 %v1600
      %v1653 = vpop.f32.mrb[0].mxu0
      %v1654 = vadd.f32 0.0, %v1653
      %v1655 = vpop.f32.mrb[0].mxu0
      %v1656 = vpop.f32.mrb[0].mxu0
      %v1657 = vadd.f32 0.0, %v1656
      %v1658 = vpop.f32.mrb[0].mxu0
      %1659 = vmatprep.mubr.bf16.mxu0 0
      %1660 = vmatmul.mubr.bf16.gmra.mrb[0].mxu0 %v1603
      %v1661 = vpop.f32.mrb[0].mxu0
      %v1662 = vadd.f32 0.0, %v1661
      %v1663 = vpop.f32.mrb[0].mxu0
      %v1664 = vpop.f32.mrb[0].mxu0
      %v1665 = vadd.f32 0.0, %v1664
      %v1666 = vpop.f32.mrb[0].mxu0
      %1667 = vmatprep.mubr.bf16.mxu0 0
      %1668 = vmatmul.mubr.bf16.gmra.mrb[0].mxu0 %v1606
      %v1669 = vpop.f32.mrb[0].mxu0
      %v1670 = vadd.f32 0.0, %v1669
      %v1671 = vpop.f32.mrb[0].mxu0
      %v1672 = vpop.f32.mrb[0].mxu0
      %v1673 = vadd.f32 0.0, %v1672
      %v1674 = vpop.f32.mrb[0].mxu0
      %1675 = vdwg.mxu0
      %v1676 = vadd.f32 %v1574, %v1646
      %v1677 = vadd.f32 %v1575, %v1649
      %v1678 = vadd.f32 %v1576, %v1654
      %v1679 = vadd.f32 %v1577, %v1657
      %v1680 = vadd.f32 %v1578, %v1662
      %v1681 = vadd.f32 %v1579, %v1665
      %v1682 = vadd.f32 %v1580, %v1670
      %v1683 = vadd.f32 %v1581, %v1673
      %v1684 = vld [vmem:[%s1283 + $0x1] sm:$0xff]
      %v1685 = vld [vmem:[%s1283 + $0x11] sm:$0xff]
      %v1686 = vld [vmem:[%s1283 + $0x21] sm:$0xff]
      %v1687 = vld [vmem:[%s1283 + $0x31] sm:$0xff]
      %v1688 = vld [vmem:[%s1283 + $0x41] sm:$0xff]
      %v1689 = vld [vmem:[%s1283 + $0x51] sm:$0xff]
      %v1690 = vld [vmem:[%s1283 + $0x61] sm:$0xff]
      %v1691 = vld [vmem:[%s1283 + $0x71] sm:$0xff]
      %v1692 = vpack.c.bf16 %v1685, %v1684
      %v1693 = vpack.c.bf16 %v1687, %v1686
      %v1694 = vpack.c.bf16 %v1689, %v1688
      %v1695 = vpack.c.bf16 %v1691, %v1690
      %s1696 = scalar_lea.vmem %s2, 16
      %v1697 = vld [vmem:[%s1696] sm:$0xf]
      %v1699 = vsel %vm1261, %v1692, 0
      %v1702 = vsel %vm1261, %v1693, 0
      %v1705 = vsel %vm1261, %v1694, 0
      %v1708 = vsel %vm1261, %v1695, 0
      %v1711 = vsel %vm1331, %v1697, 0
      %1713 = vmatprep.subr.bf16.mxu0 0
      %1714 = vmatpush1.bf16.msra.mxu0 %v1711
      %1715 = vmatprep.subr.bf16.mxu0 0
      %1716 = vmatpush1.bf16.msra.mxu0 0
      %1717 = vmatprep.subr.bf16.mxu0 0
      %1718 = vmatpush1.bf16.msra.mxu0 0
      %1719 = vmatprep.subr.bf16.mxu0 0
      %1720 = vmatpush1.bf16.msra.mxu0 0
      %1721 = vmatprep.subr.bf16.mxu0 0
      %1722 = vmatpush1.bf16.msra.mxu0 0
      %1723 = vmatprep.subr.bf16.mxu0 0
      %1724 = vmatpush1.bf16.msra.mxu0 0
      %1725 = vmatprep.subr.bf16.mxu0 0
      %1726 = vmatpush1.bf16.msra.mxu0 0
      %1727 = vmatprep.subr.bf16.mxu0 0
      %1728 = vmatpush1.bf16.msra.mxu0 0
      %1729 = vmatprep.subr.bf16.mxu0 0
      %1730 = vmatpush1.bf16.msra.mxu0 0
      %1731 = vmatprep.subr.bf16.mxu0 0
      %1732 = vmatpush1.bf16.msra.mxu0 0
      %1733 = vmatprep.subr.bf16.mxu0 0
      %1734 = vmatpush1.bf16.msra.mxu0 0
      %1735 = vmatprep.subr.bf16.mxu0 0
      %1736 = vmatpush1.bf16.msra.mxu0 0
      %1737 = vmatprep.subr.bf16.mxu0 0
      %1738 = vmatpush1.bf16.msra.mxu0 0
      %1739 = vmatprep.subr.bf16.mxu0 0
      %1740 = vmatpush1.bf16.msra.mxu0 0
      %1741 = vmatprep.subr.bf16.mxu0 0
      %1742 = vmatpush1.bf16.msra.mxu0 0
      %1743 = vmatprep.subr.bf16.mxu0 0
      %1744 = vmatpush1.bf16.msra.mxu0 0
      %1745 = vmatprep.mubr.bf16.mxu0 0
      %1746 = vmatmul.mubr.bf16.gmra.mrb[0].mxu0 %v1699
      %v1747 = vpop.f32.mrb[0].mxu0
      %v1748 = vadd.f32 0.0, %v1747
      %v1749 = vpop.f32.mrb[0].mxu0
      %v1750 = vpop.f32.mrb[0].mxu0
      %v1751 = vadd.f32 0.0, %v1750
      %v1752 = vpop.f32.mrb[0].mxu0
      %1753 = vmatprep.mubr.bf16.mxu0 0
      %1754 = vmatmul.mubr.bf16.gmra.mrb[0].mxu0 %v1702
      %v1755 = vpop.f32.mrb[0].mxu0
      %v1756 = vadd.f32 0.0, %v1755
      %v1757 = vpop.f32.mrb[0].mxu0
      %v1758 = vpop.f32.mrb[0].mxu0
      %v1759 = vadd.f32 0.0, %v1758
      %v1760 = vpop.f32.mrb[0].mxu0
      %1761 = vmatprep.mubr.bf16.mxu0 0
      %1762 = vmatmul.mubr.bf16.gmra.mrb[0].mxu0 %v1705
      %v1763 = vpop.f32.mrb[0].mxu0
      %v1764 = vadd.f32 0.0, %v1763
      %v1765 = vpop.f32.mrb[0].mxu0
      %v1766 = vpop.f32.mrb[0].mxu0
      %v1767 = vadd.f32 0.0, %v1766
      %v1768 = vpop.f32.mrb[0].mxu0
      %1769 = vmatprep.mubr.bf16.mxu0 0
      %1770 = vmatmul.mubr.bf16.gmra.mrb[0].mxu0 %v1708
      %v1771 = vpop.f32.mrb[0].mxu0
      %v1772 = vadd.f32 0.0, %v1771
      %v1773 = vpop.f32.mrb[0].mxu0
      %v1774 = vpop.f32.mrb[0].mxu0
      %v1775 = vadd.f32 0.0, %v1774
      %v1776 = vpop.f32.mrb[0].mxu0
      %1777 = vdwg.mxu0
      %v1778 = vadd.f32 %v1676, %v1748
      %v1779 = vadd.f32 %v1677, %v1751
      %v1780 = vadd.f32 %v1678, %v1756
      %v1781 = vadd.f32 %v1679, %v1759
      %v1782 = vadd.f32 %v1680, %v1764
      %v1783 = vadd.f32 %v1681, %v1767
      %v1784 = vadd.f32 %v1682, %v1772
      %v1785 = vadd.f32 %v1683, %v1775
      %v1786 = vld [vmem:[%s1283 + $0x2] sm:$0xff]
      %v1787 = vld [vmem:[%s1283 + $0x12] sm:$0xff]
      %v1788 = vld [vmem:[%s1283 + $0x22] sm:$0xff]
      %v1789 = vld [vmem:[%s1283 + $0x32] sm:$0xff]
      %v1790 = vld [vmem:[%s1283 + $0x42] sm:$0xff]
      %v1791 = vld [vmem:[%s1283 + $0x52] sm:$0xff]
      %v1792 = vld [vmem:[%s1283 + $0x62] sm:$0xff]
      %v1793 = vld [vmem:[%s1283 + $0x72] sm:$0xff]
      %v1794 = vpack.c.bf16 %v1787, %v1786
      %v1795 = vpack.c.bf16 %v1789, %v1788
      %v1796 = vpack.c.bf16 %v1791, %v1790
      %v1797 = vpack.c.bf16 %v1793, %v1792
      %s1798 = scalar_lea.vmem %s2, 20
      %v1799 = vld [vmem:[%s1798] sm:$0xf]
      %v1801 = vsel %vm1261, %v1794, 0
      %v1804 = vsel %vm1261, %v1795, 0
      %v1807 = vsel %vm1261, %v1796, 0
      %v1810 = vsel %vm1261, %v1797, 0
      %v1813 = vsel %vm1331, %v1799, 0
      %1815 = vmatprep.subr.bf16.mxu0 0
      %1816 = vmatpush1.bf16.msra.mxu0 %v1813
      %1817 = vmatprep.subr.bf16.mxu0 0
      %1818 = vmatpush1.bf16.msra.mxu0 0
      %1819 = vmatprep.subr.bf16.mxu0 0
      %1820 = vmatpush1.bf16.msra.mxu0 0
      %1821 = vmatprep.subr.bf16.mxu0 0
      %1822 = vmatpush1.bf16.msra.mxu0 0
      %1823 = vmatprep.subr.bf16.mxu0 0
      %1824 = vmatpush1.bf16.msra.mxu0 0
      %1825 = vmatprep.subr.bf16.mxu0 0
      %1826 = vmatpush1.bf16.msra.mxu0 0
      %1827 = vmatprep.subr.bf16.mxu0 0
      %1828 = vmatpush1.bf16.msra.mxu0 0
      %1829 = vmatprep.subr.bf16.mxu0 0
      %1830 = vmatpush1.bf16.msra.mxu0 0
      %1831 = vmatprep.subr.bf16.mxu0 0
      %1832 = vmatpush1.bf16.msra.mxu0 0
      %1833 = vmatprep.subr.bf16.mxu0 0
      %1834 = vmatpush1.bf16.msra.mxu0 0
      %1835 = vmatprep.subr.bf16.mxu0 0
      %1836 = vmatpush1.bf16.msra.mxu0 0
      %1837 = vmatprep.subr.bf16.mxu0 0
      %1838 = vmatpush1.bf16.msra.mxu0 0
      %1839 = vmatprep.subr.bf16.mxu0 0
      %1840 = vmatpush1.bf16.msra.mxu0 0
      %1841 = vmatprep.subr.bf16.mxu0 0
      %1842 = vmatpush1.bf16.msra.mxu0 0
      %1843 = vmatprep.subr.bf16.mxu0 0
      %1844 = vmatpush1.bf16.msra.mxu0 0
      %1845 = vmatprep.subr.bf16.mxu0 0
      %1846 = vmatpush1.bf16.msra.mxu0 0
      %1847 = vmatprep.mubr.bf16.mxu0 0
      %1848 = vmatmul.mubr.bf16.gmra.mrb[0].mxu0 %v1801
      %v1849 = vpop.f32.mrb[0].mxu0
      %v1850 = vadd.f32 0.0, %v1849
      %v1851 = vpop.f32.mrb[0].mxu0
      %v1852 = vpop.f32.mrb[0].mxu0
      %v1853 = vadd.f32 0.0, %v1852
      %v1854 = vpop.f32.mrb[0].mxu0
      %1855 = vmatprep.mubr.bf16.mxu0 0
      %1856 = vmatmul.mubr.bf16.gmra.mrb[0].mxu0 %v1804
      %v1857 = vpop.f32.mrb[0].mxu0
      %v1858 = vadd.f32 0.0, %v1857
      %v1859 = vpop.f32.mrb[0].mxu0
      %v1860 = vpop.f32.mrb[0].mxu0
      %v1861 = vadd.f32 0.0, %v1860
      %v1862 = vpop.f32.mrb[0].mxu0
      %1863 = vmatprep.mubr.bf16.mxu0 0
      %1864 = vmatmul.mubr.bf16.gmra.mrb[0].mxu0 %v1807
      %v1865 = vpop.f32.mrb[0].mxu0
      %v1866 = vadd.f32 0.0, %v1865
      %v1867 = vpop.f32.mrb[0].mxu0
      %v1868 = vpop.f32.mrb[0].mxu0
      %v1869 = vadd.f32 0.0, %v1868
      %v1870 = vpop.f32.mrb[0].mxu0
      %1871 = vmatprep.mubr.bf16.mxu0 0
      %1872 = vmatmul.mubr.bf16.gmra.mrb[0].mxu0 %v1810
      %v1873 = vpop.f32.mrb[0].mxu0
      %v1874 = vadd.f32 0.0, %v1873
      %v1875 = vpop.f32.mrb[0].mxu0
      %v1876 = vpop.f32.mrb[0].mxu0
      %v1877 = vadd.f32 0.0, %v1876
      %v1878 = vpop.f32.mrb[0].mxu0
      %1879 = vdwg.mxu0
      %v1880 = vadd.f32 %v1778, %v1850
      %v1881 = vadd.f32 %v1779, %v1853
      %v1882 = vadd.f32 %v1780, %v1858
      %v1883 = vadd.f32 %v1781, %v1861
      %v1884 = vadd.f32 %v1782, %v1866
      %v1885 = vadd.f32 %v1783, %v1869
      %v1886 = vadd.f32 %v1784, %v1874
      %v1887 = vadd.f32 %v1785, %v1877
      %s1888 = scalar_lea.vmem [#allocation3], 32
      %v1889 = vld [vmem:[%s1888] sm:$0xff]
      %v1890 = vld [vmem:[%s1888 + $0x10] sm:$0xff]
      %v1891 = vld [vmem:[%s1888 + $0x20] sm:$0xff]
      %v1892 = vld [vmem:[%s1888 + $0x30] sm:$0xff]
      %v1893 = vld [vmem:[%s1888 + $0x40] sm:$0xff]
      %v1894 = vld [vmem:[%s1888 + $0x50] sm:$0xff]
      %v1895 = vld [vmem:[%s1888 + $0x60] sm:$0xff]
      %v1896 = vld [vmem:[%s1888 + $0x70] sm:$0xff]
      %v1897 = vpack.c.bf16 %v1890, %v1889
      %v1898 = vpack.c.bf16 %v1892, %v1891
      %v1899 = vpack.c.bf16 %v1894, %v1893
      %v1900 = vpack.c.bf16 %v1896, %v1895
      %s1901 = scalar_lea.vmem %s2, 24
      %v1902 = vld [vmem:[%s1901] sm:$0xf]
      %v1904 = vsel %vm1261, %v1897, 0
      %v1907 = vsel %vm1261, %v1898, 0
      %v1910 = vsel %vm1261, %v1899, 0
      %v1913 = vsel %vm1261, %v1900, 0
      %v1916 = vsel %vm1331, %v1902, 0
      %1918 = vmatprep.subr.bf16.mxu0 0
      %1919 = vmatpush1.bf16.msra.mxu0 %v1916
      %1920 = vmatprep.subr.bf16.mxu0 0
      %1921 = vmatpush1.bf16.msra.mxu0 0
      %1922 = vmatprep.subr.bf16.mxu0 0
      %1923 = vmatpush1.bf16.msra.mxu0 0
      %1924 = vmatprep.subr.bf16.mxu0 0
      %1925 = vmatpush1.bf16.msra.mxu0 0
      %1926 = vmatprep.subr.bf16.mxu0 0
      %1927 = vmatpush1.bf16.msra.mxu0 0
      %1928 = vmatprep.subr.bf16.mxu0 0
      %1929 = vmatpush1.bf16.msra.mxu0 0
      %1930 = vmatprep.subr.bf16.mxu0 0
      %1931 = vmatpush1.bf16.msra.mxu0 0
      %1932 = vmatprep.subr.bf16.mxu0 0
      %1933 = vmatpush1.bf16.msra.mxu0 0
      %1934 = vmatprep.subr.bf16.mxu0 0
      %1935 = vmatpush1.bf16.msra.mxu0 0
      %1936 = vmatprep.subr.bf16.mxu0 0
      %1937 = vmatpush1.bf16.msra.mxu0 0
      %1938 = vmatprep.subr.bf16.mxu0 0
      %1939 = vmatpush1.bf16.msra.mxu0 0
      %1940 = vmatprep.subr.bf16.mxu0 0
      %1941 = vmatpush1.bf16.msra.mxu0 0
      %1942 = vmatprep.subr.bf16.mxu0 0
      %1943 = vmatpush1.bf16.msra.mxu0 0
      %1944 = vmatprep.subr.bf16.mxu0 0
      %1945 = vmatpush1.bf16.msra.mxu0 0
      %1946 = vmatprep.subr.bf16.mxu0 0
      %1947 = vmatpush1.bf16.msra.mxu0 0
      %1948 = vmatprep.subr.bf16.mxu0 0
      %1949 = vmatpush1.bf16.msra.mxu0 0
      %1950 = vmatprep.mubr.bf16.mxu0 0
      %1951 = vmatmul.mubr.bf16.gmra.mrb[0].mxu0 %v1904
      %v1952 = vpop.f32.mrb[0].mxu0
      %v1953 = vadd.f32 0.0, %v1952
      %v1954 = vpop.f32.mrb[0].mxu0
      %v1955 = vpop.f32.mrb[0].mxu0
      %v1956 = vadd.f32 0.0, %v1955
      %v1957 = vpop.f32.mrb[0].mxu0
      %1958 = vmatprep.mubr.bf16.mxu0 0
      %1959 = vmatmul.mubr.bf16.gmra.mrb[0].mxu0 %v1907
      %v1960 = vpop.f32.mrb[0].mxu0
      %v1961 = vadd.f32 0.0, %v1960
      %v1962 = vpop.f32.mrb[0].mxu0
      %v1963 = vpop.f32.mrb[0].mxu0
      %v1964 = vadd.f32 0.0, %v1963
      %v1965 = vpop.f32.mrb[0].mxu0
      %1966 = vmatprep.mubr.bf16.mxu0 0
      %1967 = vmatmul.mubr.bf16.gmra.mrb[0].mxu0 %v1910
      %v1968 = vpop.f32.mrb[0].mxu0
      %v1969 = vadd.f32 0.0, %v1968
      %v1970 = vpop.f32.mrb[0].mxu0
      %v1971 = vpop.f32.mrb[0].mxu0
      %v1972 = vadd.f32 0.0, %v1971
      %v1973 = vpop.f32.mrb[0].mxu0
      %1974 = vmatprep.mubr.bf16.mxu0 0
      %1975 = vmatmul.mubr.bf16.gmra.mrb[0].mxu0 %v1913
      %v1976 = vpop.f32.mrb[0].mxu0
      %v1977 = vadd.f32 0.0, %v1976
      %v1978 = vpop.f32.mrb[0].mxu0
      %v1979 = vpop.f32.mrb[0].mxu0
      %v1980 = vadd.f32 0.0, %v1979
      %v1981 = vpop.f32.mrb[0].mxu0
      %1982 = vdwg.mxu0
      %v1983 = vadd.f32 %v1880, %v1953
      %v1984 = vadd.f32 %v1881, %v1956
      %v1985 = vadd.f32 %v1882, %v1961
      %v1986 = vadd.f32 %v1883, %v1964
      %v1987 = vadd.f32 %v1884, %v1969
      %v1988 = vadd.f32 %v1885, %v1972
      %v1989 = vadd.f32 %v1886, %v1977
      %v1990 = vadd.f32 %v1887, %v1980
      %v1991 = vld [vmem:[%s1888 + $0x1] sm:$0xff]
      %v1992 = vld [vmem:[%s1888 + $0x11] sm:$0xff]
      %v1993 = vld [vmem:[%s1888 + $0x21] sm:$0xff]
      %v1994 = vld [vmem:[%s1888 + $0x31] sm:$0xff]
      %v1995 = vld [vmem:[%s1888 + $0x41] sm:$0xff]
      %v1996 = vld [vmem:[%s1888 + $0x51] sm:$0xff]
      %v1997 = vld [vmem:[%s1888 + $0x61] sm:$0xff]
      %v1998 = vld [vmem:[%s1888 + $0x71] sm:$0xff]
      %v1999 = vpack.c.bf16 %v1992, %v1991
      %v2000 = vpack.c.bf16 %v1994, %v1993
      %v2001 = vpack.c.bf16 %v1996, %v1995
      %v2002 = vpack.c.bf16 %v1998, %v1997
      %s2003 = scalar_lea.vmem %s2, 28
      %v2004 = vld [vmem:[%s2003] sm:$0xf]
      %v2006 = vsel %vm1261, %v1999, 0
      %v2009 = vsel %vm1261, %v2000, 0
      %v2012 = vsel %vm1261, %v2001, 0
      %v2015 = vsel %vm1261, %v2002, 0
      %v2018 = vsel %vm1331, %v2004, 0
      %2020 = vmatprep.subr.bf16.mxu0 0
      %2021 = vmatpush1.bf16.msra.mxu0 %v2018
      %2022 = vmatprep.subr.bf16.mxu0 0
      %2023 = vmatpush1.bf16.msra.mxu0 0
      %2024 = vmatprep.subr.bf16.mxu0 0
      %2025 = vmatpush1.bf16.msra.mxu0 0
      %2026 = vmatprep.subr.bf16.mxu0 0
      %2027 = vmatpush1.bf16.msra.mxu0 0
      %2028 = vmatprep.subr.bf16.mxu0 0
      %2029 = vmatpush1.bf16.msra.mxu0 0
      %2030 = vmatprep.subr.bf16.mxu0 0
      %2031 = vmatpush1.bf16.msra.mxu0 0
      %2032 = vmatprep.subr.bf16.mxu0 0
      %2033 = vmatpush1.bf16.msra.mxu0 0
      %2034 = vmatprep.subr.bf16.mxu0 0
      %2035 = vmatpush1.bf16.msra.mxu0 0
      %2036 = vmatprep.subr.bf16.mxu0 0
      %2037 = vmatpush1.bf16.msra.mxu0 0
      %2038 = vmatprep.subr.bf16.mxu0 0
      %2039 = vmatpush1.bf16.msra.mxu0 0
      %2040 = vmatprep.subr.bf16.mxu0 0
      %2041 = vmatpush1.bf16.msra.mxu0 0
      %2042 = vmatprep.subr.bf16.mxu0 0
      %2043 = vmatpush1.bf16.msra.mxu0 0
      %2044 = vmatprep.subr.bf16.mxu0 0
      %2045 = vmatpush1.bf16.msra.mxu0 0
      %2046 = vmatprep.subr.bf16.mxu0 0
      %2047 = vmatpush1.bf16.msra.mxu0 0
      %2048 = vmatprep.subr.bf16.mxu0 0
      %2049 = vmatpush1.bf16.msra.mxu0 0
      %2050 = vmatprep.subr.bf16.mxu0 0
      %2051 = vmatpush1.bf16.msra.mxu0 0
      %2052 = vmatprep.mubr.bf16.mxu0 0
      %2053 = vmatmul.mubr.bf16.gmra.mrb[0].mxu0 %v2006
      %v2054 = vpop.f32.mrb[0].mxu0
      %v2055 = vadd.f32 0.0, %v2054
      %v2056 = vpop.f32.mrb[0].mxu0
      %v2057 = vpop.f32.mrb[0].mxu0
      %v2058 = vadd.f32 0.0, %v2057
      %v2059 = vpop.f32.mrb[0].mxu0
      %2060 = vmatprep.mubr.bf16.mxu0 0
      %2061 = vmatmul.mubr.bf16.gmra.mrb[0].mxu0 %v2009
      %v2062 = vpop.f32.mrb[0].mxu0
      %v2063 = vadd.f32 0.0, %v2062
      %v2064 = vpop.f32.mrb[0].mxu0
      %v2065 = vpop.f32.mrb[0].mxu0
      %v2066 = vadd.f32 0.0, %v2065
      %v2067 = vpop.f32.mrb[0].mxu0
      %2068 = vmatprep.mubr.bf16.mxu0 0
      %2069 = vmatmul.mubr.bf16.gmra.mrb[0].mxu0 %v2012
      %v2070 = vpop.f32.mrb[0].mxu0
      %v2071 = vadd.f32 0.0, %v2070
      %v2072 = vpop.f32.mrb[0].mxu0
      %v2073 = vpop.f32.mrb[0].mxu0
      %v2074 = vadd.f32 0.0, %v2073
      %v2075 = vpop.f32.mrb[0].mxu0
      %2076 = vmatprep.mubr.bf16.mxu0 0
      %2077 = vmatmul.mubr.bf16.gmra.mrb[0].mxu0 %v2015
      %v2078 = vpop.f32.mrb[0].mxu0
      %v2079 = vadd.f32 0.0, %v2078
      %v2080 = vpop.f32.mrb[0].mxu0
      %v2081 = vpop.f32.mrb[0].mxu0
      %v2082 = vadd.f32 0.0, %v2081
      %v2083 = vpop.f32.mrb[0].mxu0
      %2084 = vdwg.mxu0
      %v2085 = vadd.f32 %v1983, %v2055
      %v2086 = vadd.f32 %v1984, %v2058
      %v2087 = vadd.f32 %v1985, %v2063
      %v2088 = vadd.f32 %v1986, %v2066
      %v2089 = vadd.f32 %v1987, %v2071
      %v2090 = vadd.f32 %v1988, %v2074
      %v2091 = vadd.f32 %v1989, %v2079
      %v2092 = vadd.f32 %v1990, %v2082
      %v2093 = vld [vmem:[%s1888 + $0x2] sm:$0xff]
      %v2094 = vld [vmem:[%s1888 + $0x12] sm:$0xff]
      %v2095 = vld [vmem:[%s1888 + $0x22] sm:$0xff]
      %v2096 = vld [vmem:[%s1888 + $0x32] sm:$0xff]
      %v2097 = vld [vmem:[%s1888 + $0x42] sm:$0xff]
      %v2098 = vld [vmem:[%s1888 + $0x52] sm:$0xff]
      %v2099 = vld [vmem:[%s1888 + $0x62] sm:$0xff]
      %v2100 = vld [vmem:[%s1888 + $0x72] sm:$0xff]
      %v2101 = vpack.c.bf16 %v2094, %v2093
      %v2102 = vpack.c.bf16 %v2096, %v2095
      %v2103 = vpack.c.bf16 %v2098, %v2097
      %v2104 = vpack.c.bf16 %v2100, %v2099
      %s2105 = scalar_lea.vmem %s2, 32
      %v2106 = vld [vmem:[%s2105] sm:$0xf]
      %v2108 = vsel %vm1261, %v2101, 0
      %v2111 = vsel %vm1261, %v2102, 0
      %v2114 = vsel %vm1261, %v2103, 0
      %v2117 = vsel %vm1261, %v2104, 0
      %v2120 = vsel %vm1331, %v2106, 0
      %2122 = vmatprep.subr.bf16.mxu0 0
      %2123 = vmatpush1.bf16.msra.mxu0 %v2120
      %2124 = vmatprep.subr.bf16.mxu0 0
      %2125 = vmatpush1.bf16.msra.mxu0 0
      %2126 = vmatprep.subr.bf16.mxu0 0
      %2127 = vmatpush1.bf16.msra.mxu0 0
      %2128 = vmatprep.subr.bf16.mxu0 0
      %2129 = vmatpush1.bf16.msra.mxu0 0
      %2130 = vmatprep.subr.bf16.mxu0 0
      %2131 = vmatpush1.bf16.msra.mxu0 0
      %2132 = vmatprep.subr.bf16.mxu0 0
      %2133 = vmatpush1.bf16.msra.mxu0 0
      %2134 = vmatprep.subr.bf16.mxu0 0
      %2135 = vmatpush1.bf16.msra.mxu0 0
      %2136 = vmatprep.subr.bf16.mxu0 0
      %2137 = vmatpush1.bf16.msra.mxu0 0
      %2138 = vmatprep.subr.bf16.mxu0 0
      %2139 = vmatpush1.bf16.msra.mxu0 0
      %2140 = vmatprep.subr.bf16.mxu0 0
      %2141 = vmatpush1.bf16.msra.mxu0 0
      %2142 = vmatprep.subr.bf16.mxu0 0
      %2143 = vmatpush1.bf16.msra.mxu0 0
      %2144 = vmatprep.subr.bf16.mxu0 0
      %2145 = vmatpush1.bf16.msra.mxu0 0
      %2146 = vmatprep.subr.bf16.mxu0 0
      %2147 = vmatpush1.bf16.msra.mxu0 0
      %2148 = vmatprep.subr.bf16.mxu0 0
      %2149 = vmatpush1.bf16.msra.mxu0 0
      %2150 = vmatprep.subr.bf16.mxu0 0
      %2151 = vmatpush1.bf16.msra.mxu0 0
      %2152 = vmatprep.subr.bf16.mxu0 0
      %2153 = vmatpush1.bf16.msra.mxu0 0
      %2154 = vmatprep.mubr.bf16.mxu0 0
      %2155 = vmatmul.mubr.bf16.gmra.mrb[0].mxu0 %v2108
      %v2156 = vpop.f32.mrb[0].mxu0
      %v2157 = vadd.f32 0.0, %v2156
      %v2158 = vpop.f32.mrb[0].mxu0
      %v2159 = vpop.f32.mrb[0].mxu0
      %v2160 = vadd.f32 0.0, %v2159
      %v2161 = vpop.f32.mrb[0].mxu0
      %2162 = vmatprep.mubr.bf16.mxu0 0
      %2163 = vmatmul.mubr.bf16.gmra.mrb[0].mxu0 %v2111
      %v2164 = vpop.f32.mrb[0].mxu0
      %v2165 = vadd.f32 0.0, %v2164
      %v2166 = vpop.f32.mrb[0].mxu0
      %v2167 = vpop.f32.mrb[0].mxu0
      %v2168 = vadd.f32 0.0, %v2167
      %v2169 = vpop.f32.mrb[0].mxu0
      %2170 = vmatprep.mubr.bf16.mxu0 0
      %2171 = vmatmul.mubr.bf16.gmra.mrb[0].mxu0 %v2114
      %v2172 = vpop.f32.mrb[0].mxu0
      %v2173 = vadd.f32 0.0, %v2172
      %v2174 = vpop.f32.mrb[0].mxu0
      %v2175 = vpop.f32.mrb[0].mxu0
      %v2176 = vadd.f32 0.0, %v2175
      %v2177 = vpop.f32.mrb[0].mxu0
      %2178 = vmatprep.mubr.bf16.mxu0 0
      %2179 = vmatmul.mubr.bf16.gmra.mrb[0].mxu0 %v2117
      %v2180 = vpop.f32.mrb[0].mxu0
      %v2181 = vadd.f32 0.0, %v2180
      %v2182 = vpop.f32.mrb[0].mxu0
      %v2183 = vpop.f32.mrb[0].mxu0
      %v2184 = vadd.f32 0.0, %v2183
      %v2185 = vpop.f32.mrb[0].mxu0
      %2186 = vdwg.mxu0
      %v2187 = vadd.f32 %v2085, %v2157
      %v2188 = vadd.f32 %v2086, %v2160
      %v2189 = vadd.f32 %v2087, %v2165
      %v2190 = vadd.f32 %v2088, %v2168
      %v2191 = vadd.f32 %v2089, %v2173
      %v2192 = vadd.f32 %v2090, %v2176
      %v2193 = vadd.f32 %v2091, %v2181
      %v2194 = vadd.f32 %v2092, %v2184
      %v2195 = vpack.c.bf16 %v2187, %v2187
      %v2196 = vpack.c.bf16 %v2188, %v2188
      %v2197 = vpack.c.bf16 %v2189, %v2189
      %v2198 = vpack.c.bf16 %v2190, %v2190
      %v2199 = vpack.c.bf16 %v2191, %v2191
      %v2200 = vpack.c.bf16 %v2192, %v2192
      %v2201 = vpack.c.bf16 %v2193, %v2193
      %v2202 = vpack.c.bf16 %v2194, %v2194
      %vm2203 = vcmask 125952
      %2204 = vst.msk [vmem:[%s231] sm:$0xf] %vm2203, %v2195
      %2205 = vst.msk [vmem:[%s231 + $0x4] sm:$0xf] %vm2203, %v2196
      %2206 = vst.msk [vmem:[%s231 + $0x8] sm:$0xf] %vm2203, %v2197
      %2207 = vst.msk [vmem:[%s231 + $0xc] sm:$0xf] %vm2203, %v2198
      %2208 = vst.msk [vmem:[%s231 + $0x10] sm:$0xf] %vm2203, %v2199
      %2209 = vst.msk [vmem:[%s231 + $0x14] sm:$0xf] %vm2203, %v2200
      %2210 = vst.msk [vmem:[%s231 + $0x18] sm:$0xf] %vm2203, %v2201
      %2211 = vst.msk [vmem:[%s231 + $0x1c] sm:$0xf] %vm2203, %v2202
      %v2212 = vsel %vm245, %v2187, 0.0
      %v2213 = vsel %vm245, %v2188, 0.0
      %v2214 = vadd.f32 %v2212, %v2213
      %v2215 = vsel %vm245, %v2189, 0.0
      %v2216 = vadd.f32 %v2214, %v2215
      %v2217 = vsel %vm245, %v2190, 0.0
      %v2218 = vadd.f32 %v2216, %v2217
      %v2219 = vsel %vm245, %v2191, 0.0
      %v2220 = vadd.f32 %v2218, %v2219
      %v2221 = vsel %vm245, %v2192, 0.0
      %v2222 = vadd.f32 %v2220, %v2221
      %v2223 = vsel %vm245, %v2193, 0.0
      %v2224 = vadd.f32 %v2222, %v2223
      %v2225 = vsel %vm245, %v2194, 0.0
      %v2226 = vadd.f32 %v2224, %v2225
      %v2227 = vrot.slane %v2226, 4
      %v2228 = vadd.f32 %v2226, %v2227
      %v2229 = vrot.slane %v2228, 2
      %v2230 = vadd.f32 %v2228, %v2229
      %v2231 = vrot.slane %v2230, 1
      %v2232 = vadd.f32 %v2230, %v2231
      %vm2233 = vcmask 122880
      %2234 = vst.msk [vmem:[%s235] sm:$0x1] %vm2233, %v2232
      %v2235 = vmul.f32 %v2187, %v2187
      %v2236 = vmul.f32 %v2188, %v2188
      %v2237 = vmul.f32 %v2189, %v2189
      %v2238 = vmul.f32 %v2190, %v2190
      %v2239 = vmul.f32 %v2191, %v2191
      %v2240 = vmul.f32 %v2192, %v2192
      %v2241 = vmul.f32 %v2193, %v2193
      %v2242 = vmul.f32 %v2194, %v2194
      %v2243 = vsel %vm245, %v2235, 0.0
      %v2244 = vsel %vm245, %v2236, 0.0
      %v2245 = vadd.f32 %v2243, %v2244
      %v2246 = vsel %vm245, %v2237, 0.0
      %v2247 = vadd.f32 %v2245, %v2246
      %v2248 = vsel %vm245, %v2238, 0.0
      %v2249 = vadd.f32 %v2247, %v2248
      %v2250 = vsel %vm245, %v2239, 0.0
      %v2251 = vadd.f32 %v2249, %v2250
      %v2252 = vsel %vm245, %v2240, 0.0
      %v2253 = vadd.f32 %v2251, %v2252
      %v2254 = vsel %vm245, %v2241, 0.0
      %v2255 = vadd.f32 %v2253, %v2254
      %v2256 = vsel %vm245, %v2242, 0.0
      %v2257 = vadd.f32 %v2255, %v2256
      %v2258 = vrot.slane %v2257, 4
      %v2259 = vadd.f32 %v2257, %v2258
      %v2260 = vrot.slane %v2259, 2
      %v2261 = vadd.f32 %v2259, %v2260
      %v2262 = vrot.slane %v2261, 1
      %v2263 = vadd.f32 %v2261, %v2262
      %2264 = vst.msk [vmem:[%s235 + $0x1] sm:$0x1] %vm2233, %v2263
      %p2265 = scmp.lt.s32.totalorder %s17, 1
      %s2266 = scalar_select %p2265, %s17, 1
      %s2267 = smul.addr %s2266, 8
      %s2268 = smul.addr %s2267, 4
      %s2269 = scalar_lea.vmem %s4, %s2268
      %p2270 = scmp.lt.s32.totalorder %s17, 1
      %s2271 = scalar_select %p2270, %s17, 1
      %s2272 = smul.addr %s2271, 2
      %s2273 = scalar_lea.vmem %s5, %s2272
      // Predicated region
      $region37: #{unet_innermost_forward.2} parent=35 // pred_check
        %p2274 = pneg %p124
      $region38: #{unet_innermost_forward.2} parent=35 // pred_check_branch
        %2276 = sbr.rel (%p2274) target = $region40
      $region39: #{unet_innermost_forward.2} parent=35 // pred_region
        _
      $region40: #{unet_innermost_forward.2} parent=35 // pred_fallthru
        _
      // Predicated region
      $region41: #{unet_innermost_forward.2} parent=35 // pred_check
        %p2277 = pneg %p150
      $region42: #{unet_innermost_forward.2} parent=35 // pred_check_branch
        %2279 = sbr.rel (%p2277) target = $region44
      $region43: #{unet_innermost_forward.2} parent=35 // pred_region
        _
      $region44: #{unet_innermost_forward.2} parent=35 // pred_fallthru
        _
    $region36: #{unet_innermost_forward.2} parent=5 // pred_fallthru
      _
    %p2280 = scmp.le.s32.totalorder 2, %s12
    // Predicated region
    $region45: #{unet_innermost_forward.2} parent=5 // pred_check
      %p2281 = pneg %p2280
    $region46: #{unet_innermost_forward.2} parent=5 // pred_check_branch
      %2283 = sbr.rel (%p2281) target = $region48
    $region47: #{unet_innermost_forward.2} parent=5 // pred_region
      %s2284 = ssub.s32 %s12, 2
      // Predicated region
      $region49: #{unet_innermost_forward.2} parent=47 // pred_check
        %p2285 = pneg %p130
      $region50: #{unet_innermost_forward.2} parent=47 // pred_check_branch
        %2287 = sbr.rel (%p2285) target = $region52
      $region51: #{unet_innermost_forward.2} parent=47 // pred_region
        %p2288 = scmp.lt.s32.totalorder %s18, 1
        %s2289 = scalar_select %p2288, %s18, 1
        %s2290 = smul.addr %s2289, 8
        %s2291 = smul.addr %s2290, 4
        %s2292 = scalar_lea.vmem %s4, %s2291
      $region52: #{unet_innermost_forward.2} parent=47 // pred_fallthru
        _
      // Predicated region
      $region53: #{unet_innermost_forward.2} parent=47 // pred_check
        %p2293 = pneg %p156
      $region54: #{unet_innermost_forward.2} parent=47 // pred_check_branch
        %2295 = sbr.rel (%p2293) target = $region56
      $region55: #{unet_innermost_forward.2} parent=47 // pred_region
        %p2296 = scmp.lt.s32.totalorder %s18, 1
        %s2297 = scalar_select %p2296, %s18, 1
        %s2298 = smul.addr %s2297, 2
        %s2299 = scalar_lea.vmem %s5, %s2298
      $region56: #{unet_innermost_forward.2} parent=47 // pred_fallthru
        _
    $region48: #{unet_innermost_forward.2} parent=5 // pred_fallthru
      _
  $region6: #{unet_innermost_forward.2} parent=0 // loop_footer
    %s16 = sadd.s32 1, %s12
  $region7: #{unet_innermost_forward.2} parent=0 // loop_footer_branch
    %11 = sbr.rel target = $region3
  $region8: #{unet_innermost_forward.2} parent=0 // loop_exit
    _

</llo_original>
